<compile_context>
chip_gen: v7x
topology: tpu7x:2x2x1
jax: 0.10.0
libtpu: 0.0.40
codegen_flags: <defaults>
</compile_context>

<pallas_src>
import functools

import numpy as np
import jax
import jax.numpy as jnp
from jax import lax
from jax.experimental import pallas as pl
from jax.experimental.pallas import tpu as pltpu

C1, C2 = 16, 32            # conv channel widths fixed by the module


# ----------------------------------------------------------------------------
# Fused forward kernel: conv1+pool -> conv2+pool -> flatten -> 3-layer MLP
# (block_b images per grid step; everything stays in VMEM)
# ----------------------------------------------------------------------------
def _net_kernel(x_ref, w1_ref, b1_ref, w2_ref, b2_ref,
                w3_ref, b3_ref, w4_ref, b4_ref, w5_ref, b5_ref,
                o_ref, xpad1, xpad2, flat, *, H, W, Cin):
    H2, W2, H4, W4 = H // 2, W // 2, H // 4, W // 4
    B = x_ref.shape[1]                                  # images per grid step
    f32, bf16 = jnp.float32, jnp.bfloat16

    # ---- conv1 (3x3, pad=1) + bias + ReLU + 2x2 max-pool --------------------
    # halo rows only (interior is fully rewritten each step; zeroing per step
    # keeps this correct even when the grid is split across TensorCores)
    xpad1[0] = jnp.zeros((B, W * Cin), bf16)
    xpad1[H + 1] = jnp.zeros((B, W * Cin), bf16)
    xpad1[1:H + 1] = x_ref[...].astype(bf16)            # aligned interior store

    acc1 = jnp.dot(xpad1[0:H].reshape(H * B, W * Cin), w1_ref[0],
                   preferred_element_type=f32)
    for kh in (1, 2):                                    # banded GEMM, 3 K-chunks
        acc1 = acc1 + jnp.dot(xpad1[kh:kh + H].reshape(H * B, W * Cin),
                              w1_ref[kh], preferred_element_type=f32)
    h1 = jnp.maximum(acc1 + b1_ref[...], 0.0)            # (H*B, W*C1)
    # rows are (h, b): H-pool = max of two aligned B-row groups; band columns
    # are pre-permuted (even w | odd w) so W-pool is a contiguous lane halving.
    v1 = h1.reshape(H2, 2 * B, W * C1)
    t1 = jnp.maximum(v1[:, :B, :], v1[:, B:, :])         # pool over H
    l1 = jnp.maximum(t1[..., :W2 * C1], t1[..., W2 * C1:])   # (H2, B, W2*C1)

    # ---- conv2 (3x3, pad=1) + bias + ReLU + 2x2 max-pool --------------------
    xpad2[0] = jnp.zeros((B, W2 * C1), bf16)
    xpad2[H2 + 1] = jnp.zeros((B, W2 * C1), bf16)
    xpad2[1:H2 + 1] = l1.astype(bf16)

    acc2 = jnp.dot(xpad2[0:H2].reshape(H2 * B, W2 * C1), w2_ref[0],
                   preferred_element_type=f32)
    for kh in (1, 2):
        acc2 = acc2 + jnp.dot(xpad2[kh:kh + H2].reshape(H2 * B, W2 * C1),
                              w2_ref[kh], preferred_element_type=f32)
    h2 = jnp.maximum(acc2 + b2_ref[...], 0.0)            # (H2*B, W2*C2)
    v2 = h2.reshape(H4, 2 * B, W2 * C2)
    t2 = jnp.maximum(v2[:, :B, :], v2[:, B:, :])
    l2 = jnp.maximum(t2[..., :W4 * C2], t2[..., W4 * C2:])   # (H4, B, W4*C2)

    # ---- flatten + 3-layer MLP ----------------------------------------------
    # flat lanes are (h4, w4, c); torch's (c, h4, w4) flatten order is folded
    # into the host-side row permutation of w3.  Aligned (B, 128) slab stores.
    for i in range(H4):
        flat[:, i * (W4 * C2):(i + 1) * (W4 * C2)] = l2[i].astype(bf16)

    a3 = jnp.maximum(jnp.dot(flat[...], w3_ref[...],
                             preferred_element_type=f32) + b3_ref[...], 0.0)
    a4 = jnp.maximum(jnp.dot(a3.astype(bf16), w4_ref[...],
                             preferred_element_type=f32) + b4_ref[...], 0.0)
    out = jnp.dot(a4.astype(bf16), w5_ref[...],
                  preferred_element_type=f32) + b5_ref[...]
    o_ref[...] = out.astype(o_ref.dtype)                 # (B, 128) unmasked store


@functools.partial(jax.jit, static_argnames=("out_size", "block_b"))
def net_forward(x_nchw, kp, out_size, block_b=8):
    N, Cin, H, W = x_nchw.shape
    if H % 4 or W % 4:
        raise ValueError("spatial dims must be multiples of 4 (pooling twice)")
    if block_b % 8:
        raise ValueError("block_b must be a multiple of 8")
    H2, W2, H4, W4 = H // 2, W // 2, H // 4, W // 4
    out_pad = kp["b5"].shape[-1]                          # lane-padded outputs
    n_pad = ((N + block_b - 1) // block_b) * block_b

    # NCHW -> (H, N, W*Cin): batch on the sublane axis, (w, cin) lane-dense.
    x = jnp.transpose(x_nchw, (2, 0, 3, 1)).reshape(H, N, W * Cin)
    if n_pad != N:
        x = jnp.pad(x, ((0, 0), (0, n_pad - N), (0, 0)))

    def const_spec(a):
        nd = a.ndim
        return pl.BlockSpec(a.shape, lambda n, nd=nd: (0,) * nd)

    kernel = functools.partial(_net_kernel, H=H, W=W, Cin=Cin)
    out = pl.pallas_call(
        kernel,
        out_shape=jax.ShapeDtypeStruct((n_pad, out_pad), jnp.float32),
        grid=(n_pad // block_b,),
        in_specs=[pl.BlockSpec((H, block_b, W * Cin), lambda n: (0, n, 0)),
                  const_spec(kp["w1"]), const_spec(kp["b1"]),
                  const_spec(kp["w2"]), const_spec(kp["b2"]),
                  const_spec(kp["w3"]), const_spec(kp["b3"]),
                  const_spec(kp["w4"]), const_spec(kp["b4"]),
                  const_spec(kp["w5"]), const_spec(kp["b5"])],
        out_specs=pl.BlockSpec((block_b, out_pad), lambda n: (n, 0)),
        scratch_shapes=[pltpu.VMEM((H + 2, block_b, W * Cin), jnp.bfloat16),
                        pltpu.VMEM((H2 + 2, block_b, W2 * C1), jnp.bfloat16),
                        pltpu.VMEM((block_b, H4 * W4 * C2), jnp.bfloat16)],
        compiler_params=pltpu.CompilerParams(dimension_semantics=("parallel",)),
    )(x, kp["w1"], kp["b1"], kp["w2"], kp["b2"],
      kp["w3"], kp["b3"], kp["w4"], kp["b4"], kp["w5"], kp["b5"])
    return out[:N, :out_size]


# ----------------------------------------------------------------------------
# One-time host-side weight preparation for the kernel layout
# ----------------------------------------------------------------------------
def _banded_conv_weight(w_hwio, w_out):
    """(3,3,Cin,Cout) HWIO conv weight -> (3, w_out*Cin, w_out*Cout) band.

    Row index of band kh is (w_in, cin) over the UNPADDED width (out-of-range
    taps are dropped: they multiply zero padding anyway).  Columns are permuted
    to (even w_out | odd w_out) x Cout so the in-kernel W max-pool is a
    contiguous lane-halving max.
    """
    kh_n, kw_n, cin, cout = w_hwio.shape
    wn = np.asarray(w_hwio, np.float32)
    band = np.zeros((kh_n, w_out, cin, w_out, cout), np.float32)
    for kh in range(kh_n):
        for kw in range(kw_n):
            for w in range(w_out):
                p = w + kw - 1
                if 0 <= p < w_out:
                    band[kh, p, :, w, :] = wn[kh, kw]
    perm = np.concatenate([np.arange(0, w_out, 2), np.arange(1, w_out, 2)])
    band = band[:, :, :, perm, :]
    return jnp.asarray(band.reshape(kh_n, w_out * cin, w_out * cout), jnp.bfloat16)


def prepare_params(p, spatial):
    H = W = spatial
    W2, H4, W4 = W // 2, H // 4, W // 4
    out_size = int(np.asarray(p["b5"]).shape[-1])
    out_pad = max(128, ((out_size + 127) // 128) * 128)

    # linear3: torch flattens (c, h4, w4); kernel flat lanes are (h4, w4, c).
    w3 = np.asarray(p["w3"], np.float32).reshape(C2, H4, W4, -1)
    w3r = np.transpose(w3, (1, 2, 0, 3)).reshape(H4 * W4 * C2, -1)

    # linear5: pad output columns to a full 128-lane slab (wrapper slices).
    w5 = np.asarray(p["w5"], np.float32)
    w5p = np.zeros((w5.shape[0], out_pad), np.float32)
    w5p[:, :out_size] = w5
    b5p = np.zeros((out_pad,), np.float32)
    b5p[:out_size] = np.asarray(p["b5"], np.float32)

    return dict(
        w1=_banded_conv_weight(p["w1"], W),
        b1=jnp.asarray(np.tile(np.asarray(p["b1"], np.float32), W))[None, :],
        w2=_banded_conv_weight(p["w2"], W2),
        b2=jnp.asarray(np.tile(np.asarray(p["b2"], np.float32), W2))[None, :],
        w3=jnp.asarray(w3r, jnp.bfloat16),
        b3=jnp.asarray(p["b3"], jnp.float32)[None, :],
        w4=jnp.asarray(p["w4"], jnp.bfloat16),
        b4=jnp.asarray(p["b4"], jnp.float32)[None, :],
        w5=jnp.asarray(w5p, jnp.bfloat16),
        b5=jnp.asarray(b5p, jnp.float32)[None, :],
    )


# ----------------------------------------------------------------------------
# Deterministic parameter init (PyTorch-like uniform(+-1/sqrt(fan_in)))
# ----------------------------------------------------------------------------
def init_params(key, in_ch, spatial, out_size):
    ks = jax.random.split(key, 10)

    def u(k, shape, fan_in):
        bound = 1.0 / jnp.sqrt(jnp.float32(fan_in))
        return jax.random.uniform(k, shape, jnp.float32, -bound, bound)

    feat = 32 * (spatial // 4) ** 2
    return dict(
        w1=u(ks[0], (3, 3, in_ch, C1), 9 * in_ch), b1=u(ks[1], (C1,), 9 * in_ch),
        w2=u(ks[2], (3, 3, C1, C2), 9 * C1),       b2=u(ks[3], (C2,), 9 * C1),
        w3=u(ks[4], (feat, 512), feat),            b3=u(ks[5], (512,), feat),
        w4=u(ks[6], (512, 256), 512),              b4=u(ks[7], (256,), 512),
        w5=u(ks[8], (256, out_size), 256),         b5=u(ks[9], (out_size,), 256),
    )


# ----------------------------------------------------------------------------
# Pure-JAX f32 reference for a correctness check
# ----------------------------------------------------------------------------
def net_forward_ref(x_nchw, p):
    x = jnp.transpose(x_nchw, (0, 2, 3, 1))

    def conv_block(x, w, b):
        y = lax.conv_general_dilated(
            x, w, (1, 1), ((1, 1), (1, 1)),
            dimension_numbers=("NHWC", "HWIO", "NHWC"),
            precision=lax.Precision.HIGHEST)
        y = jnp.maximum(y + b, 0.0)
        N, H, W, C = y.shape
        return jnp.max(y.reshape(N, H // 2, 2, W // 2, 2, C), axis=(2, 4))

    l1 = conv_block(x, p["w1"], p["b1"])
    l2 = conv_block(l1, p["w2"], p["b2"])
    flat = jnp.transpose(l2, (0, 3, 1, 2)).reshape(l2.shape[0], -1)
    h = jnp.maximum(
        jnp.matmul(flat, p["w3"], precision=lax.Precision.HIGHEST) + p["b3"], 0.0)
    h = jnp.maximum(
        jnp.matmul(h, p["w4"], precision=lax.Precision.HIGHEST) + p["b4"], 0.0)
    return jnp.matmul(h, p["w5"], precision=lax.Precision.HIGHEST) + p["b5"]


if __name__ == "__main__":
    # Net(10, (1, 16, 16)); batch=16 with block_b=8 -> 2 "parallel" grid steps
    # (both v7x TensorCores get work; v5e/v6e just loop).
    batch, in_ch, spatial, out_size = 16, 1, 16, 10
    key = jax.random.PRNGKey(0)
    kx, kparam = jax.random.split(key)
    x = jax.random.normal(kx, (batch, in_ch, spatial, spatial), jnp.float32)
    params = init_params(kparam, in_ch, spatial, out_size)
    kernel_params = prepare_params(params, spatial)      # one-time weight re-layout

    out = jax.block_until_ready(
        net_forward(x, kernel_params, out_size=out_size, block_b=8))
    assert out.shape == (batch, out_size)

    ref = net_forward_ref(x, params)
    if not bool(jnp.allclose(out, ref, rtol=2e-2, atol=2e-2)):
        raise AssertionError(
            f"Pallas output mismatch vs reference; max abs diff = "
            f"{float(jnp.max(jnp.abs(out - ref)))}")

    print("KERNEL_OK")
</pallas_src>

<mosaic_0001>
module attributes {stable_mosaic.version = 11 : i64} {
  func.func @_net_kernel(%arg0: i32, %arg1: memref<16x8x16xf32, #tpu.memory_space<vmem>>, %arg2: memref<3x16x256xbf16, #tpu.memory_space<vmem>>, %arg3: memref<1x256xf32, #tpu.memory_space<vmem>>, %arg4: memref<3x128x256xbf16, #tpu.memory_space<vmem>>, %arg5: memref<1x256xf32, #tpu.memory_space<vmem>>, %arg6: memref<512x512xbf16, #tpu.memory_space<vmem>>, %arg7: memref<1x512xf32, #tpu.memory_space<vmem>>, %arg8: memref<512x256xbf16, #tpu.memory_space<vmem>>, %arg9: memref<1x256xf32, #tpu.memory_space<vmem>>, %arg10: memref<256x128xbf16, #tpu.memory_space<vmem>>, %arg11: memref<1x128xf32, #tpu.memory_space<vmem>>, %arg12: memref<8x128xf32, #tpu.memory_space<vmem>>, %arg13: memref<18x8x16xbf16, #tpu.memory_space<vmem>>, %arg14: memref<10x8x128xbf16, #tpu.memory_space<vmem>>, %arg15: memref<8x512xbf16, #tpu.memory_space<vmem>>) attributes {dimension_semantics = [#tpu.dimension_semantics<parallel>], iteration_bounds = array<i64: 2>, scalar_prefetch = 0 : i64, scratch_operands = 3 : i64, tpu.core_type = #tpu.core_type<tc>, window_params = [{transform_indices = @transform_0, window_bounds = array<i64: 16, 8, 16>}, {pipeline_mode = #tpu.pipeline_mode<synchronous>, transform_indices = @transform_1, window_bounds = array<i64: 3, 16, 256>}, {pipeline_mode = #tpu.pipeline_mode<synchronous>, transform_indices = @transform_2, window_bounds = array<i64: 1, 256>}, {pipeline_mode = #tpu.pipeline_mode<synchronous>, transform_indices = @transform_3, window_bounds = array<i64: 3, 128, 256>}, {pipeline_mode = #tpu.pipeline_mode<synchronous>, transform_indices = @transform_4, window_bounds = array<i64: 1, 256>}, {pipeline_mode = #tpu.pipeline_mode<synchronous>, transform_indices = @transform_5, window_bounds = array<i64: 512, 512>}, {pipeline_mode = #tpu.pipeline_mode<synchronous>, transform_indices = @transform_6, window_bounds = array<i64: 1, 512>}, {pipeline_mode = #tpu.pipeline_mode<synchronous>, transform_indices = @transform_7, window_bounds = array<i64: 512, 256>}, {pipeline_mode = #tpu.pipeline_mode<synchronous>, transform_indices = @transform_8, window_bounds = array<i64: 1, 256>}, {pipeline_mode = #tpu.pipeline_mode<synchronous>, transform_indices = @transform_9, window_bounds = array<i64: 256, 128>}, {pipeline_mode = #tpu.pipeline_mode<synchronous>, transform_indices = @transform_10, window_bounds = array<i64: 1, 128>}, {transform_indices = @transform_11, window_bounds = array<i64: 8, 128>}]} {
    %cst = arith.constant 0.000000e+00 : bf16
    %0 = vector.broadcast %cst : bf16 to vector<8x16xbf16>
    %c0 = arith.constant 0 : index
    %c0_0 = arith.constant 0 : index
    %c0_1 = arith.constant 0 : index
    %1 = vector.load %arg13[%c0, %c0_0, %c0_1] : memref<18x8x16xbf16, #tpu.memory_space<vmem>>, vector<1x8x16xbf16>
    %2 = vector.shape_cast %1 : vector<1x8x16xbf16> to vector<8x16xbf16>
    %3 = vector.shape_cast %0 : vector<8x16xbf16> to vector<1x8x16xbf16>
    tpu.vector_store %arg13[%c0, %c0_0, %c0_1], %3 {strides = array<i32>} : memref<18x8x16xbf16, #tpu.memory_space<vmem>>, vector<1x8x16xbf16>,
    %cst_2 = arith.constant 0.000000e+00 : bf16
    %4 = vector.broadcast %cst_2 : bf16 to vector<8x16xbf16>
    %c17 = arith.constant 17 : index
    %c0_3 = arith.constant 0 : index
    %c0_4 = arith.constant 0 : index
    %5 = vector.load %arg13[%c17, %c0_3, %c0_4] : memref<18x8x16xbf16, #tpu.memory_space<vmem>>, vector<1x8x16xbf16>
    %6 = vector.shape_cast %5 : vector<1x8x16xbf16> to vector<8x16xbf16>
    %7 = vector.shape_cast %4 : vector<8x16xbf16> to vector<1x8x16xbf16>
    tpu.vector_store %arg13[%c17, %c0_3, %c0_4], %7 {strides = array<i32>} : memref<18x8x16xbf16, #tpu.memory_space<vmem>>, vector<1x8x16xbf16>,
    %c0_5 = arith.constant 0 : index
    %c0_6 = arith.constant 0 : index
    %c0_7 = arith.constant 0 : index
    %8 = vector.load %arg1[%c0_5, %c0_6, %c0_7] : memref<16x8x16xf32, #tpu.memory_space<vmem>>, vector<16x8x16xf32>
    %9 = arith.truncf %8 : vector<16x8x16xf32> to vector<16x8x16xbf16>
    %c1 = arith.constant 1 : index
    %c0_8 = arith.constant 0 : index
    %c0_9 = arith.constant 0 : index
    %10 = vector.load %arg13[%c1, %c0_8, %c0_9] : memref<18x8x16xbf16, #tpu.memory_space<vmem>>, vector<16x8x16xbf16>
    tpu.vector_store %arg13[%c1, %c0_8, %c0_9], %9 {strides = array<i32>} : memref<18x8x16xbf16, #tpu.memory_space<vmem>>, vector<16x8x16xbf16>,
    %c0_10 = arith.constant 0 : index
    %c0_11 = arith.constant 0 : index
    %c0_12 = arith.constant 0 : index
    %11 = vector.load %arg13[%c0_10, %c0_11, %c0_12] : memref<18x8x16xbf16, #tpu.memory_space<vmem>>, vector<16x8x16xbf16>
    %12 = vector.shape_cast %11 : vector<16x8x16xbf16> to vector<128x16xbf16>
    %c0_13 = arith.constant 0 : index
    %c0_14 = arith.constant 0 : index
    %c0_15 = arith.constant 0 : index
    %13 = vector.load %arg2[%c0_13, %c0_14, %c0_15] : memref<3x16x256xbf16, #tpu.memory_space<vmem>>, vector<1x16x256xbf16>
    %14 = vector.shape_cast %13 : vector<1x16x256xbf16> to vector<16x256xbf16>
    %cst_16 = arith.constant dense<0.000000e+00> : vector<128x256xf32>
    %15 = tpu.matmul %12, %14, %cst_16 {dimension_numbers = #tpu.dot_dimension_numbers<[1], [0], [0], [1], [0, 0, 1, 1], [], []>} : vector<128x16xbf16>, vector<16x256xbf16>, vector<128x256xf32> -> vector<128x256xf32>
    %c1_17 = arith.constant 1 : index
    %c0_18 = arith.constant 0 : index
    %c0_19 = arith.constant 0 : index
    %16 = vector.load %arg13[%c1_17, %c0_18, %c0_19] : memref<18x8x16xbf16, #tpu.memory_space<vmem>>, vector<16x8x16xbf16>
    %17 = vector.shape_cast %16 : vector<16x8x16xbf16> to vector<128x16xbf16>
    %c1_20 = arith.constant 1 : index
    %c0_21 = arith.constant 0 : index
    %c0_22 = arith.constant 0 : index
    %18 = vector.load %arg2[%c1_20, %c0_21, %c0_22] : memref<3x16x256xbf16, #tpu.memory_space<vmem>>, vector<1x16x256xbf16>
    %19 = vector.shape_cast %18 : vector<1x16x256xbf16> to vector<16x256xbf16>
    %cst_23 = arith.constant dense<0.000000e+00> : vector<128x256xf32>
    %20 = tpu.matmul %17, %19, %cst_23 {dimension_numbers = #tpu.dot_dimension_numbers<[1], [0], [0], [1], [0, 0, 1, 1], [], []>} : vector<128x16xbf16>, vector<16x256xbf16>, vector<128x256xf32> -> vector<128x256xf32>
    %21 = arith.addf %15, %20 : vector<128x256xf32>
    %c2 = arith.constant 2 : index
    %c0_24 = arith.constant 0 : index
    %c0_25 = arith.constant 0 : index
    %22 = vector.load %arg13[%c2, %c0_24, %c0_25] : memref<18x8x16xbf16, #tpu.memory_space<vmem>>, vector<16x8x16xbf16>
    %23 = vector.shape_cast %22 : vector<16x8x16xbf16> to vector<128x16xbf16>
    %c2_26 = arith.constant 2 : index
    %c0_27 = arith.constant 0 : index
    %c0_28 = arith.constant 0 : index
    %24 = vector.load %arg2[%c2_26, %c0_27, %c0_28] : memref<3x16x256xbf16, #tpu.memory_space<vmem>>, vector<1x16x256xbf16>
    %25 = vector.shape_cast %24 : vector<1x16x256xbf16> to vector<16x256xbf16>
    %cst_29 = arith.constant dense<0.000000e+00> : vector<128x256xf32>
    %26 = tpu.matmul %23, %25, %cst_29 {dimension_numbers = #tpu.dot_dimension_numbers<[1], [0], [0], [1], [0, 0, 1, 1], [], []>} : vector<128x16xbf16>, vector<16x256xbf16>, vector<128x256xf32> -> vector<128x256xf32>
    %27 = arith.addf %21, %26 : vector<128x256xf32>
    %c0_30 = arith.constant 0 : index
    %c0_31 = arith.constant 0 : index
    %28 = vector.load %arg3[%c0_30, %c0_31] : memref<1x256xf32, #tpu.memory_space<vmem>>, vector<1x256xf32>
    %29 = vector.broadcast %28 : vector<1x256xf32> to vector<128x256xf32>
    %30 = arith.addf %27, %29 : vector<128x256xf32>
    %cst_32 = arith.constant 0.000000e+00 : f32
    %31 = vector.broadcast %cst_32 : f32 to vector<128x256xf32>
    %32 = arith.maximumf %30, %31 : vector<128x256xf32>
    %33 = vector.shape_cast %32 : vector<128x256xf32> to vector<8x16x256xf32>
    %34 = vector.extract_strided_slice %33 {offsets = [0, 0, 0], sizes = [8, 8, 256], strides = [1, 1, 1]} : vector<8x16x256xf32> to vector<8x8x256xf32>
    %35 = vector.extract_strided_slice %33 {offsets = [0, 8, 0], sizes = [8, 8, 256], strides = [1, 1, 1]} : vector<8x16x256xf32> to vector<8x8x256xf32>
    %36 = arith.maximumf %34, %35 : vector<8x8x256xf32>
    %37 = vector.extract_strided_slice %36 {offsets = [0, 0, 0], sizes = [8, 8, 128], strides = [1, 1, 1]} : vector<8x8x256xf32> to vector<8x8x128xf32>
    %38 = vector.extract_strided_slice %36 {offsets = [0, 0, 128], sizes = [8, 8, 128], strides = [1, 1, 1]} : vector<8x8x256xf32> to vector<8x8x128xf32>
    %39 = arith.maximumf %37, %38 : vector<8x8x128xf32>
    %cst_33 = arith.constant 0.000000e+00 : bf16
    %40 = vector.broadcast %cst_33 : bf16 to vector<8x128xbf16>
    %c0_34 = arith.constant 0 : index
    %c0_35 = arith.constant 0 : index
    %c0_36 = arith.constant 0 : index
    %41 = vector.load %arg14[%c0_34, %c0_35, %c0_36] : memref<10x8x128xbf16, #tpu.memory_space<vmem>>, vector<1x8x128xbf16>
    %42 = vector.shape_cast %41 : vector<1x8x128xbf16> to vector<8x128xbf16>
    %43 = vector.shape_cast %40 : vector<8x128xbf16> to vector<1x8x128xbf16>
    tpu.vector_store %arg14[%c0_34, %c0_35, %c0_36], %43 {strides = array<i32>} : memref<10x8x128xbf16, #tpu.memory_space<vmem>>, vector<1x8x128xbf16>,
    %cst_37 = arith.constant 0.000000e+00 : bf16
    %44 = vector.broadcast %cst_37 : bf16 to vector<8x128xbf16>
    %c9 = arith.constant 9 : index
    %c0_38 = arith.constant 0 : index
    %c0_39 = arith.constant 0 : index
    %45 = vector.load %arg14[%c9, %c0_38, %c0_39] : memref<10x8x128xbf16, #tpu.memory_space<vmem>>, vector<1x8x128xbf16>
    %46 = vector.shape_cast %45 : vector<1x8x128xbf16> to vector<8x128xbf16>
    %47 = vector.shape_cast %44 : vector<8x128xbf16> to vector<1x8x128xbf16>
    tpu.vector_store %arg14[%c9, %c0_38, %c0_39], %47 {strides = array<i32>} : memref<10x8x128xbf16, #tpu.memory_space<vmem>>, vector<1x8x128xbf16>,
    %48 = arith.truncf %39 : vector<8x8x128xf32> to vector<8x8x128xbf16>
    %c1_40 = arith.constant 1 : index
    %c0_41 = arith.constant 0 : index
    %c0_42 = arith.constant 0 : index
    %49 = vector.load %arg14[%c1_40, %c0_41, %c0_42] : memref<10x8x128xbf16, #tpu.memory_space<vmem>>, vector<8x8x128xbf16>
    tpu.vector_store %arg14[%c1_40, %c0_41, %c0_42], %48 {strides = array<i32>} : memref<10x8x128xbf16, #tpu.memory_space<vmem>>, vector<8x8x128xbf16>,
    %c0_43 = arith.constant 0 : index
    %c0_44 = arith.constant 0 : index
    %c0_45 = arith.constant 0 : index
    %50 = vector.load %arg14[%c0_43, %c0_44, %c0_45] : memref<10x8x128xbf16, #tpu.memory_space<vmem>>, vector<8x8x128xbf16>
    %51 = vector.shape_cast %50 : vector<8x8x128xbf16> to vector<64x128xbf16>
    %c0_46 = arith.constant 0 : index
    %c0_47 = arith.constant 0 : index
    %c0_48 = arith.constant 0 : index
    %52 = vector.load %arg4[%c0_46, %c0_47, %c0_48] : memref<3x128x256xbf16, #tpu.memory_space<vmem>>, vector<1x128x256xbf16>
    %53 = vector.shape_cast %52 : vector<1x128x256xbf16> to vector<128x256xbf16>
    %cst_49 = arith.constant dense<0.000000e+00> : vector<64x256xf32>
    %54 = tpu.matmul %51, %53, %cst_49 {dimension_numbers = #tpu.dot_dimension_numbers<[1], [0], [0], [1], [0, 0, 1, 1], [], []>} : vector<64x128xbf16>, vector<128x256xbf16>, vector<64x256xf32> -> vector<64x256xf32>
    %c1_50 = arith.constant 1 : index
    %c0_51 = arith.constant 0 : index
    %c0_52 = arith.constant 0 : index
    %55 = vector.load %arg14[%c1_50, %c0_51, %c0_52] : memref<10x8x128xbf16, #tpu.memory_space<vmem>>, vector<8x8x128xbf16>
    %56 = vector.shape_cast %55 : vector<8x8x128xbf16> to vector<64x128xbf16>
    %c1_53 = arith.constant 1 : index
    %c0_54 = arith.constant 0 : index
    %c0_55 = arith.constant 0 : index
    %57 = vector.load %arg4[%c1_53, %c0_54, %c0_55] : memref<3x128x256xbf16, #tpu.memory_space<vmem>>, vector<1x128x256xbf16>
    %58 = vector.shape_cast %57 : vector<1x128x256xbf16> to vector<128x256xbf16>
    %cst_56 = arith.constant dense<0.000000e+00> : vector<64x256xf32>
    %59 = tpu.matmul %56, %58, %cst_56 {dimension_numbers = #tpu.dot_dimension_numbers<[1], [0], [0], [1], [0, 0, 1, 1], [], []>} : vector<64x128xbf16>, vector<128x256xbf16>, vector<64x256xf32> -> vector<64x256xf32>
    %60 = arith.addf %54, %59 : vector<64x256xf32>
    %c2_57 = arith.constant 2 : index
    %c0_58 = arith.constant 0 : index
    %c0_59 = arith.constant 0 : index
    %61 = vector.load %arg14[%c2_57, %c0_58, %c0_59] : memref<10x8x128xbf16, #tpu.memory_space<vmem>>, vector<8x8x128xbf16>
    %62 = vector.shape_cast %61 : vector<8x8x128xbf16> to vector<64x128xbf16>
    %c2_60 = arith.constant 2 : index
    %c0_61 = arith.constant 0 : index
    %c0_62 = arith.constant 0 : index
    %63 = vector.load %arg4[%c2_60, %c0_61, %c0_62] : memref<3x128x256xbf16, #tpu.memory_space<vmem>>, vector<1x128x256xbf16>
    %64 = vector.shape_cast %63 : vector<1x128x256xbf16> to vector<128x256xbf16>
    %cst_63 = arith.constant dense<0.000000e+00> : vector<64x256xf32>
    %65 = tpu.matmul %62, %64, %cst_63 {dimension_numbers = #tpu.dot_dimension_numbers<[1], [0], [0], [1], [0, 0, 1, 1], [], []>} : vector<64x128xbf16>, vector<128x256xbf16>, vector<64x256xf32> -> vector<64x256xf32>
    %66 = arith.addf %60, %65 : vector<64x256xf32>
    %c0_64 = arith.constant 0 : index
    %c0_65 = arith.constant 0 : index
    %67 = vector.load %arg5[%c0_64, %c0_65] : memref<1x256xf32, #tpu.memory_space<vmem>>, vector<1x256xf32>
    %68 = vector.broadcast %67 : vector<1x256xf32> to vector<64x256xf32>
    %69 = arith.addf %66, %68 : vector<64x256xf32>
    %cst_66 = arith.constant 0.000000e+00 : f32
    %70 = vector.broadcast %cst_66 : f32 to vector<64x256xf32>
    %71 = arith.maximumf %69, %70 : vector<64x256xf32>
    %72 = vector.shape_cast %71 : vector<64x256xf32> to vector<4x16x256xf32>
    %73 = vector.extract_strided_slice %72 {offsets = [0, 0, 0], sizes = [4, 8, 256], strides = [1, 1, 1]} : vector<4x16x256xf32> to vector<4x8x256xf32>
    %74 = vector.extract_strided_slice %72 {offsets = [0, 8, 0], sizes = [4, 8, 256], strides = [1, 1, 1]} : vector<4x16x256xf32> to vector<4x8x256xf32>
    %75 = arith.maximumf %73, %74 : vector<4x8x256xf32>
    %76 = vector.extract_strided_slice %75 {offsets = [0, 0, 0], sizes = [4, 8, 128], strides = [1, 1, 1]} : vector<4x8x256xf32> to vector<4x8x128xf32>
    %77 = vector.extract_strided_slice %75 {offsets = [0, 0, 128], sizes = [4, 8, 128], strides = [1, 1, 1]} : vector<4x8x256xf32> to vector<4x8x128xf32>
    %78 = arith.maximumf %76, %77 : vector<4x8x128xf32>
    %79 = vector.extract_strided_slice %78 {offsets = [0, 0, 0], sizes = [1, 8, 128], strides = [1, 1, 1]} : vector<4x8x128xf32> to vector<1x8x128xf32>
    %80 = vector.shape_cast %79 : vector<1x8x128xf32> to vector<8x128xf32>
    %81 = arith.truncf %80 : vector<8x128xf32> to vector<8x128xbf16>
    %c0_67 = arith.constant 0 : index
    %c0_68 = arith.constant 0 : index
    %82 = vector.load %arg15[%c0_67, %c0_68] : memref<8x512xbf16, #tpu.memory_space<vmem>>, vector<8x128xbf16>
    tpu.vector_store %arg15[%c0_67, %c0_68], %81 {strides = array<i32>} : memref<8x512xbf16, #tpu.memory_space<vmem>>, vector<8x128xbf16>,
    %83 = vector.extract_strided_slice %78 {offsets = [1, 0, 0], sizes = [1, 8, 128], strides = [1, 1, 1]} : vector<4x8x128xf32> to vector<1x8x128xf32>
    %84 = vector.shape_cast %83 : vector<1x8x128xf32> to vector<8x128xf32>
    %85 = arith.truncf %84 : vector<8x128xf32> to vector<8x128xbf16>
    %c0_69 = arith.constant 0 : index
    %c128 = arith.constant 128 : index
    %86 = vector.load %arg15[%c0_69, %c128] : memref<8x512xbf16, #tpu.memory_space<vmem>>, vector<8x128xbf16>
    tpu.vector_store %arg15[%c0_69, %c128], %85 {strides = array<i32>} : memref<8x512xbf16, #tpu.memory_space<vmem>>, vector<8x128xbf16>,
    %87 = vector.extract_strided_slice %78 {offsets = [2, 0, 0], sizes = [1, 8, 128], strides = [1, 1, 1]} : vector<4x8x128xf32> to vector<1x8x128xf32>
    %88 = vector.shape_cast %87 : vector<1x8x128xf32> to vector<8x128xf32>
    %89 = arith.truncf %88 : vector<8x128xf32> to vector<8x128xbf16>
    %c0_70 = arith.constant 0 : index
    %c256 = arith.constant 256 : index
    %90 = vector.load %arg15[%c0_70, %c256] : memref<8x512xbf16, #tpu.memory_space<vmem>>, vector<8x128xbf16>
    tpu.vector_store %arg15[%c0_70, %c256], %89 {strides = array<i32>} : memref<8x512xbf16, #tpu.memory_space<vmem>>, vector<8x128xbf16>,
    %91 = vector.extract_strided_slice %78 {offsets = [3, 0, 0], sizes = [1, 8, 128], strides = [1, 1, 1]} : vector<4x8x128xf32> to vector<1x8x128xf32>
    %92 = vector.shape_cast %91 : vector<1x8x128xf32> to vector<8x128xf32>
    %93 = arith.truncf %92 : vector<8x128xf32> to vector<8x128xbf16>
    %c0_71 = arith.constant 0 : index
    %c384 = arith.constant 384 : index
    %94 = vector.load %arg15[%c0_71, %c384] : memref<8x512xbf16, #tpu.memory_space<vmem>>, vector<8x128xbf16>
    tpu.vector_store %arg15[%c0_71, %c384], %93 {strides = array<i32>} : memref<8x512xbf16, #tpu.memory_space<vmem>>, vector<8x128xbf16>,
    %c0_72 = arith.constant 0 : index
    %c0_73 = arith.constant 0 : index
    %95 = vector.load %arg15[%c0_72, %c0_73] : memref<8x512xbf16, #tpu.memory_space<vmem>>, vector<8x512xbf16>
    %c0_74 = arith.constant 0 : index
    %c0_75 = arith.constant 0 : index
    %96 = vector.load %arg6[%c0_74, %c0_75] : memref<512x512xbf16, #tpu.memory_space<vmem>>, vector<512x512xbf16>
    %cst_76 = arith.constant dense<0.000000e+00> : vector<8x512xf32>
    %97 = tpu.matmul %95, %96, %cst_76 {dimension_numbers = #tpu.dot_dimension_numbers<[1], [0], [0], [1], [0, 0, 1, 1], [], []>} : vector<8x512xbf16>, vector<512x512xbf16>, vector<8x512xf32> -> vector<8x512xf32>
    %c0_77 = arith.constant 0 : index
    %c0_78 = arith.constant 0 : index
    %98 = vector.load %arg7[%c0_77, %c0_78] : memref<1x512xf32, #tpu.memory_space<vmem>>, vector<1x512xf32>
    %99 = vector.broadcast %98 : vector<1x512xf32> to vector<8x512xf32>
    %100 = arith.addf %97, %99 : vector<8x512xf32>
    %cst_79 = arith.constant 0.000000e+00 : f32
    %101 = vector.broadcast %cst_79 : f32 to vector<8x512xf32>
    %102 = arith.maximumf %100, %101 : vector<8x512xf32>
    %103 = arith.truncf %102 : vector<8x512xf32> to vector<8x512xbf16>
    %c0_80 = arith.constant 0 : index
    %c0_81 = arith.constant 0 : index
    %104 = vector.load %arg8[%c0_80, %c0_81] : memref<512x256xbf16, #tpu.memory_space<vmem>>, vector<512x256xbf16>
    %cst_82 = arith.constant dense<0.000000e+00> : vector<8x256xf32>
    %105 = tpu.matmul %103, %104, %cst_82 {dimension_numbers = #tpu.dot_dimension_numbers<[1], [0], [0], [1], [0, 0, 1, 1], [], []>} : vector<8x512xbf16>, vector<512x256xbf16>, vector<8x256xf32> -> vector<8x256xf32>
    %c0_83 = arith.constant 0 : index
    %c0_84 = arith.constant 0 : index
    %106 = vector.load %arg9[%c0_83, %c0_84] : memref<1x256xf32, #tpu.memory_space<vmem>>, vector<1x256xf32>
    %107 = vector.broadcast %106 : vector<1x256xf32> to vector<8x256xf32>
    %108 = arith.addf %105, %107 : vector<8x256xf32>
    %cst_85 = arith.constant 0.000000e+00 : f32
    %109 = vector.broadcast %cst_85 : f32 to vector<8x256xf32>
    %110 = arith.maximumf %108, %109 : vector<8x256xf32>
    %111 = arith.truncf %110 : vector<8x256xf32> to vector<8x256xbf16>
    %c0_86 = arith.constant 0 : index
    %c0_87 = arith.constant 0 : index
    %112 = vector.load %arg10[%c0_86, %c0_87] : memref<256x128xbf16, #tpu.memory_space<vmem>>, vector<256x128xbf16>
    %cst_88 = arith.constant dense<0.000000e+00> : vector<8x128xf32>
    %113 = tpu.matmul %111, %112, %cst_88 {dimension_numbers = #tpu.dot_dimension_numbers<[1], [0], [0], [1], [0, 0, 1, 1], [], []>} : vector<8x256xbf16>, vector<256x128xbf16>, vector<8x128xf32> -> vector<8x128xf32>
    %c0_89 = arith.constant 0 : index
    %c0_90 = arith.constant 0 : index
    %114 = vector.load %arg11[%c0_89, %c0_90] : memref<1x128xf32, #tpu.memory_space<vmem>>, vector<1x128xf32>
    %115 = vector.broadcast %114 : vector<1x128xf32> to vector<8x128xf32>
    %116 = arith.addf %113, %115 : vector<8x128xf32>
    %c0_91 = arith.constant 0 : index
    %c0_92 = arith.constant 0 : index
    %117 = vector.load %arg12[%c0_91, %c0_92] : memref<8x128xf32, #tpu.memory_space<vmem>>, vector<8x128xf32>
    tpu.vector_store %arg12[%c0_91, %c0_92], %116 {strides = array<i32>} : memref<8x128xf32, #tpu.memory_space<vmem>>, vector<8x128xf32>,
    return
  }
  func.func @transform_0(%arg0: i32) -> (i32, i32, i32) {
    %c0_i32 = arith.constant 0 : i32
    %c0_i32_0 = arith.constant 0 : i32
    %c0_i32_1 = arith.constant 0 : i32
    return %c0_i32, %arg0, %c0_i32_0 : i32, i32, i32
  }
  func.func @transform_1(%arg0: i32) -> (i32, i32, i32) {
    %c0_i32 = arith.constant 0 : i32
    %c0_i32_0 = arith.constant 0 : i32
    %c0_i32_1 = arith.constant 0 : i32
    %c0_i32_2 = arith.constant 0 : i32
    return %c0_i32, %c0_i32_0, %c0_i32_1 : i32, i32, i32
  }
  func.func @transform_2(%arg0: i32) -> (i32, i32) {
    %c0_i32 = arith.constant 0 : i32
    %c0_i32_0 = arith.constant 0 : i32
    %c0_i32_1 = arith.constant 0 : i32
    return %c0_i32, %c0_i32_0 : i32, i32
  }
  func.func @transform_3(%arg0: i32) -> (i32, i32, i32) {
    %c0_i32 = arith.constant 0 : i32
    %c0_i32_0 = arith.constant 0 : i32
    %c0_i32_1 = arith.constant 0 : i32
    %c0_i32_2 = arith.constant 0 : i32
    return %c0_i32, %c0_i32_0, %c0_i32_1 : i32, i32, i32
  }
  func.func @transform_4(%arg0: i32) -> (i32, i32) {
    %c0_i32 = arith.constant 0 : i32
    %c0_i32_0 = arith.constant 0 : i32
    %c0_i32_1 = arith.constant 0 : i32
    return %c0_i32, %c0_i32_0 : i32, i32
  }
  func.func @transform_5(%arg0: i32) -> (i32, i32) {
    %c0_i32 = arith.constant 0 : i32
    %c0_i32_0 = arith.constant 0 : i32
    %c0_i32_1 = arith.constant 0 : i32
    return %c0_i32, %c0_i32_0 : i32, i32
  }
  func.func @transform_6(%arg0: i32) -> (i32, i32) {
    %c0_i32 = arith.constant 0 : i32
    %c0_i32_0 = arith.constant 0 : i32
    %c0_i32_1 = arith.constant 0 : i32
    return %c0_i32, %c0_i32_0 : i32, i32
  }
  func.func @transform_7(%arg0: i32) -> (i32, i32) {
    %c0_i32 = arith.constant 0 : i32
    %c0_i32_0 = arith.constant 0 : i32
    %c0_i32_1 = arith.constant 0 : i32
    return %c0_i32, %c0_i32_0 : i32, i32
  }
  func.func @transform_8(%arg0: i32) -> (i32, i32) {
    %c0_i32 = arith.constant 0 : i32
    %c0_i32_0 = arith.constant 0 : i32
    %c0_i32_1 = arith.constant 0 : i32
    return %c0_i32, %c0_i32_0 : i32, i32
  }
  func.func @transform_9(%arg0: i32) -> (i32, i32) {
    %c0_i32 = arith.constant 0 : i32
    %c0_i32_0 = arith.constant 0 : i32
    %c0_i32_1 = arith.constant 0 : i32
    return %c0_i32, %c0_i32_0 : i32, i32
  }
  func.func @transform_10(%arg0: i32) -> (i32, i32) {
    %c0_i32 = arith.constant 0 : i32
    %c0_i32_0 = arith.constant 0 : i32
    %c0_i32_1 = arith.constant 0 : i32
    return %c0_i32, %c0_i32_0 : i32, i32
  }
  func.func @transform_11(%arg0: i32) -> (i32, i32) {
    %c0_i32 = arith.constant 0 : i32
    %c0_i32_0 = arith.constant 0 : i32
    return %arg0, %c0_i32 : i32, i32
  }
}

</mosaic_0001>

<llo_original>
// kernel: net_forward.1
$region0: #{net_forward.1}
  #allocation0 [shape = 'u32[]', space=smem, size = 0x4, offset = 0x4, fixed_abs, tag = 'smem constant byte address 0x4 - core index']
  #allocation1 [shape = 'u32[144,128]{1,0:T(1,128)}', space=vmem, size = 0x12000, scoped, tag = 'internal scratch']
  #allocation2 [shape = 'bf16[18,8,16]{2,1,0:T(8,128)(2,1)}', space=vmem, size = 0x9000, scoped, tag = 'scratch operand']
  #allocation3 [shape = 'bf16[10,8,128]{2,1,0:T(8,128)(2,1)}', space=vmem, size = 0x5000, scoped, tag = 'scratch operand']
  #allocation4 [shape = 'bf16[8,512]{1,0:T(8,128)(2,1)}', space=vmem, size = 0x2000, scoped, tag = 'scratch operand']
  %s0 = inlined_call_operand.vmem [shape: f32[16,16,16], index: 0, kind: input, shape index: {}]
  %s1 = inlined_call_operand.hbm [shape: bf16[3,16,256], index: 1, kind: input, shape index: {}]
  %s2 = inlined_call_operand.vmem [shape: f32[1,256], index: 2, kind: input, shape index: {}]
  %s3 = inlined_call_operand.hbm [shape: bf16[3,128,256], index: 3, kind: input, shape index: {}]
  %s4 = inlined_call_operand.vmem [shape: f32[1,256], index: 4, kind: input, shape index: {}]
  %s5 = inlined_call_operand.hbm [shape: bf16[512,512], index: 5, kind: input, shape index: {}]
  %s6 = inlined_call_operand.vmem [shape: f32[1,512], index: 6, kind: input, shape index: {}]
  %s7 = inlined_call_operand.vmem [shape: bf16[512,256], index: 7, kind: input, shape index: {}]
  %s8 = inlined_call_operand.vmem [shape: f32[1,256], index: 8, kind: input, shape index: {}]
  %s9 = inlined_call_operand.hbm [shape: bf16[256,128], index: 9, kind: input, shape index: {}]
  %s10 = inlined_call_operand.vmem [shape: f32[1,128], index: 10, kind: input, shape index: {}]
  %s11 = inlined_call_operand.hbm [shape: f32[16,128], index: 11, kind: output, shape index: {}]
  %s12 = sld [smem:[#allocation0]]
  $region131: #{net_forward.1} parent=0
    _
  %s14 = ssub.s32 1, %s12
  %s15 = scalar_select 0, %s14, %s12
  $region1: #{net_forward.1} parent=0
    #allocation5 [shape = 'u8[131072]{0}', space=vmem, size = 0x20000, scoped, tag = 'input window, operand 0']
    #allocation6 [shape = 'u8[24576]{0}', space=vmem, size = 0x6000, scoped, tag = 'input window, operand 1, single buffered']
    #allocation7 [shape = 's32[2]{0}', space=sflag, size = 0x8, scoped, tag = 'scoped memory for net_forward.1']
    #allocation8 [shape = 's32[2]{0}', space=sflag, size = 0x8, scoped, tag = 'scoped memory for net_forward.1']
    #allocation9 [shape = 'u8[196608]{0}', space=vmem, size = 0x30000, scoped, tag = 'input window, operand 3, single buffered']
    #allocation10 [shape = 's32[1]{0}', space=sflag, size = 0x4, scoped, tag = 'scoped memory for net_forward.1']
    #allocation11 [shape = 'u8[524288]{0}', space=vmem, size = 0x80000, scoped, tag = 'input window, operand 5, single buffered']
    #allocation12 [shape = 'u8[65536]{0}', space=vmem, size = 0x10000, scoped, tag = 'input window, operand 9, single buffered']
    #allocation13 [shape = 's32[1]{0}', space=sflag, size = 0x4, scoped, tag = 'scoped memory for net_forward.1']
    #allocation14 [shape = 'u8[8192]{0}', space=vmem, size = 0x2000, scoped, tag = 'output window, operand 0']
    %16 = vsyncpa [#allocation7], 0
    %17 = vsyncpa [#allocation10], 0
    %18 = vsyncpa [#allocation13], 0
    %19 = vsyncpa [#allocation8], 0
    %s20 = scalar_lea.sflag [#allocation8], 1
    %21 = vsyncpa %s20, 0
    loop: start=0, step=1, limit=4
    $region2: #{net_forward.1} parent=1 // loop_pre_header
      _
    $region3: #{net_forward.1} parent=1 // loop_header
      %s23 = sphi 0, %s27
      %p24 = scmp.ge.s32.totalorder %s23, 4
      %s33 = sphi 0, %s35
      %s36 = sphi 0, %s33
      %s37 = sphi 0, %s36
      %s53 = sphi 0, %s37
      %s57 = sphi 0, %s57
      %s59 = sphi 0, %s57
      %s60 = sphi 0, %s59
      %s74 = sphi 0, %s60
      %s78 = sphi 0, %s78
      %s80 = sphi 0, %s78
      %s81 = sphi 0, %s80
      %s95 = sphi 0, %s81
      %s99 = sphi 0, %s99
      %s101 = sphi 0, %s99
      %s102 = sphi 0, %s101
      %s116 = sphi 0, %s102
      %s120 = sphi 0, %s120
      %s122 = sphi 0, %s120
      %s123 = sphi 0, %s122
      %s137 = sphi 0, %s123
      %s141 = sphi 0, %s141
      %s143 = sphi 0, %s141
      %s144 = sphi 0, %s143
      %s158 = sphi 0, %s144
      %s162 = sphi 0, %s162
      %s164 = sphi 0, %s162
      %s165 = sphi 0, %s164
      %s179 = sphi 0, %s165
      %s183 = sphi 0, %s183
      %s185 = sphi 0, %s183
      %s186 = sphi 0, %s185
      %s200 = sphi 0, %s186
      %s204 = sphi 0, %s204
      %s206 = sphi 0, %s204
      %s207 = sphi 0, %s206
      %s221 = sphi 0, %s207
      %s225 = sphi 0, %s225
      %s227 = sphi 0, %s225
      %s228 = sphi 0, %s227
      %s242 = sphi 0, %s228
      %s246 = sphi 0, %s246
      %s248 = sphi 0, %s246
      %s249 = sphi 0, %s248
      %s263 = sphi 0, %s249
      %s269 = sphi 0, %s271
      %s272 = sphi 0, %s269
      %s273 = sphi 0, %s272
      %s289 = sphi 0, %s273
    $region4: #{net_forward.1} parent=1 // loop_header_branch
      %26 = sbr.rel (%p24) target = $region8
    $region5: #{net_forward.1} parent=1 // loop_body
      %s28 = ssub.s32 %s23, 1
      %s29 = ssub.s32 %s23, 2
      %s30 = sadd.s32 %s23, 1
      %s31 = ssub.s32 %s23, %s30
      %p32 = scmp.eq.s32.totalorder %s31, 0
      %s34 = sadd.s32 %s33, 1
      %s35 = scalar_select %p32, %s33, %s34
      %p38 = pneg %p32
      %p39 = scmp.eq.s32.totalorder %s23, 1
      %p40 = por %p38, %p39
      %p41 = scmp.ne.s32.totalorder %s33, %s36
      %p42 = scmp.eq.s32.totalorder %s23, 0
      %p43 = por %p41, %p42
      %p44 = scmp.ne.s32.totalorder %s33, %s36
      %p45 = scmp.eq.s32.totalorder %s28, 1
      %p46 = por %p44, %p45
      %p47 = scmp.ne.s32.totalorder %s36, %s37
      %p48 = scmp.eq.s32.totalorder %s28, 0
      %p49 = por %p47, %p48
      %p50 = scmp.ne.s32.totalorder %s36, %s37
      %p51 = scmp.eq.s32.totalorder %s29, 1
      %p52 = por %p50, %p51
      %p54 = scmp.ne.s32.totalorder %s37, %s53
      %p55 = scmp.eq.s32.totalorder %s29, 0
      %p56 = por %p54, %p55
      %s58 = sadd.s32 %s57, 1
      %p61 = scmp.eq.s32.totalorder %s23, 1
      %p62 = scmp.ne.s32.totalorder %s57, %s59
      %p63 = scmp.eq.s32.totalorder %s23, 0
      %p64 = por %p62, %p63
      %p65 = scmp.ne.s32.totalorder %s57, %s59
      %p66 = scmp.eq.s32.totalorder %s28, 1
      %p67 = por %p65, %p66
      %p68 = scmp.ne.s32.totalorder %s59, %s60
      %p69 = scmp.eq.s32.totalorder %s28, 0
      %p70 = por %p68, %p69
      %p71 = scmp.ne.s32.totalorder %s59, %s60
      %p72 = scmp.eq.s32.totalorder %s29, 1
      %p73 = por %p71, %p72
      %p75 = scmp.ne.s32.totalorder %s60, %s74
      %p76 = scmp.eq.s32.totalorder %s29, 0
      %p77 = por %p75, %p76
      %s79 = sadd.s32 %s78, 1
      %p82 = scmp.eq.s32.totalorder %s23, 1
      %p83 = scmp.ne.s32.totalorder %s78, %s80
      %p84 = scmp.eq.s32.totalorder %s23, 0
      %p85 = por %p83, %p84
      %p86 = scmp.ne.s32.totalorder %s78, %s80
      %p87 = scmp.eq.s32.totalorder %s28, 1
      %p88 = por %p86, %p87
      %p89 = scmp.ne.s32.totalorder %s80, %s81
      %p90 = scmp.eq.s32.totalorder %s28, 0
      %p91 = por %p89, %p90
      %p92 = scmp.ne.s32.totalorder %s80, %s81
      %p93 = scmp.eq.s32.totalorder %s29, 1
      %p94 = por %p92, %p93
      %p96 = scmp.ne.s32.totalorder %s81, %s95
      %p97 = scmp.eq.s32.totalorder %s29, 0
      %p98 = por %p96, %p97
      %s100 = sadd.s32 %s99, 1
      %p103 = scmp.eq.s32.totalorder %s23, 1
      %p104 = scmp.ne.s32.totalorder %s99, %s101
      %p105 = scmp.eq.s32.totalorder %s23, 0
      %p106 = por %p104, %p105
      %p107 = scmp.ne.s32.totalorder %s99, %s101
      %p108 = scmp.eq.s32.totalorder %s28, 1
      %p109 = por %p107, %p108
      %p110 = scmp.ne.s32.totalorder %s101, %s102
      %p111 = scmp.eq.s32.totalorder %s28, 0
      %p112 = por %p110, %p111
      %p113 = scmp.ne.s32.totalorder %s101, %s102
      %p114 = scmp.eq.s32.totalorder %s29, 1
      %p115 = por %p113, %p114
      %p117 = scmp.ne.s32.totalorder %s102, %s116
      %p118 = scmp.eq.s32.totalorder %s29, 0
      %p119 = por %p117, %p118
      %s121 = sadd.s32 %s120, 1
      %p124 = scmp.eq.s32.totalorder %s23, 1
      %p125 = scmp.ne.s32.totalorder %s120, %s122
      %p126 = scmp.eq.s32.totalorder %s23, 0
      %p127 = por %p125, %p126
      %p128 = scmp.ne.s32.totalorder %s120, %s122
      %p129 = scmp.eq.s32.totalorder %s28, 1
      %p130 = por %p128, %p129
      %p131 = scmp.ne.s32.totalorder %s122, %s123
      %p132 = scmp.eq.s32.totalorder %s28, 0
      %p133 = por %p131, %p132
      %p134 = scmp.ne.s32.totalorder %s122, %s123
      %p135 = scmp.eq.s32.totalorder %s29, 1
      %p136 = por %p134, %p135
      %p138 = scmp.ne.s32.totalorder %s123, %s137
      %p139 = scmp.eq.s32.totalorder %s29, 0
      %p140 = por %p138, %p139
      %s142 = sadd.s32 %s141, 1
      %p145 = scmp.eq.s32.totalorder %s23, 1
      %p146 = scmp.ne.s32.totalorder %s141, %s143
      %p147 = scmp.eq.s32.totalorder %s23, 0
      %p148 = por %p146, %p147
      %p149 = scmp.ne.s32.totalorder %s141, %s143
      %p150 = scmp.eq.s32.totalorder %s28, 1
      %p151 = por %p149, %p150
      %p152 = scmp.ne.s32.totalorder %s143, %s144
      %p153 = scmp.eq.s32.totalorder %s28, 0
      %p154 = por %p152, %p153
      %p155 = scmp.ne.s32.totalorder %s143, %s144
      %p156 = scmp.eq.s32.totalorder %s29, 1
      %p157 = por %p155, %p156
      %p159 = scmp.ne.s32.totalorder %s144, %s158
      %p160 = scmp.eq.s32.totalorder %s29, 0
      %p161 = por %p159, %p160
      %s163 = sadd.s32 %s162, 1
      %p166 = scmp.eq.s32.totalorder %s23, 1
      %p167 = scmp.ne.s32.totalorder %s162, %s164
      %p168 = scmp.eq.s32.totalorder %s23, 0
      %p169 = por %p167, %p168
      %p170 = scmp.ne.s32.totalorder %s162, %s164
      %p171 = scmp.eq.s32.totalorder %s28, 1
      %p172 = por %p170, %p171
      %p173 = scmp.ne.s32.totalorder %s164, %s165
      %p174 = scmp.eq.s32.totalorder %s28, 0
      %p175 = por %p173, %p174
      %p176 = scmp.ne.s32.totalorder %s164, %s165
      %p177 = scmp.eq.s32.totalorder %s29, 1
      %p178 = por %p176, %p177
      %p180 = scmp.ne.s32.totalorder %s165, %s179
      %p181 = scmp.eq.s32.totalorder %s29, 0
      %p182 = por %p180, %p181
      %s184 = sadd.s32 %s183, 1
      %p187 = scmp.eq.s32.totalorder %s23, 1
      %p188 = scmp.ne.s32.totalorder %s183, %s185
      %p189 = scmp.eq.s32.totalorder %s23, 0
      %p190 = por %p188, %p189
      %p191 = scmp.ne.s32.totalorder %s183, %s185
      %p192 = scmp.eq.s32.totalorder %s28, 1
      %p193 = por %p191, %p192
      %p194 = scmp.ne.s32.totalorder %s185, %s186
      %p195 = scmp.eq.s32.totalorder %s28, 0
      %p196 = por %p194, %p195
      %p197 = scmp.ne.s32.totalorder %s185, %s186
      %p198 = scmp.eq.s32.totalorder %s29, 1
      %p199 = por %p197, %p198
      %p201 = scmp.ne.s32.totalorder %s186, %s200
      %p202 = scmp.eq.s32.totalorder %s29, 0
      %p203 = por %p201, %p202
      %s205 = sadd.s32 %s204, 1
      %p208 = scmp.eq.s32.totalorder %s23, 1
      %p209 = scmp.ne.s32.totalorder %s204, %s206
      %p210 = scmp.eq.s32.totalorder %s23, 0
      %p211 = por %p209, %p210
      %p212 = scmp.ne.s32.totalorder %s204, %s206
      %p213 = scmp.eq.s32.totalorder %s28, 1
      %p214 = por %p212, %p213
      %p215 = scmp.ne.s32.totalorder %s206, %s207
      %p216 = scmp.eq.s32.totalorder %s28, 0
      %p217 = por %p215, %p216
      %p218 = scmp.ne.s32.totalorder %s206, %s207
      %p219 = scmp.eq.s32.totalorder %s29, 1
      %p220 = por %p218, %p219
      %p222 = scmp.ne.s32.totalorder %s207, %s221
      %p223 = scmp.eq.s32.totalorder %s29, 0
      %p224 = por %p222, %p223
      %s226 = sadd.s32 %s225, 1
      %p229 = scmp.eq.s32.totalorder %s23, 1
      %p230 = scmp.ne.s32.totalorder %s225, %s227
      %p231 = scmp.eq.s32.totalorder %s23, 0
      %p232 = por %p230, %p231
      %p233 = scmp.ne.s32.totalorder %s225, %s227
      %p234 = scmp.eq.s32.totalorder %s28, 1
      %p235 = por %p233, %p234
      %p236 = scmp.ne.s32.totalorder %s227, %s228
      %p237 = scmp.eq.s32.totalorder %s28, 0
      %p238 = por %p236, %p237
      %p239 = scmp.ne.s32.totalorder %s227, %s228
      %p240 = scmp.eq.s32.totalorder %s29, 1
      %p241 = por %p239, %p240
      %p243 = scmp.ne.s32.totalorder %s228, %s242
      %p244 = scmp.eq.s32.totalorder %s29, 0
      %p245 = por %p243, %p244
      %s247 = sadd.s32 %s246, 1
      %p250 = scmp.eq.s32.totalorder %s23, 1
      %p251 = scmp.ne.s32.totalorder %s246, %s248
      %p252 = scmp.eq.s32.totalorder %s23, 0
      %p253 = por %p251, %p252
      %p254 = scmp.ne.s32.totalorder %s246, %s248
      %p255 = scmp.eq.s32.totalorder %s28, 1
      %p256 = por %p254, %p255
      %p257 = scmp.ne.s32.totalorder %s248, %s249
      %p258 = scmp.eq.s32.totalorder %s28, 0
      %p259 = por %p257, %p258
      %p260 = scmp.ne.s32.totalorder %s248, %s249
      %p261 = scmp.eq.s32.totalorder %s29, 1
      %p262 = por %p260, %p261
      %p264 = scmp.ne.s32.totalorder %s249, %s263
      %p265 = scmp.eq.s32.totalorder %s29, 0
      %p266 = por %p264, %p265
      %s267 = ssub.s32 %s23, %s30
      %p268 = scmp.eq.s32.totalorder %s267, 0
      %s270 = sadd.s32 %s269, 1
      %s271 = scalar_select %p268, %s269, %s270
      %p274 = pneg %p268
      %p275 = scmp.eq.s32.totalorder %s23, 1
      %p276 = por %p274, %p275
      %p277 = scmp.ne.s32.totalorder %s269, %s272
      %p278 = scmp.eq.s32.totalorder %s23, 0
      %p279 = por %p277, %p278
      %p280 = scmp.ne.s32.totalorder %s269, %s272
      %p281 = scmp.eq.s32.totalorder %s28, 1
      %p282 = por %p280, %p281
      %p283 = scmp.ne.s32.totalorder %s272, %s273
      %p284 = scmp.eq.s32.totalorder %s28, 0
      %p285 = por %p283, %p284
      %p286 = scmp.ne.s32.totalorder %s272, %s273
      %p287 = scmp.eq.s32.totalorder %s29, 1
      %p288 = por %p286, %p287
      %p290 = scmp.ne.s32.totalorder %s273, %s289
      %p291 = scmp.eq.s32.totalorder %s29, 0
      %p292 = por %p290, %p291
      %p293 = scmp.le.s32.totalorder 1, %s23
      %p294 = scmp.lt.s32.totalorder %s23, 3
      %p295 = pnand %p293, %p294
      %p296 = pneg %p295
      // Predicated region
      $region9: #{net_forward.1} parent=5 // pred_check
        _
      $region10: #{net_forward.1} parent=5 // pred_check_branch
        %298 = sbr.rel (%p295) target = $region12
      $region11: #{net_forward.1} parent=5 // pred_region
        %s299 = ssub.s32 %s23, 1
        // Predicated region
        $region13: #{net_forward.1} parent=11 // pred_check
          %p300 = pneg %p70
        $region14: #{net_forward.1} parent=11 // pred_check_branch
          %302 = sbr.rel (%p300) target = $region16
        $region15: #{net_forward.1} parent=11 // pred_region
          %s304 = ssub.s32 768, 768
          %305 = vsyncadd [#allocation7], %s304
          %s306 = sshll.u32 [#allocation6], 4
          %s307 = int_to_ptr.vmem [resolvable:$true] %s306
          %312 = dma.hbm_to_vmem [thread:$0]  %s1, 768, %s307, [#allocation7], 128, 128, 8
        $region16: #{net_forward.1} parent=11 // pred_fallthru
          _
        // Predicated region
        $region17: #{net_forward.1} parent=11 // pred_check
          %p313 = pneg %p91
        $region18: #{net_forward.1} parent=11 // pred_check_branch
          %315 = sbr.rel (%p313) target = $region20
        $region19: #{net_forward.1} parent=11 // pred_region
          _
        $region20: #{net_forward.1} parent=11 // pred_fallthru
          _
        // Predicated region
        $region21: #{net_forward.1} parent=11 // pred_check
          %p316 = pneg %p112
        $region22: #{net_forward.1} parent=11 // pred_check_branch
          %318 = sbr.rel (%p316) target = $region24
        $region23: #{net_forward.1} parent=11 // pred_region
          %s320 = ssub.s32 6144, 6144
          %321 = vsyncadd [#allocation10], %s320
          %s322 = sshll.u32 [#allocation9], 4
          %s323 = int_to_ptr.vmem [resolvable:$true] %s322
          %328 = dma.hbm_to_vmem [thread:$0]  %s3, 6144, %s323, [#allocation10], 128, 128, 8
        $region24: #{net_forward.1} parent=11 // pred_fallthru
          _
        // Predicated region
        $region25: #{net_forward.1} parent=11 // pred_check
          %p329 = pneg %p133
        $region26: #{net_forward.1} parent=11 // pred_check_branch
          %331 = sbr.rel (%p329) target = $region28
        $region27: #{net_forward.1} parent=11 // pred_region
          _
        $region28: #{net_forward.1} parent=11 // pred_fallthru
          _
        // Predicated region
        $region29: #{net_forward.1} parent=11 // pred_check
          %p332 = pneg %p154
        $region30: #{net_forward.1} parent=11 // pred_check_branch
          %334 = sbr.rel (%p332) target = $region32
        $region31: #{net_forward.1} parent=11 // pred_region
          %s336 = ssub.s32 16384, 16384
          %337 = vsyncadd [#allocation10], %s336
          %s338 = sshll.u32 [#allocation11], 4
          %s339 = int_to_ptr.vmem [resolvable:$true] %s338
          %344 = dma.hbm_to_vmem [thread:$0]  %s5, 16384, %s339, [#allocation10], 256, 256, 16
        $region32: #{net_forward.1} parent=11 // pred_fallthru
          _
        // Predicated region
        $region33: #{net_forward.1} parent=11 // pred_check
          %p345 = pneg %p175
        $region34: #{net_forward.1} parent=11 // pred_check_branch
          %347 = sbr.rel (%p345) target = $region36
        $region35: #{net_forward.1} parent=11 // pred_region
          _
        $region36: #{net_forward.1} parent=11 // pred_fallthru
          _
        // Predicated region
        $region37: #{net_forward.1} parent=11 // pred_check
          %p348 = pneg %p196
        $region38: #{net_forward.1} parent=11 // pred_check_branch
          %350 = sbr.rel (%p348) target = $region40
        $region39: #{net_forward.1} parent=11 // pred_region
          _
        $region40: #{net_forward.1} parent=11 // pred_fallthru
          _
        // Predicated region
        $region41: #{net_forward.1} parent=11 // pred_check
          %p351 = pneg %p217
        $region42: #{net_forward.1} parent=11 // pred_check_branch
          %353 = sbr.rel (%p351) target = $region44
        $region43: #{net_forward.1} parent=11 // pred_region
          _
        $region44: #{net_forward.1} parent=11 // pred_fallthru
          _
        // Predicated region
        $region45: #{net_forward.1} parent=11 // pred_check
          %p354 = pneg %p238
        $region46: #{net_forward.1} parent=11 // pred_check_branch
          %356 = sbr.rel (%p354) target = $region48
        $region47: #{net_forward.1} parent=11 // pred_region
          %s358 = ssub.s32 2048, 2048
          %359 = vsyncadd [#allocation13], %s358
          %s360 = sshll.u32 [#allocation12], 4
          %s361 = int_to_ptr.vmem [resolvable:$true] %s360
          %366 = dma.hbm_to_vmem [thread:$0]  %s9, 2048, %s361, [#allocation13], 64, 64, 4
        $region48: #{net_forward.1} parent=11 // pred_fallthru
          _
        // Predicated region
        $region49: #{net_forward.1} parent=11 // pred_check
          %p367 = pneg %p259
        $region50: #{net_forward.1} parent=11 // pred_check_branch
          %369 = sbr.rel (%p367) target = $region52
        $region51: #{net_forward.1} parent=11 // pred_region
          _
        $region52: #{net_forward.1} parent=11 // pred_fallthru
          _
      $region12: #{net_forward.1} parent=5 // pred_fallthru
        _
      %p370 = scmp.lt.s32.totalorder %s23, 2
      // Predicated region
      $region53: #{net_forward.1} parent=5 // pred_check
        %p371 = pneg %p370
      $region54: #{net_forward.1} parent=5 // pred_check_branch
        %373 = sbr.rel (%p371) target = $region56
      $region55: #{net_forward.1} parent=5 // pred_region
        // Predicated region
        $region57: #{net_forward.1} parent=55 // pred_check
          %p374 = pneg %p43
        $region58: #{net_forward.1} parent=55 // pred_check_branch
          %376 = sbr.rel (%p374) target = $region60
        $region59: #{net_forward.1} parent=55 // pred_region
          %s377 = sand.u32 %s33, 1
          %s378 = sand.u32 %s33, 1
          %s379 = smul.addr %s378, 128
          %s380 = scalar_lea.vmem [#allocation5], %s379
          %s381 = smul.addr %s23, 8
          %s382 = scalar_lea.vmem %s0, %s381
          // Predicated region
          $region61: #{net_forward.1} parent=59 // pred_check
            _
          $region62: #{net_forward.1} parent=59 // pred_check_branch
            %384 = sbr.rel (0) target = $region64
          $region63: #{net_forward.1} parent=59 // pred_region
            // Predicated region
            $region65: #{net_forward.1} parent=63 // pred_check
              _
            $region66: #{net_forward.1} parent=63 // pred_check_branch
              %386 = sbr.rel (0) target = $region68
            $region67: #{net_forward.1} parent=63 // pred_region
              // Predicated region
              $region80: #{net_forward.1} parent=67 // pred_check
                _
              $region81: #{net_forward.1} parent=67 // pred_check_branch
                %431 = sbr.rel (0) target = $region83
              $region82: #{net_forward.1} parent=67 // pred_region
                loop: start=0, step=1, limit=1
                $region84: #{net_forward.1} parent=82 // loop_pre_header
                  _
                $region85: #{net_forward.1} parent=82 // loop_header
                  %s433 = sphi 0, %s437
                  %p434 = scmp.ge.s32.totalorder %s433, 1
                  %s438 = sphi %s382, %s382
                  %s439 = sphi %s380, %s380
                $region86: #{net_forward.1} parent=82 // loop_header_branch
                  %436 = sbr.rel (%p434) target = $region90
                $region87: #{net_forward.1} parent=82 // loop_body
                  %v440 = vld [vmem:[%s438] sm:$0xff]
                  %441 = vst [vmem:[%s439] sm:$0xff] %v440
                  %v442 = vld [vmem:[%s438 + $0x10] sm:$0xff]
                  %443 = vst [vmem:[%s439 + $0x8] sm:$0xff] %v442
                  %v444 = vld [vmem:[%s438 + $0x20] sm:$0xff]
                  %445 = vst [vmem:[%s439 + $0x10] sm:$0xff] %v444
                  %v446 = vld [vmem:[%s438 + $0x30] sm:$0xff]
                  %447 = vst [vmem:[%s439 + $0x18] sm:$0xff] %v446
                  %v448 = vld [vmem:[%s438 + $0x40] sm:$0xff]
                  %449 = vst [vmem:[%s439 + $0x20] sm:$0xff] %v448
                  %v450 = vld [vmem:[%s438 + $0x50] sm:$0xff]
                  %451 = vst [vmem:[%s439 + $0x28] sm:$0xff] %v450
                  %v452 = vld [vmem:[%s438 + $0x60] sm:$0xff]
                  %453 = vst [vmem:[%s439 + $0x30] sm:$0xff] %v452
                  %v454 = vld [vmem:[%s438 + $0x70] sm:$0xff]
                  %455 = vst [vmem:[%s439 + $0x38] sm:$0xff] %v454
                  %v456 = vld [vmem:[%s438 + $0x80] sm:$0xff]
                  %457 = vst [vmem:[%s439 + $0x40] sm:$0xff] %v456
                  %v458 = vld [vmem:[%s438 + $0x90] sm:$0xff]
                  %459 = vst [vmem:[%s439 + $0x48] sm:$0xff] %v458
                  %v460 = vld [vmem:[%s438 + $0xa0] sm:$0xff]
                  %461 = vst [vmem:[%s439 + $0x50] sm:$0xff] %v460
                  %v462 = vld [vmem:[%s438 + $0xb0] sm:$0xff]
                  %463 = vst [vmem:[%s439 + $0x58] sm:$0xff] %v462
                  %v464 = vld [vmem:[%s438 + $0xc0] sm:$0xff]
                  %465 = vst [vmem:[%s439 + $0x60] sm:$0xff] %v464
                  %v466 = vld [vmem:[%s438 + $0xd0] sm:$0xff]
                  %467 = vst [vmem:[%s439 + $0x68] sm:$0xff] %v466
                  %v468 = vld [vmem:[%s438 + $0xe0] sm:$0xff]
                  %469 = vst [vmem:[%s439 + $0x70] sm:$0xff] %v468
                  %v470 = vld [vmem:[%s438 + $0xf0] sm:$0xff]
                  %471 = vst [vmem:[%s439 + $0x78] sm:$0xff] %v470
                $region88: #{net_forward.1} parent=82 // loop_footer
                  %s437 = sadd.s32 1, %s433
                $region89: #{net_forward.1} parent=82 // loop_footer_branch
                  %432 = sbr.rel target = $region85
                $region90: #{net_forward.1} parent=82 // loop_exit
                  _
              $region83: #{net_forward.1} parent=67 // pred_fallthru
                _
              // Predicated region
              $region91: #{net_forward.1} parent=67 // pred_check
                _
              $region92: #{net_forward.1} parent=67 // pred_check_branch
                %473 = sbr.rel target = $region94
              $region93: #{net_forward.1} parent=67 // pred_region
                _
              $region94: #{net_forward.1} parent=67 // pred_fallthru
                _
            $region68: #{net_forward.1} parent=63 // pred_fallthru
              _
            // Predicated region
            $region69: #{net_forward.1} parent=63 // pred_check
              _
            $region70: #{net_forward.1} parent=63 // pred_check_branch
              %388 = sbr.rel target = $region72
            $region71: #{net_forward.1} parent=63 // pred_region
              loop: start=0, step=1, limit=1
              $region73: #{net_forward.1} parent=71 // loop_pre_header
                _
              $region74: #{net_forward.1} parent=71 // loop_header
                %s391 = sphi 0, %s395
                %p392 = scmp.ge.s32.totalorder %s391, 1
                %s396 = sphi %s382, %s382
                %s397 = sphi %s380, %s380
              $region75: #{net_forward.1} parent=71 // loop_header_branch
                %394 = sbr.rel (%p392) target = $region79
              $region76: #{net_forward.1} parent=71 // loop_body
                %v398 = vld [vmem:[%s396] sm:$0xff]
                %399 = vst [vmem:[%s397] sm:$0xff] %v398
                %v400 = vld [vmem:[%s396 + $0x10] sm:$0xff]
                %401 = vst [vmem:[%s397 + $0x8] sm:$0xff] %v400
                %v402 = vld [vmem:[%s396 + $0x20] sm:$0xff]
                %403 = vst [vmem:[%s397 + $0x10] sm:$0xff] %v402
                %v404 = vld [vmem:[%s396 + $0x30] sm:$0xff]
                %405 = vst [vmem:[%s397 + $0x18] sm:$0xff] %v404
                %v406 = vld [vmem:[%s396 + $0x40] sm:$0xff]
                %407 = vst [vmem:[%s397 + $0x20] sm:$0xff] %v406
                %v408 = vld [vmem:[%s396 + $0x50] sm:$0xff]
                %409 = vst [vmem:[%s397 + $0x28] sm:$0xff] %v408
                %v410 = vld [vmem:[%s396 + $0x60] sm:$0xff]
                %411 = vst [vmem:[%s397 + $0x30] sm:$0xff] %v410
                %v412 = vld [vmem:[%s396 + $0x70] sm:$0xff]
                %413 = vst [vmem:[%s397 + $0x38] sm:$0xff] %v412
                %v414 = vld [vmem:[%s396 + $0x80] sm:$0xff]
                %415 = vst [vmem:[%s397 + $0x40] sm:$0xff] %v414
                %v416 = vld [vmem:[%s396 + $0x90] sm:$0xff]
                %417 = vst [vmem:[%s397 + $0x48] sm:$0xff] %v416
                %v418 = vld [vmem:[%s396 + $0xa0] sm:$0xff]
                %419 = vst [vmem:[%s397 + $0x50] sm:$0xff] %v418
                %v420 = vld [vmem:[%s396 + $0xb0] sm:$0xff]
                %421 = vst [vmem:[%s397 + $0x58] sm:$0xff] %v420
                %v422 = vld [vmem:[%s396 + $0xc0] sm:$0xff]
                %423 = vst [vmem:[%s397 + $0x60] sm:$0xff] %v422
                %v424 = vld [vmem:[%s396 + $0xd0] sm:$0xff]
                %425 = vst [vmem:[%s397 + $0x68] sm:$0xff] %v424
                %v426 = vld [vmem:[%s396 + $0xe0] sm:$0xff]
                %427 = vst [vmem:[%s397 + $0x70] sm:$0xff] %v426
                %v428 = vld [vmem:[%s396 + $0xf0] sm:$0xff]
                %429 = vst [vmem:[%s397 + $0x78] sm:$0xff] %v428
              $region77: #{net_forward.1} parent=71 // loop_footer
                %s395 = sadd.s32 1, %s391
              $region78: #{net_forward.1} parent=71 // loop_footer_branch
                %390 = sbr.rel target = $region74
              $region79: #{net_forward.1} parent=71 // loop_exit
                _
            $region72: #{net_forward.1} parent=63 // pred_fallthru
              _
          $region64: #{net_forward.1} parent=59 // pred_fallthru
            _
          %474 = vnop
        $region60: #{net_forward.1} parent=55 // pred_fallthru
          _
      $region56: #{net_forward.1} parent=5 // pred_fallthru
        _
      %p475 = scmp.le.s32.totalorder 1, %s23
      %p476 = scmp.lt.s32.totalorder %s23, 3
      %p477 = pnand %p475, %p476
      %p478 = pneg %p477
      // Predicated region
      $region95: #{net_forward.1} parent=5 // pred_check
        _
      $region96: #{net_forward.1} parent=5 // pred_check_branch
        %480 = sbr.rel (%p477) target = $region98
      $region97: #{net_forward.1} parent=5 // pred_region
        %s481 = ssub.s32 %s23, 1
        %s482 = sand.u32 %s36, 1
        %s483 = sand.u32 %s36, 1
        %s484 = smul.addr %s483, 128
        %s485 = scalar_lea.vmem [#allocation5], %s484
        // Predicated region
        $region99: #{net_forward.1} parent=97 // pred_check
          %p486 = pneg %p49
        $region100: #{net_forward.1} parent=97 // pred_check_branch
          %488 = sbr.rel (%p486) target = $region102
        $region101: #{net_forward.1} parent=97 // pred_region
          _
        $region102: #{net_forward.1} parent=97 // pred_fallthru
          _
        // Predicated region
        $region103: #{net_forward.1} parent=97 // pred_check
          %p489 = pneg %p70
        $region104: #{net_forward.1} parent=97 // pred_check_branch
          %491 = sbr.rel (%p489) target = $region106
        $region105: #{net_forward.1} parent=97 // pred_region
          %492 = dma.done [#allocation7], 768
        $region106: #{net_forward.1} parent=97 // pred_fallthru
          _
        // Predicated region
        $region107: #{net_forward.1} parent=97 // pred_check
          %p493 = pneg %p112
        $region108: #{net_forward.1} parent=97 // pred_check_branch
          %495 = sbr.rel (%p493) target = $region110
        $region109: #{net_forward.1} parent=97 // pred_region
          %496 = dma.done [#allocation10], 6144
        $region110: #{net_forward.1} parent=97 // pred_fallthru
          _
        // Predicated region
        $region111: #{net_forward.1} parent=97 // pred_check
          %p497 = pneg %p154
        $region112: #{net_forward.1} parent=97 // pred_check_branch
          %499 = sbr.rel (%p497) target = $region114
        $region113: #{net_forward.1} parent=97 // pred_region
          %500 = dma.done [#allocation10], 16384
        $region114: #{net_forward.1} parent=97 // pred_fallthru
          _
        // Predicated region
        $region115: #{net_forward.1} parent=97 // pred_check
          %p501 = pneg %p238
        $region116: #{net_forward.1} parent=97 // pred_check_branch
          %503 = sbr.rel (%p501) target = $region118
        $region117: #{net_forward.1} parent=97 // pred_region
          %504 = dma.done [#allocation13], 2048
        $region118: #{net_forward.1} parent=97 // pred_fallthru
          _
        %s505 = sand.u32 %s36, 1
        %s506 = sand.u32 %s36, 1
        %s507 = smul.addr %s506, 128
        %s508 = scalar_lea.vmem [#allocation5], %s507
        %p509 = pneg %p49
        %p510 = pneg %p46
        %p511 = pneg %p70
        %p512 = pneg %p67
        %p513 = pneg %p91
        %p514 = pneg %p88
        %p515 = pneg %p112
        %p516 = pneg %p109
        %p517 = pneg %p133
        %p518 = pneg %p130
        %p519 = pneg %p154
        %p520 = pneg %p151
        %p521 = pneg %p175
        %p522 = pneg %p172
        %p523 = pneg %p196
        %p524 = pneg %p193
        %p525 = pneg %p217
        %p526 = pneg %p214
        %p527 = pneg %p238
        %p528 = pneg %p235
        %p529 = pneg %p259
        %p530 = pneg %p256
        %p531 = pneg %p285
        %p532 = pneg %p282
        %s533 = sand.u32 %s272, 1
        %s534 = scalar_lea.sflag [#allocation8], %s533
        %s535 = sand.u32 %s272, 1
        %s536 = smul.addr %s535, 8
        %s537 = scalar_lea.vmem [#allocation14], %s536
        %vm539 = vcmask 125952
        %540 = vst.msk [vmem:[#allocation2] sm:$0xf] %vm539, 0
        %s541 = scalar_lea.vmem [#allocation2], 68
        %542 = vst.msk [vmem:[%s541] sm:$0xf] %vm539, 0
        %v543 = vld [vmem:[%s485] sm:$0xff]
        %v544 = vld [vmem:[%s485 + $0x8] sm:$0xff]
        %v545 = vld [vmem:[%s485 + $0x10] sm:$0xff]
        %v546 = vld [vmem:[%s485 + $0x18] sm:$0xff]
        %v547 = vld [vmem:[%s485 + $0x20] sm:$0xff]
        %v548 = vld [vmem:[%s485 + $0x28] sm:$0xff]
        %v549 = vld [vmem:[%s485 + $0x30] sm:$0xff]
        %v550 = vld [vmem:[%s485 + $0x38] sm:$0xff]
        %v551 = vld [vmem:[%s485 + $0x40] sm:$0xff]
        %v552 = vld [vmem:[%s485 + $0x48] sm:$0xff]
        %v553 = vld [vmem:[%s485 + $0x50] sm:$0xff]
        %v554 = vld [vmem:[%s485 + $0x58] sm:$0xff]
        %v555 = vld [vmem:[%s485 + $0x60] sm:$0xff]
        %v556 = vld [vmem:[%s485 + $0x68] sm:$0xff]
        %v557 = vld [vmem:[%s485 + $0x70] sm:$0xff]
        %v558 = vld [vmem:[%s485 + $0x78] sm:$0xff]
        %v559 = vpack.c.bf16 %v543, %v543
        %v560 = vpack.c.bf16 %v544, %v544
        %v561 = vpack.c.bf16 %v545, %v545
        %v562 = vpack.c.bf16 %v546, %v546
        %v563 = vpack.c.bf16 %v547, %v547
        %v564 = vpack.c.bf16 %v548, %v548
        %v565 = vpack.c.bf16 %v549, %v549
        %v566 = vpack.c.bf16 %v550, %v550
        %v567 = vpack.c.bf16 %v551, %v551
        %v568 = vpack.c.bf16 %v552, %v552
        %v569 = vpack.c.bf16 %v553, %v553
        %v570 = vpack.c.bf16 %v554, %v554
        %v571 = vpack.c.bf16 %v555, %v555
        %v572 = vpack.c.bf16 %v556, %v556
        %v573 = vpack.c.bf16 %v557, %v557
        %v574 = vpack.c.bf16 %v558, %v558
        %s575 = scalar_lea.vmem [#allocation2], 4
        %576 = vst.msk [vmem:[%s575] sm:$0xf] %vm539, %v559
        %577 = vst.msk [vmem:[%s575 + $0x4] sm:$0xf] %vm539, %v560
        %578 = vst.msk [vmem:[%s575 + $0x8] sm:$0xf] %vm539, %v561
        %579 = vst.msk [vmem:[%s575 + $0xc] sm:$0xf] %vm539, %v562
        %580 = vst.msk [vmem:[%s575 + $0x10] sm:$0xf] %vm539, %v563
        %581 = vst.msk [vmem:[%s575 + $0x14] sm:$0xf] %vm539, %v564
        %582 = vst.msk [vmem:[%s575 + $0x18] sm:$0xf] %vm539, %v565
        %583 = vst.msk [vmem:[%s575 + $0x1c] sm:$0xf] %vm539, %v566
        %584 = vst.msk [vmem:[%s575 + $0x20] sm:$0xf] %vm539, %v567
        %585 = vst.msk [vmem:[%s575 + $0x24] sm:$0xf] %vm539, %v568
        %586 = vst.msk [vmem:[%s575 + $0x28] sm:$0xf] %vm539, %v569
        %587 = vst.msk [vmem:[%s575 + $0x2c] sm:$0xf] %vm539, %v570
        %588 = vst.msk [vmem:[%s575 + $0x30] sm:$0xf] %vm539, %v571
        %589 = vst.msk [vmem:[%s575 + $0x34] sm:$0xf] %vm539, %v572
        %590 = vst.msk [vmem:[%s575 + $0x38] sm:$0xf] %vm539, %v573
        %591 = vst.msk [vmem:[%s575 + $0x3c] sm:$0xf] %vm539, %v574
        %v592 = vld [vmem:[#allocation2] sm:$0xf]
        %v593 = vld [vmem:[#allocation2 + $0x4] sm:$0xf]
        %v594 = vld [vmem:[#allocation2 + $0x8] sm:$0xf]
        %v595 = vld [vmem:[#allocation2 + $0xc] sm:$0xf]
        %v596 = vld [vmem:[#allocation2 + $0x10] sm:$0xf]
        %v597 = vld [vmem:[#allocation2 + $0x14] sm:$0xf]
        %v598 = vld [vmem:[#allocation2 + $0x18] sm:$0xf]
        %v599 = vld [vmem:[#allocation2 + $0x1c] sm:$0xf]
        %v600 = vld [vmem:[#allocation2 + $0x20] sm:$0xf]
        %v601 = vld [vmem:[#allocation2 + $0x24] sm:$0xf]
        %v602 = vld [vmem:[#allocation2 + $0x28] sm:$0xf]
        %v603 = vld [vmem:[#allocation2 + $0x2c] sm:$0xf]
        %v604 = vld [vmem:[#allocation2 + $0x30] sm:$0xf]
        %v605 = vld [vmem:[#allocation2 + $0x34] sm:$0xf]
        %v606 = vld [vmem:[#allocation2 + $0x38] sm:$0xf]
        %v607 = vld [vmem:[#allocation2 + $0x3c] sm:$0xf]
        %v608 = vld [vmem:[#allocation6] sm:$0xff]
        %v609 = vld [vmem:[#allocation6 + $0x8] sm:$0xff]
        %v610 = vld [vmem:[%s575] sm:$0xf]
        %v611 = vld [vmem:[%s575 + $0x4] sm:$0xf]
        %v612 = vld [vmem:[%s575 + $0x8] sm:$0xf]
        %v613 = vld [vmem:[%s575 + $0xc] sm:$0xf]
        %v614 = vld [vmem:[%s575 + $0x10] sm:$0xf]
        %v615 = vld [vmem:[%s575 + $0x14] sm:$0xf]
        %v616 = vld [vmem:[%s575 + $0x18] sm:$0xf]
        %v617 = vld [vmem:[%s575 + $0x1c] sm:$0xf]
        %v618 = vld [vmem:[%s575 + $0x20] sm:$0xf]
        %v619 = vld [vmem:[%s575 + $0x24] sm:$0xf]
        %v620 = vld [vmem:[%s575 + $0x28] sm:$0xf]
        %v621 = vld [vmem:[%s575 + $0x2c] sm:$0xf]
        %v622 = vld [vmem:[%s575 + $0x30] sm:$0xf]
        %v623 = vld [vmem:[%s575 + $0x34] sm:$0xf]
        %v624 = vld [vmem:[%s575 + $0x38] sm:$0xf]
        %v625 = vld [vmem:[%s575 + $0x3c] sm:$0xf]
        %s626 = scalar_lea.vmem [#allocation6], 16
        %v627 = vld [vmem:[%s626] sm:$0xff]
        %v628 = vld [vmem:[%s626 + $0x8] sm:$0xff]
        %v645 = vunpack.c.l.b16 %v610
        %v646 = vunpack.c.l.b16 %v611
        %v647 = vunpack.c.l.b16 %v612
        %v648 = vunpack.c.l.b16 %v613
        %v649 = vunpack.c.l.b16 %v614
        %v650 = vunpack.c.l.b16 %v615
        %v651 = vunpack.c.l.b16 %v616
        %v652 = vunpack.c.l.b16 %v617
        %v653 = vunpack.c.l.b16 %v618
        %v654 = vunpack.c.l.b16 %v619
        %v655 = vunpack.c.l.b16 %v620
        %v656 = vunpack.c.l.b16 %v621
        %v657 = vunpack.c.l.b16 %v622
        %v658 = vunpack.c.l.b16 %v623
        %v659 = vunpack.c.l.b16 %v624
        %v660 = vunpack.c.l.b16 %v625
        %v661 = vpack.c.b16 %v646, %v645
        %v662 = vpack.c.b16 %v648, %v647
        %v663 = vpack.c.b16 %v650, %v649
        %v664 = vpack.c.b16 %v652, %v651
        %v665 = vpack.c.b16 %v654, %v653
        %v666 = vpack.c.b16 %v656, %v655
        %v667 = vpack.c.b16 %v658, %v657
        %v668 = vpack.c.b16 %v660, %v659
        %v671 = vunpack.c.l.b16 %v627
        %v672 = vunpack.c.h.b16 %v627
        %v673 = vunpack.c.l.b16 %v628
        %v674 = vunpack.c.h.b16 %v628
        %v675 = vpack.c.b16 %v673, %v671
        %v676 = vpack.c.b16 %v674, %v672
        %vm679 = vcmask 130048
        %v681 = vsel %vm679, %v661, 0
        %v684 = vsel %vm679, %v662, 0
        %v687 = vsel %vm679, %v663, 0
        %v690 = vsel %vm679, %v664, 0
        %v693 = vsel %vm679, %v665, 0
        %v696 = vsel %vm679, %v666, 0
        %v699 = vsel %vm679, %v667, 0
        %v702 = vsel %vm679, %v668, 0
        %704 = vmatprep.subr.bf16.mxu0 %v676
        %705 = vmatpush1.bf16.msra.mxu0 %v675
        %706 = vmatprep.subr.bf16.mxu0 0
        %707 = vmatpush1.bf16.msra.mxu0 0
        %708 = vmatprep.subr.bf16.mxu0 0
        %709 = vmatpush1.bf16.msra.mxu0 0
        %710 = vmatprep.subr.bf16.mxu0 0
        %711 = vmatpush1.bf16.msra.mxu0 0
        %712 = vmatprep.subr.bf16.mxu0 0
        %713 = vmatpush1.bf16.msra.mxu0 0
        %714 = vmatprep.subr.bf16.mxu0 0
        %715 = vmatpush1.bf16.msra.mxu0 0
        %716 = vmatprep.subr.bf16.mxu0 0
        %717 = vmatpush1.bf16.msra.mxu0 0
        %718 = vmatprep.subr.bf16.mxu0 0
        %719 = vmatpush1.bf16.msra.mxu0 0
        %720 = vmatprep.subr.bf16.mxu0 0
        %721 = vmatpush1.bf16.msra.mxu0 0
        %722 = vmatprep.subr.bf16.mxu0 0
        %723 = vmatpush1.bf16.msra.mxu0 0
        %724 = vmatprep.subr.bf16.mxu0 0
        %725 = vmatpush1.bf16.msra.mxu0 0
        %726 = vmatprep.subr.bf16.mxu0 0
        %727 = vmatpush1.bf16.msra.mxu0 0
        %728 = vmatprep.subr.bf16.mxu0 0
        %729 = vmatpush1.bf16.msra.mxu0 0
        %730 = vmatprep.subr.bf16.mxu0 0
        %731 = vmatpush1.bf16.msra.mxu0 0
        %732 = vmatprep.subr.bf16.mxu0 0
        %733 = vmatpush1.bf16.msra.mxu0 0
        %734 = vmatprep.subr.bf16.mxu0 0
        %735 = vmatpush1.bf16.msra.mxu0 0
        %736 = vmatprep.mubr.bf16.mxu0 0
        %737 = vmatmul.mubr.bf16.gmra.mrb[0].mxu0 %v681
        %v738 = vpop.f32.mrb[0].mxu0
        %v739 = vadd.f32 0.0, %v738
        %v740 = vpop.f32.mrb[0].mxu0
        %v741 = vadd.f32 0.0, %v740
        %v742 = vpop.f32.mrb[0].mxu0
        %v743 = vadd.f32 0.0, %v742
        %v744 = vpop.f32.mrb[0].mxu0
        %v745 = vadd.f32 0.0, %v744
        %746 = vmatprep.mubr.bf16.mxu0 0
        %747 = vmatmul.mubr.bf16.gmra.mrb[0].mxu0 %v684
        %v748 = vpop.f32.mrb[0].mxu0
        %v749 = vadd.f32 0.0, %v748
        %v750 = vpop.f32.mrb[0].mxu0
        %v751 = vadd.f32 0.0, %v750
        %v752 = vpop.f32.mrb[0].mxu0
        %v753 = vadd.f32 0.0, %v752
        %v754 = vpop.f32.mrb[0].mxu0
        %v755 = vadd.f32 0.0, %v754
        %756 = vmatprep.mubr.bf16.mxu0 0
        %757 = vmatmul.mubr.bf16.gmra.mrb[0].mxu0 %v687
        %v758 = vpop.f32.mrb[0].mxu0
        %v759 = vadd.f32 0.0, %v758
        %v760 = vpop.f32.mrb[0].mxu0
        %v761 = vadd.f32 0.0, %v760
        %v762 = vpop.f32.mrb[0].mxu0
        %v763 = vadd.f32 0.0, %v762
        %v764 = vpop.f32.mrb[0].mxu0
        %v765 = vadd.f32 0.0, %v764
        %766 = vmatprep.mubr.bf16.mxu0 0
        %767 = vmatmul.mubr.bf16.gmra.mrb[0].mxu0 %v690
        %v768 = vpop.f32.mrb[0].mxu0
        %v769 = vadd.f32 0.0, %v768
        %v770 = vpop.f32.mrb[0].mxu0
        %v771 = vadd.f32 0.0, %v770
        %v772 = vpop.f32.mrb[0].mxu0
        %v773 = vadd.f32 0.0, %v772
        %v774 = vpop.f32.mrb[0].mxu0
        %v775 = vadd.f32 0.0, %v774
        %776 = vmatprep.mubr.bf16.mxu0 0
        %777 = vmatmul.mubr.bf16.gmra.mrb[0].mxu0 %v693
        %v778 = vpop.f32.mrb[0].mxu0
        %v779 = vadd.f32 0.0, %v778
        %v780 = vpop.f32.mrb[0].mxu0
        %v781 = vadd.f32 0.0, %v780
        %v782 = vpop.f32.mrb[0].mxu0
        %v783 = vadd.f32 0.0, %v782
        %v784 = vpop.f32.mrb[0].mxu0
        %v785 = vadd.f32 0.0, %v784
        %786 = vmatprep.mubr.bf16.mxu0 0
        %787 = vmatmul.mubr.bf16.gmra.mrb[0].mxu0 %v696
        %v788 = vpop.f32.mrb[0].mxu0
        %v789 = vadd.f32 0.0, %v788
        %v790 = vpop.f32.mrb[0].mxu0
        %v791 = vadd.f32 0.0, %v790
        %v792 = vpop.f32.mrb[0].mxu0
        %v793 = vadd.f32 0.0, %v792
        %v794 = vpop.f32.mrb[0].mxu0
        %v795 = vadd.f32 0.0, %v794
        %796 = vmatprep.mubr.bf16.mxu0 0
        %797 = vmatmul.mubr.bf16.gmra.mrb[0].mxu0 %v699
        %v798 = vpop.f32.mrb[0].mxu0
        %v799 = vadd.f32 0.0, %v798
        %v800 = vpop.f32.mrb[0].mxu0
        %v801 = vadd.f32 0.0, %v800
        %v802 = vpop.f32.mrb[0].mxu0
        %v803 = vadd.f32 0.0, %v802
        %v804 = vpop.f32.mrb[0].mxu0
        %v805 = vadd.f32 0.0, %v804
        %806 = vmatprep.mubr.bf16.mxu0 0
        %807 = vmatmul.mubr.bf16.gmra.mrb[0].mxu0 %v702
        %v808 = vpop.f32.mrb[0].mxu0
        %v809 = vadd.f32 0.0, %v808
        %v810 = vpop.f32.mrb[0].mxu0
        %v811 = vadd.f32 0.0, %v810
        %v812 = vpop.f32.mrb[0].mxu0
        %v813 = vadd.f32 0.0, %v812
        %v814 = vpop.f32.mrb[0].mxu0
        %v815 = vadd.f32 0.0, %v814
        %816 = vdwg.mxu0
        %v833 = vunpack.c.l.b16 %v592
        %v834 = vunpack.c.l.b16 %v593
        %v835 = vunpack.c.l.b16 %v594
        %v836 = vunpack.c.l.b16 %v595
        %v837 = vunpack.c.l.b16 %v596
        %v838 = vunpack.c.l.b16 %v597
        %v839 = vunpack.c.l.b16 %v598
        %v840 = vunpack.c.l.b16 %v599
        %v841 = vunpack.c.l.b16 %v600
        %v842 = vunpack.c.l.b16 %v601
        %v843 = vunpack.c.l.b16 %v602
        %v844 = vunpack.c.l.b16 %v603
        %v845 = vunpack.c.l.b16 %v604
        %v846 = vunpack.c.l.b16 %v605
        %v847 = vunpack.c.l.b16 %v606
        %v848 = vunpack.c.l.b16 %v607
        %v849 = vpack.c.b16 %v834, %v833
        %v850 = vpack.c.b16 %v836, %v835
        %v851 = vpack.c.b16 %v838, %v837
        %v852 = vpack.c.b16 %v840, %v839
        %v853 = vpack.c.b16 %v842, %v841
        %v854 = vpack.c.b16 %v844, %v843
        %v855 = vpack.c.b16 %v846, %v845
        %v856 = vpack.c.b16 %v848, %v847
        %v859 = vunpack.c.l.b16 %v608
        %v860 = vunpack.c.h.b16 %v608
        %v861 = vunpack.c.l.b16 %v609
        %v862 = vunpack.c.h.b16 %v609
        %v863 = vpack.c.b16 %v861, %v859
        %v864 = vpack.c.b16 %v862, %v860
        %v868 = vsel %vm679, %v849, 0
        %v871 = vsel %vm679, %v850, 0
        %v874 = vsel %vm679, %v851, 0
        %v877 = vsel %vm679, %v852, 0
        %v880 = vsel %vm679, %v853, 0
        %v883 = vsel %vm679, %v854, 0
        %v886 = vsel %vm679, %v855, 0
        %v889 = vsel %vm679, %v856, 0
        %891 = vmatprep.subr.bf16.mxu0 %v864
        %892 = vmatpush1.bf16.msra.mxu0 %v863
        %893 = vmatprep.subr.bf16.mxu0 0
        %894 = vmatpush1.bf16.msra.mxu0 0
        %895 = vmatprep.subr.bf16.mxu0 0
        %896 = vmatpush1.bf16.msra.mxu0 0
        %897 = vmatprep.subr.bf16.mxu0 0
        %898 = vmatpush1.bf16.msra.mxu0 0
        %899 = vmatprep.subr.bf16.mxu0 0
        %900 = vmatpush1.bf16.msra.mxu0 0
        %901 = vmatprep.subr.bf16.mxu0 0
        %902 = vmatpush1.bf16.msra.mxu0 0
        %903 = vmatprep.subr.bf16.mxu0 0
        %904 = vmatpush1.bf16.msra.mxu0 0
        %905 = vmatprep.subr.bf16.mxu0 0
        %906 = vmatpush1.bf16.msra.mxu0 0
        %907 = vmatprep.subr.bf16.mxu0 0
        %908 = vmatpush1.bf16.msra.mxu0 0
        %909 = vmatprep.subr.bf16.mxu0 0
        %910 = vmatpush1.bf16.msra.mxu0 0
        %911 = vmatprep.subr.bf16.mxu0 0
        %912 = vmatpush1.bf16.msra.mxu0 0
        %913 = vmatprep.subr.bf16.mxu0 0
        %914 = vmatpush1.bf16.msra.mxu0 0
        %915 = vmatprep.subr.bf16.mxu0 0
        %916 = vmatpush1.bf16.msra.mxu0 0
        %917 = vmatprep.subr.bf16.mxu0 0
        %918 = vmatpush1.bf16.msra.mxu0 0
        %919 = vmatprep.subr.bf16.mxu0 0
        %920 = vmatpush1.bf16.msra.mxu0 0
        %921 = vmatprep.subr.bf16.mxu0 0
        %922 = vmatpush1.bf16.msra.mxu0 0
        %923 = vmatprep.mubr.bf16.mxu0 0
        %924 = vmatmul.mubr.bf16.gmra.mrb[0].mxu0 %v868
        %v925 = vpop.f32.mrb[0].mxu0
        %v926 = vadd.f32 %v739, %v925
        %v927 = vpop.f32.mrb[0].mxu0
        %v928 = vadd.f32 %v741, %v927
        %v929 = vpop.f32.mrb[0].mxu0
        %v930 = vadd.f32 %v743, %v929
        %v931 = vpop.f32.mrb[0].mxu0
        %v932 = vadd.f32 %v745, %v931
        %933 = vmatprep.mubr.bf16.mxu0 0
        %934 = vmatmul.mubr.bf16.gmra.mrb[0].mxu0 %v871
        %v935 = vpop.f32.mrb[0].mxu0
        %v936 = vadd.f32 %v749, %v935
        %v937 = vpop.f32.mrb[0].mxu0
        %v938 = vadd.f32 %v751, %v937
        %v939 = vpop.f32.mrb[0].mxu0
        %v940 = vadd.f32 %v753, %v939
        %v941 = vpop.f32.mrb[0].mxu0
        %v942 = vadd.f32 %v755, %v941
        %943 = vmatprep.mubr.bf16.mxu0 0
        %944 = vmatmul.mubr.bf16.gmra.mrb[0].mxu0 %v874
        %v945 = vpop.f32.mrb[0].mxu0
        %v946 = vadd.f32 %v759, %v945
        %v947 = vpop.f32.mrb[0].mxu0
        %v948 = vadd.f32 %v761, %v947
        %v949 = vpop.f32.mrb[0].mxu0
        %v950 = vadd.f32 %v763, %v949
        %v951 = vpop.f32.mrb[0].mxu0
        %v952 = vadd.f32 %v765, %v951
        %953 = vmatprep.mubr.bf16.mxu0 0
        %954 = vmatmul.mubr.bf16.gmra.mrb[0].mxu0 %v877
        %v955 = vpop.f32.mrb[0].mxu0
        %v956 = vadd.f32 %v769, %v955
        %v957 = vpop.f32.mrb[0].mxu0
        %v958 = vadd.f32 %v771, %v957
        %v959 = vpop.f32.mrb[0].mxu0
        %v960 = vadd.f32 %v773, %v959
        %v961 = vpop.f32.mrb[0].mxu0
        %v962 = vadd.f32 %v775, %v961
        %963 = vmatprep.mubr.bf16.mxu0 0
        %964 = vmatmul.mubr.bf16.gmra.mrb[0].mxu0 %v880
        %v965 = vpop.f32.mrb[0].mxu0
        %v966 = vadd.f32 %v779, %v965
        %v967 = vpop.f32.mrb[0].mxu0
        %v968 = vadd.f32 %v781, %v967
        %v969 = vpop.f32.mrb[0].mxu0
        %v970 = vadd.f32 %v783, %v969
        %v971 = vpop.f32.mrb[0].mxu0
        %v972 = vadd.f32 %v785, %v971
        %973 = vmatprep.mubr.bf16.mxu0 0
        %974 = vmatmul.mubr.bf16.gmra.mrb[0].mxu0 %v883
        %v975 = vpop.f32.mrb[0].mxu0
        %v976 = vadd.f32 %v789, %v975
        %v977 = vpop.f32.mrb[0].mxu0
        %v978 = vadd.f32 %v791, %v977
        %v979 = vpop.f32.mrb[0].mxu0
        %v980 = vadd.f32 %v793, %v979
        %v981 = vpop.f32.mrb[0].mxu0
        %v982 = vadd.f32 %v795, %v981
        %983 = vmatprep.mubr.bf16.mxu0 0
        %984 = vmatmul.mubr.bf16.gmra.mrb[0].mxu0 %v886
        %v985 = vpop.f32.mrb[0].mxu0
        %v986 = vadd.f32 %v799, %v985
        %v987 = vpop.f32.mrb[0].mxu0
        %v988 = vadd.f32 %v801, %v987
        %v989 = vpop.f32.mrb[0].mxu0
        %v990 = vadd.f32 %v803, %v989
        %v991 = vpop.f32.mrb[0].mxu0
        %v992 = vadd.f32 %v805, %v991
        %993 = vmatprep.mubr.bf16.mxu0 0
        %994 = vmatmul.mubr.bf16.gmra.mrb[0].mxu0 %v889
        %v995 = vpop.f32.mrb[0].mxu0
        %v996 = vadd.f32 %v809, %v995
        %v997 = vpop.f32.mrb[0].mxu0
        %v998 = vadd.f32 %v811, %v997
        %v999 = vpop.f32.mrb[0].mxu0
        %v1000 = vadd.f32 %v813, %v999
        %v1001 = vpop.f32.mrb[0].mxu0
        %v1002 = vadd.f32 %v815, %v1001
        %1003 = vdwg.mxu0
        %s1004 = scalar_lea.vmem [#allocation2], 8
        %v1005 = vld [vmem:[%s1004] sm:$0xf]
        %v1006 = vld [vmem:[%s1004 + $0x4] sm:$0xf]
        %v1007 = vld [vmem:[%s1004 + $0x8] sm:$0xf]
        %v1008 = vld [vmem:[%s1004 + $0xc] sm:$0xf]
        %v1009 = vld [vmem:[%s1004 + $0x10] sm:$0xf]
        %v1010 = vld [vmem:[%s1004 + $0x14] sm:$0xf]
        %v1011 = vld [vmem:[%s1004 + $0x18] sm:$0xf]
        %v1012 = vld [vmem:[%s1004 + $0x1c] sm:$0xf]
        %v1013 = vld [vmem:[%s1004 + $0x20] sm:$0xf]
        %v1014 = vld [vmem:[%s1004 + $0x24] sm:$0xf]
        %v1015 = vld [vmem:[%s1004 + $0x28] sm:$0xf]
        %v1016 = vld [vmem:[%s1004 + $0x2c] sm:$0xf]
        %v1017 = vld [vmem:[%s1004 + $0x30] sm:$0xf]
        %v1018 = vld [vmem:[%s1004 + $0x34] sm:$0xf]
        %v1019 = vld [vmem:[%s1004 + $0x38] sm:$0xf]
        %v1020 = vld [vmem:[%s1004 + $0x3c] sm:$0xf]
        %s1021 = scalar_lea.vmem [#allocation6], 32
        %v1022 = vld [vmem:[%s1021] sm:$0xff]
        %v1023 = vld [vmem:[%s1021 + $0x8] sm:$0xff]
        %v1040 = vunpack.c.l.b16 %v1005
        %v1041 = vunpack.c.l.b16 %v1006
        %v1042 = vunpack.c.l.b16 %v1007
        %v1043 = vunpack.c.l.b16 %v1008
        %v1044 = vunpack.c.l.b16 %v1009
        %v1045 = vunpack.c.l.b16 %v1010
        %v1046 = vunpack.c.l.b16 %v1011
        %v1047 = vunpack.c.l.b16 %v1012
        %v1048 = vunpack.c.l.b16 %v1013
        %v1049 = vunpack.c.l.b16 %v1014
        %v1050 = vunpack.c.l.b16 %v1015
        %v1051 = vunpack.c.l.b16 %v1016
        %v1052 = vunpack.c.l.b16 %v1017
        %v1053 = vunpack.c.l.b16 %v1018
        %v1054 = vunpack.c.l.b16 %v1019
        %v1055 = vunpack.c.l.b16 %v1020
        %v1056 = vpack.c.b16 %v1041, %v1040
        %v1057 = vpack.c.b16 %v1043, %v1042
        %v1058 = vpack.c.b16 %v1045, %v1044
        %v1059 = vpack.c.b16 %v1047, %v1046
        %v1060 = vpack.c.b16 %v1049, %v1048
        %v1061 = vpack.c.b16 %v1051, %v1050
        %v1062 = vpack.c.b16 %v1053, %v1052
        %v1063 = vpack.c.b16 %v1055, %v1054
        %v1066 = vunpack.c.l.b16 %v1022
        %v1067 = vunpack.c.h.b16 %v1022
        %v1068 = vunpack.c.l.b16 %v1023
        %v1069 = vunpack.c.h.b16 %v1023
        %v1070 = vpack.c.b16 %v1068, %v1066
        %v1071 = vpack.c.b16 %v1069, %v1067
        %v1075 = vsel %vm679, %v1056, 0
        %v1078 = vsel %vm679, %v1057, 0
        %v1081 = vsel %vm679, %v1058, 0
        %v1084 = vsel %vm679, %v1059, 0
        %v1087 = vsel %vm679, %v1060, 0
        %v1090 = vsel %vm679, %v1061, 0
        %v1093 = vsel %vm679, %v1062, 0
        %v1096 = vsel %vm679, %v1063, 0
        %1098 = vmatprep.subr.bf16.mxu0 %v1071
        %1099 = vmatpush1.bf16.msra.mxu0 %v1070
        %1100 = vmatprep.subr.bf16.mxu0 0
        %1101 = vmatpush1.bf16.msra.mxu0 0
        %1102 = vmatprep.subr.bf16.mxu0 0
        %1103 = vmatpush1.bf16.msra.mxu0 0
        %1104 = vmatprep.subr.bf16.mxu0 0
        %1105 = vmatpush1.bf16.msra.mxu0 0
        %1106 = vmatprep.subr.bf16.mxu0 0
        %1107 = vmatpush1.bf16.msra.mxu0 0
        %1108 = vmatprep.subr.bf16.mxu0 0
        %1109 = vmatpush1.bf16.msra.mxu0 0
        %1110 = vmatprep.subr.bf16.mxu0 0
        %1111 = vmatpush1.bf16.msra.mxu0 0
        %1112 = vmatprep.subr.bf16.mxu0 0
        %1113 = vmatpush1.bf16.msra.mxu0 0
        %1114 = vmatprep.subr.bf16.mxu0 0
        %1115 = vmatpush1.bf16.msra.mxu0 0
        %1116 = vmatprep.subr.bf16.mxu0 0
        %1117 = vmatpush1.bf16.msra.mxu0 0
        %1118 = vmatprep.subr.bf16.mxu0 0
        %1119 = vmatpush1.bf16.msra.mxu0 0
        %1120 = vmatprep.subr.bf16.mxu0 0
        %1121 = vmatpush1.bf16.msra.mxu0 0
        %1122 = vmatprep.subr.bf16.mxu0 0
        %1123 = vmatpush1.bf16.msra.mxu0 0
        %1124 = vmatprep.subr.bf16.mxu0 0
        %1125 = vmatpush1.bf16.msra.mxu0 0
        %1126 = vmatprep.subr.bf16.mxu0 0
        %1127 = vmatpush1.bf16.msra.mxu0 0
        %1128 = vmatprep.subr.bf16.mxu0 0
        %1129 = vmatpush1.bf16.msra.mxu0 0
        %1130 = vmatprep.mubr.bf16.mxu0 0
        %1131 = vmatmul.mubr.bf16.gmra.mrb[0].mxu0 %v1075
        %v1132 = vpop.f32.mrb[0].mxu0
        %v1133 = vadd.f32 0.0, %v1132
        %v1134 = vpop.f32.mrb[0].mxu0
        %v1135 = vadd.f32 0.0, %v1134
        %v1136 = vpop.f32.mrb[0].mxu0
        %v1137 = vadd.f32 0.0, %v1136
        %v1138 = vpop.f32.mrb[0].mxu0
        %v1139 = vadd.f32 0.0, %v1138
        %1140 = vmatprep.mubr.bf16.mxu0 0
        %1141 = vmatmul.mubr.bf16.gmra.mrb[0].mxu0 %v1078
        %v1142 = vpop.f32.mrb[0].mxu0
        %v1143 = vadd.f32 0.0, %v1142
        %v1144 = vpop.f32.mrb[0].mxu0
        %v1145 = vadd.f32 0.0, %v1144
        %v1146 = vpop.f32.mrb[0].mxu0
        %v1147 = vadd.f32 0.0, %v1146
        %v1148 = vpop.f32.mrb[0].mxu0
        %v1149 = vadd.f32 0.0, %v1148
        %1150 = vmatprep.mubr.bf16.mxu0 0
        %1151 = vmatmul.mubr.bf16.gmra.mrb[0].mxu0 %v1081
        %v1152 = vpop.f32.mrb[0].mxu0
        %v1153 = vadd.f32 0.0, %v1152
        %v1154 = vpop.f32.mrb[0].mxu0
        %v1155 = vadd.f32 0.0, %v1154
        %v1156 = vpop.f32.mrb[0].mxu0
        %v1157 = vadd.f32 0.0, %v1156
        %v1158 = vpop.f32.mrb[0].mxu0
        %v1159 = vadd.f32 0.0, %v1158
        %1160 = vmatprep.mubr.bf16.mxu0 0
        %1161 = vmatmul.mubr.bf16.gmra.mrb[0].mxu0 %v1084
        %v1162 = vpop.f32.mrb[0].mxu0
        %v1163 = vadd.f32 0.0, %v1162
        %v1164 = vpop.f32.mrb[0].mxu0
        %v1165 = vadd.f32 0.0, %v1164
        %v1166 = vpop.f32.mrb[0].mxu0
        %v1167 = vadd.f32 0.0, %v1166
        %v1168 = vpop.f32.mrb[0].mxu0
        %v1169 = vadd.f32 0.0, %v1168
        %1170 = vmatprep.mubr.bf16.mxu0 0
        %1171 = vmatmul.mubr.bf16.gmra.mrb[0].mxu0 %v1087
        %v1172 = vpop.f32.mrb[0].mxu0
        %v1173 = vadd.f32 0.0, %v1172
        %v1174 = vpop.f32.mrb[0].mxu0
        %v1175 = vadd.f32 0.0, %v1174
        %v1176 = vpop.f32.mrb[0].mxu0
        %v1177 = vadd.f32 0.0, %v1176
        %v1178 = vpop.f32.mrb[0].mxu0
        %v1179 = vadd.f32 0.0, %v1178
        %1180 = vmatprep.mubr.bf16.mxu0 0
        %1181 = vmatmul.mubr.bf16.gmra.mrb[0].mxu0 %v1090
        %v1182 = vpop.f32.mrb[0].mxu0
        %v1183 = vadd.f32 0.0, %v1182
        %v1184 = vpop.f32.mrb[0].mxu0
        %v1185 = vadd.f32 0.0, %v1184
        %v1186 = vpop.f32.mrb[0].mxu0
        %v1187 = vadd.f32 0.0, %v1186
        %v1188 = vpop.f32.mrb[0].mxu0
        %v1189 = vadd.f32 0.0, %v1188
        %1190 = vmatprep.mubr.bf16.mxu0 0
        %1191 = vmatmul.mubr.bf16.gmra.mrb[0].mxu0 %v1093
        %v1192 = vpop.f32.mrb[0].mxu0
        %v1193 = vadd.f32 0.0, %v1192
        %v1194 = vpop.f32.mrb[0].mxu0
        %v1195 = vadd.f32 0.0, %v1194
        %v1196 = vpop.f32.mrb[0].mxu0
        %v1197 = vadd.f32 0.0, %v1196
        %v1198 = vpop.f32.mrb[0].mxu0
        %v1199 = vadd.f32 0.0, %v1198
        %1200 = vmatprep.mubr.bf16.mxu0 0
        %1201 = vmatmul.mubr.bf16.gmra.mrb[0].mxu0 %v1096
        %v1202 = vpop.f32.mrb[0].mxu0
        %v1203 = vadd.f32 0.0, %v1202
        %v1204 = vpop.f32.mrb[0].mxu0
        %v1205 = vadd.f32 0.0, %v1204
        %v1206 = vpop.f32.mrb[0].mxu0
        %v1207 = vadd.f32 0.0, %v1206
        %v1208 = vpop.f32.mrb[0].mxu0
        %v1209 = vadd.f32 0.0, %v1208
        %1210 = vdwg.mxu0
        %v1211 = vadd.f32 %v926, %v1133
        %v1212 = vadd.f32 %v928, %v1135
        %v1213 = vadd.f32 %v930, %v1137
        %v1214 = vadd.f32 %v932, %v1139
        %v1215 = vadd.f32 %v936, %v1143
        %v1216 = vadd.f32 %v938, %v1145
        %v1217 = vadd.f32 %v940, %v1147
        %v1218 = vadd.f32 %v942, %v1149
        %v1219 = vadd.f32 %v946, %v1153
        %v1220 = vadd.f32 %v948, %v1155
        %v1221 = vadd.f32 %v950, %v1157
        %v1222 = vadd.f32 %v952, %v1159
        %v1223 = vadd.f32 %v956, %v1163
        %v1224 = vadd.f32 %v958, %v1165
        %v1225 = vadd.f32 %v960, %v1167
        %v1226 = vadd.f32 %v962, %v1169
        %v1227 = vadd.f32 %v966, %v1173
        %v1228 = vadd.f32 %v968, %v1175
        %v1229 = vadd.f32 %v970, %v1177
        %v1230 = vadd.f32 %v972, %v1179
        %v1231 = vadd.f32 %v976, %v1183
        %v1232 = vadd.f32 %v978, %v1185
        %v1233 = vadd.f32 %v980, %v1187
        %v1234 = vadd.f32 %v982, %v1189
        %v1235 = vadd.f32 %v986, %v1193
        %v1236 = vadd.f32 %v988, %v1195
        %v1237 = vadd.f32 %v990, %v1197
        %v1238 = vadd.f32 %v992, %v1199
        %v1239 = vadd.f32 %v996, %v1203
        %v1240 = vadd.f32 %v998, %v1205
        %v1241 = vadd.f32 %v1000, %v1207
        %v1242 = vadd.f32 %v1002, %v1209
        %v1243 = vld [vmem:[%s2] sm:$0x3]
        %v1245 = vlaneseq
        %v1246 = vshrl.u32 %v1245, 7
        %v1247 = vsub.s32 0, %v1246
        %v1248 = vrot.slane %v1243, %v1247
        %v1249 = vlaneseq
        %v1250 = vshrl.u32 %v1249, 7
        %v1251 = vsub.s32 1, %v1250
        %v1252 = vrot.slane %v1243, %v1251
        %v1255 = vadd.f32 %v1211, %v1248
        %v1256 = vadd.f32 %v1212, %v1252
        %v1257 = vadd.f32 %v1213, %v1248
        %v1258 = vadd.f32 %v1214, %v1252
        %v1259 = vadd.f32 %v1215, %v1248
        %v1260 = vadd.f32 %v1216, %v1252
        %v1261 = vadd.f32 %v1217, %v1248
        %v1262 = vadd.f32 %v1218, %v1252
        %v1263 = vadd.f32 %v1219, %v1248
        %v1264 = vadd.f32 %v1220, %v1252
        %v1265 = vadd.f32 %v1221, %v1248
        %v1266 = vadd.f32 %v1222, %v1252
        %v1267 = vadd.f32 %v1223, %v1248
        %v1268 = vadd.f32 %v1224, %v1252
        %v1269 = vadd.f32 %v1225, %v1248
        %v1270 = vadd.f32 %v1226, %v1252
        %v1271 = vadd.f32 %v1227, %v1248
        %v1272 = vadd.f32 %v1228, %v1252
        %v1273 = vadd.f32 %v1229, %v1248
        %v1274 = vadd.f32 %v1230, %v1252
        %v1275 = vadd.f32 %v1231, %v1248
        %v1276 = vadd.f32 %v1232, %v1252
        %v1277 = vadd.f32 %v1233, %v1248
        %v1278 = vadd.f32 %v1234, %v1252
        %v1279 = vadd.f32 %v1235, %v1248
        %v1280 = vadd.f32 %v1236, %v1252
        %v1281 = vadd.f32 %v1237, %v1248
        %v1282 = vadd.f32 %v1238, %v1252
        %v1283 = vadd.f32 %v1239, %v1248
        %v1284 = vadd.f32 %v1240, %v1252
        %v1285 = vadd.f32 %v1241, %v1248
        %v1286 = vadd.f32 %v1242, %v1252
        %v1287 = vmax.f32 %v1255, 0.0
        %v1288 = vmax.f32 %v1256, 0.0
        %v1289 = vmax.f32 %v1257, 0.0
        %v1290 = vmax.f32 %v1258, 0.0
        %v1291 = vmax.f32 %v1259, 0.0
        %v1292 = vmax.f32 %v1260, 0.0
        %v1293 = vmax.f32 %v1261, 0.0
        %v1294 = vmax.f32 %v1262, 0.0
        %v1295 = vmax.f32 %v1263, 0.0
        %v1296 = vmax.f32 %v1264, 0.0
        %v1297 = vmax.f32 %v1265, 0.0
        %v1298 = vmax.f32 %v1266, 0.0
        %v1299 = vmax.f32 %v1267, 0.0
        %v1300 = vmax.f32 %v1268, 0.0
        %v1301 = vmax.f32 %v1269, 0.0
        %v1302 = vmax.f32 %v1270, 0.0
        %v1303 = vmax.f32 %v1271, 0.0
        %v1304 = vmax.f32 %v1272, 0.0
        %v1305 = vmax.f32 %v1273, 0.0
        %v1306 = vmax.f32 %v1274, 0.0
        %v1307 = vmax.f32 %v1275, 0.0
        %v1308 = vmax.f32 %v1276, 0.0
        %v1309 = vmax.f32 %v1277, 0.0
        %v1310 = vmax.f32 %v1278, 0.0
        %v1311 = vmax.f32 %v1279, 0.0
        %v1312 = vmax.f32 %v1280, 0.0
        %v1313 = vmax.f32 %v1281, 0.0
        %v1314 = vmax.f32 %v1282, 0.0
        %v1315 = vmax.f32 %v1283, 0.0
        %v1316 = vmax.f32 %v1284, 0.0
        %v1317 = vmax.f32 %v1285, 0.0
        %v1318 = vmax.f32 %v1286, 0.0
        %v1319 = vmax.f32 %v1287, %v1289
        %v1320 = vmax.f32 %v1288, %v1290
        %v1321 = vmax.f32 %v1291, %v1293
        %v1322 = vmax.f32 %v1292, %v1294
        %v1323 = vmax.f32 %v1295, %v1297
        %v1324 = vmax.f32 %v1296, %v1298
        %v1325 = vmax.f32 %v1299, %v1301
        %v1326 = vmax.f32 %v1300, %v1302
        %v1327 = vmax.f32 %v1303, %v1305
        %v1328 = vmax.f32 %v1304, %v1306
        %v1329 = vmax.f32 %v1307, %v1309
        %v1330 = vmax.f32 %v1308, %v1310
        %v1331 = vmax.f32 %v1311, %v1313
        %v1332 = vmax.f32 %v1312, %v1314
        %v1333 = vmax.f32 %v1315, %v1317
        %v1334 = vmax.f32 %v1316, %v1318
        %v1335 = vmax.f32 %v1319, %v1320
        %v1336 = vmax.f32 %v1321, %v1322
        %v1337 = vmax.f32 %v1323, %v1324
        %v1338 = vmax.f32 %v1325, %v1326
        %v1339 = vmax.f32 %v1327, %v1328
        %v1340 = vmax.f32 %v1329, %v1330
        %v1341 = vmax.f32 %v1331, %v1332
        %v1342 = vmax.f32 %v1333, %v1334
        %1343 = vst [vmem:[#allocation3] sm:$0xf] 0
        %s1344 = scalar_lea.vmem [#allocation3], 36
        %1345 = vst [vmem:[%s1344] sm:$0xf] 0
        %v1346 = vpack.c.bf16 %v1335, %v1335
        %v1347 = vpack.c.bf16 %v1336, %v1336
        %v1348 = vpack.c.bf16 %v1337, %v1337
        %v1349 = vpack.c.bf16 %v1338, %v1338
        %v1350 = vpack.c.bf16 %v1339, %v1339
        %v1351 = vpack.c.bf16 %v1340, %v1340
        %v1352 = vpack.c.bf16 %v1341, %v1341
        %v1353 = vpack.c.bf16 %v1342, %v1342
        %s1354 = scalar_lea.vmem [#allocation3], 4
        %1355 = vst [vmem:[%s1354] sm:$0xf] %v1346
        %1356 = vst [vmem:[%s1354 + $0x4] sm:$0xf] %v1347
        %1357 = vst [vmem:[%s1354 + $0x8] sm:$0xf] %v1348
        %1358 = vst [vmem:[%s1354 + $0xc] sm:$0xf] %v1349
        %1359 = vst [vmem:[%s1354 + $0x10] sm:$0xf] %v1350
        %1360 = vst [vmem:[%s1354 + $0x14] sm:$0xf] %v1351
        %1361 = vst [vmem:[%s1354 + $0x18] sm:$0xf] %v1352
        %1362 = vst [vmem:[%s1354 + $0x1c] sm:$0xf] %v1353
        %v1363 = vld [vmem:[#allocation3] sm:$0xf]
        %v1364 = vld [vmem:[#allocation3 + $0x4] sm:$0xf]
        %v1365 = vld [vmem:[#allocation3 + $0x8] sm:$0xf]
        %v1366 = vld [vmem:[#allocation3 + $0xc] sm:$0xf]
        %v1367 = vld [vmem:[#allocation3 + $0x10] sm:$0xf]
        %v1368 = vld [vmem:[#allocation3 + $0x14] sm:$0xf]
        %v1369 = vld [vmem:[#allocation3 + $0x18] sm:$0xf]
        %v1370 = vld [vmem:[#allocation3 + $0x1c] sm:$0xf]
        %v1371 = vld [vmem:[#allocation9] sm:$0xff]
        %v1372 = vld [vmem:[#allocation9 + $0x8] sm:$0xff]
        %v1373 = vld [vmem:[#allocation9 + $0x10] sm:$0xff]
        %v1374 = vld [vmem:[#allocation9 + $0x18] sm:$0xff]
        %v1375 = vld [vmem:[#allocation9 + $0x20] sm:$0xff]
        %v1376 = vld [vmem:[#allocation9 + $0x28] sm:$0xff]
        %v1377 = vld [vmem:[#allocation9 + $0x30] sm:$0xff]
        %v1378 = vld [vmem:[#allocation9 + $0x38] sm:$0xff]
        %v1379 = vld [vmem:[#allocation9 + $0x40] sm:$0xff]
        %v1380 = vld [vmem:[#allocation9 + $0x48] sm:$0xff]
        %v1381 = vld [vmem:[#allocation9 + $0x50] sm:$0xff]
        %v1382 = vld [vmem:[#allocation9 + $0x58] sm:$0xff]
        %v1383 = vld [vmem:[#allocation9 + $0x60] sm:$0xff]
        %v1384 = vld [vmem:[#allocation9 + $0x68] sm:$0xff]
        %v1385 = vld [vmem:[#allocation9 + $0x70] sm:$0xff]
        %v1386 = vld [vmem:[#allocation9 + $0x78] sm:$0xff]
        %v1387 = vld [vmem:[%s1354] sm:$0xf]
        %v1388 = vld [vmem:[%s1354 + $0x4] sm:$0xf]
        %v1389 = vld [vmem:[%s1354 + $0x8] sm:$0xf]
        %v1390 = vld [vmem:[%s1354 + $0xc] sm:$0xf]
        %v1391 = vld [vmem:[%s1354 + $0x10] sm:$0xf]
        %v1392 = vld [vmem:[%s1354 + $0x14] sm:$0xf]
        %v1393 = vld [vmem:[%s1354 + $0x18] sm:$0xf]
        %v1394 = vld [vmem:[%s1354 + $0x1c] sm:$0xf]
        %s1395 = scalar_lea.vmem [#allocation9], 128
        %v1396 = vld [vmem:[%s1395] sm:$0xff]
        %v1397 = vld [vmem:[%s1395 + $0x8] sm:$0xff]
        %v1398 = vld [vmem:[%s1395 + $0x10] sm:$0xff]
        %v1399 = vld [vmem:[%s1395 + $0x18] sm:$0xff]
        %v1400 = vld [vmem:[%s1395 + $0x20] sm:$0xff]
        %v1401 = vld [vmem:[%s1395 + $0x28] sm:$0xff]
        %v1402 = vld [vmem:[%s1395 + $0x30] sm:$0xff]
        %v1403 = vld [vmem:[%s1395 + $0x38] sm:$0xff]
        %v1404 = vld [vmem:[%s1395 + $0x40] sm:$0xff]
        %v1405 = vld [vmem:[%s1395 + $0x48] sm:$0xff]
        %v1406 = vld [vmem:[%s1395 + $0x50] sm:$0xff]
        %v1407 = vld [vmem:[%s1395 + $0x58] sm:$0xff]
        %v1408 = vld [vmem:[%s1395 + $0x60] sm:$0xff]
        %v1409 = vld [vmem:[%s1395 + $0x68] sm:$0xff]
        %v1410 = vld [vmem:[%s1395 + $0x70] sm:$0xff]
        %v1411 = vld [vmem:[%s1395 + $0x78] sm:$0xff]
        %v1420 = vunpack.c.l.b16 %v1387
        %v1421 = vunpack.c.l.b16 %v1388
        %v1422 = vunpack.c.l.b16 %v1389
        %v1423 = vunpack.c.l.b16 %v1390
        %v1424 = vunpack.c.l.b16 %v1391
        %v1425 = vunpack.c.l.b16 %v1392
        %v1426 = vunpack.c.l.b16 %v1393
        %v1427 = vunpack.c.l.b16 %v1394
        %v1428 = vpack.c.b16 %v1421, %v1420
        %v1429 = vpack.c.b16 %v1423, %v1422
        %v1430 = vpack.c.b16 %v1425, %v1424
        %v1431 = vpack.c.b16 %v1427, %v1426
        %v1452 = vunpack.c.l.b16 %v1396
        %v1453 = vunpack.c.h.b16 %v1396
        %v1454 = vunpack.c.l.b16 %v1397
        %v1455 = vunpack.c.h.b16 %v1397
        %v1456 = vunpack.c.l.b16 %v1398
        %v1457 = vunpack.c.h.b16 %v1398
        %v1458 = vunpack.c.l.b16 %v1399
        %v1459 = vunpack.c.h.b16 %v1399
        %v1460 = vunpack.c.l.b16 %v1400
        %v1461 = vunpack.c.h.b16 %v1400
        %v1462 = vunpack.c.l.b16 %v1401
        %v1463 = vunpack.c.h.b16 %v1401
        %v1464 = vunpack.c.l.b16 %v1402
        %v1465 = vunpack.c.h.b16 %v1402
        %v1466 = vunpack.c.l.b16 %v1403
        %v1467 = vunpack.c.h.b16 %v1403
        %v1468 = vunpack.c.l.b16 %v1404
        %v1469 = vunpack.c.h.b16 %v1404
        %v1470 = vunpack.c.l.b16 %v1405
        %v1471 = vunpack.c.h.b16 %v1405
        %v1472 = vunpack.c.l.b16 %v1406
        %v1473 = vunpack.c.h.b16 %v1406
        %v1474 = vunpack.c.l.b16 %v1407
        %v1475 = vunpack.c.h.b16 %v1407
        %v1476 = vunpack.c.l.b16 %v1408
        %v1477 = vunpack.c.h.b16 %v1408
        %v1478 = vunpack.c.l.b16 %v1409
        %v1479 = vunpack.c.h.b16 %v1409
        %v1480 = vunpack.c.l.b16 %v1410
        %v1481 = vunpack.c.h.b16 %v1410
        %v1482 = vunpack.c.l.b16 %v1411
        %v1483 = vunpack.c.h.b16 %v1411
        %v1484 = vpack.c.b16 %v1454, %v1452
        %v1485 = vpack.c.b16 %v1455, %v1453
        %v1486 = vpack.c.b16 %v1458, %v1456
        %v1487 = vpack.c.b16 %v1459, %v1457
        %v1488 = vpack.c.b16 %v1462, %v1460
        %v1489 = vpack.c.b16 %v1463, %v1461
        %v1490 = vpack.c.b16 %v1466, %v1464
        %v1491 = vpack.c.b16 %v1467, %v1465
        %v1492 = vpack.c.b16 %v1470, %v1468
        %v1493 = vpack.c.b16 %v1471, %v1469
        %v1494 = vpack.c.b16 %v1474, %v1472
        %v1495 = vpack.c.b16 %v1475, %v1473
        %v1496 = vpack.c.b16 %v1478, %v1476
        %v1497 = vpack.c.b16 %v1479, %v1477
        %v1498 = vpack.c.b16 %v1482, %v1480
        %v1499 = vpack.c.b16 %v1483, %v1481
        %1516 = vmatprep.subr.bf16.mxu0 %v1485
        %1517 = vmatpush1.bf16.msra.mxu0 %v1484
        %1518 = vmatprep.subr.bf16.mxu0 %v1487
        %1519 = vmatpush1.bf16.msra.mxu0 %v1486
        %1520 = vmatprep.subr.bf16.mxu0 %v1489
        %1521 = vmatpush1.bf16.msra.mxu0 %v1488
        %1522 = vmatprep.subr.bf16.mxu0 %v1491
        %1523 = vmatpush1.bf16.msra.mxu0 %v1490
        %1524 = vmatprep.subr.bf16.mxu0 %v1493
        %1525 = vmatpush1.bf16.msra.mxu0 %v1492
        %1526 = vmatprep.subr.bf16.mxu0 %v1495
        %1527 = vmatpush1.bf16.msra.mxu0 %v1494
        %1528 = vmatprep.subr.bf16.mxu0 %v1497
        %1529 = vmatpush1.bf16.msra.mxu0 %v1496
        %1530 = vmatprep.subr.bf16.mxu0 %v1499
        %1531 = vmatpush1.bf16.msra.mxu0 %v1498
        %1532 = vmatprep.subr.bf16.mxu0 0
        %1533 = vmatpush1.bf16.msra.mxu0 0
        %1534 = vmatprep.subr.bf16.mxu0 0
        %1535 = vmatpush1.bf16.msra.mxu0 0
        %1536 = vmatprep.subr.bf16.mxu0 0
        %1537 = vmatpush1.bf16.msra.mxu0 0
        %1538 = vmatprep.subr.bf16.mxu0 0
        %1539 = vmatpush1.bf16.msra.mxu0 0
        %1540 = vmatprep.subr.bf16.mxu0 0
        %1541 = vmatpush1.bf16.msra.mxu0 0
        %1542 = vmatprep.subr.bf16.mxu0 0
        %1543 = vmatpush1.bf16.msra.mxu0 0
        %1544 = vmatprep.subr.bf16.mxu0 0
        %1545 = vmatpush1.bf16.msra.mxu0 0
        %1546 = vmatprep.subr.bf16.mxu0 0
        %1547 = vmatpush1.bf16.msra.mxu0 0
        %1548 = vmatprep.mubr.bf16.mxu0 0
        %1549 = vmatmul.mubr.bf16.gmra.mrb[0].mxu0 %v1428
        %v1550 = vpop.f32.mrb[0].mxu0
        %v1551 = vadd.f32 0.0, %v1550
        %v1552 = vpop.f32.mrb[0].mxu0
        %v1553 = vadd.f32 0.0, %v1552
        %v1554 = vpop.f32.mrb[0].mxu0
        %v1555 = vadd.f32 0.0, %v1554
        %v1556 = vpop.f32.mrb[0].mxu0
        %v1557 = vadd.f32 0.0, %v1556
        %1558 = vmatprep.mubr.bf16.mxu0 0
        %1559 = vmatmul.mubr.bf16.gmra.mrb[0].mxu0 %v1429
        %v1560 = vpop.f32.mrb[0].mxu0
        %v1561 = vadd.f32 0.0, %v1560
        %v1562 = vpop.f32.mrb[0].mxu0
        %v1563 = vadd.f32 0.0, %v1562
        %v1564 = vpop.f32.mrb[0].mxu0
        %v1565 = vadd.f32 0.0, %v1564
        %v1566 = vpop.f32.mrb[0].mxu0
        %v1567 = vadd.f32 0.0, %v1566
        %1568 = vmatprep.mubr.bf16.mxu0 0
        %1569 = vmatmul.mubr.bf16.gmra.mrb[0].mxu0 %v1430
        %v1570 = vpop.f32.mrb[0].mxu0
        %v1571 = vadd.f32 0.0, %v1570
        %v1572 = vpop.f32.mrb[0].mxu0
        %v1573 = vadd.f32 0.0, %v1572
        %v1574 = vpop.f32.mrb[0].mxu0
        %v1575 = vadd.f32 0.0, %v1574
        %v1576 = vpop.f32.mrb[0].mxu0
        %v1577 = vadd.f32 0.0, %v1576
        %1578 = vmatprep.mubr.bf16.mxu0 0
        %1579 = vmatmul.mubr.bf16.gmra.mrb[0].mxu0 %v1431
        %v1580 = vpop.f32.mrb[0].mxu0
        %v1581 = vadd.f32 0.0, %v1580
        %v1582 = vpop.f32.mrb[0].mxu0
        %v1583 = vadd.f32 0.0, %v1582
        %v1584 = vpop.f32.mrb[0].mxu0
        %v1585 = vadd.f32 0.0, %v1584
        %v1586 = vpop.f32.mrb[0].mxu0
        %v1587 = vadd.f32 0.0, %v1586
        %1588 = vdwg.mxu0
        %v1597 = vunpack.c.l.b16 %v1363
        %v1598 = vunpack.c.l.b16 %v1364
        %v1599 = vunpack.c.l.b16 %v1365
        %v1600 = vunpack.c.l.b16 %v1366
        %v1601 = vunpack.c.l.b16 %v1367
        %v1602 = vunpack.c.l.b16 %v1368
        %v1603 = vunpack.c.l.b16 %v1369
        %v1604 = vunpack.c.l.b16 %v1370
        %v1605 = vpack.c.b16 %v1598, %v1597
        %v1606 = vpack.c.b16 %v1600, %v1599
        %v1607 = vpack.c.b16 %v1602, %v1601
        %v1608 = vpack.c.b16 %v1604, %v1603
        %v1629 = vunpack.c.l.b16 %v1371
        %v1630 = vunpack.c.h.b16 %v1371
        %v1631 = vunpack.c.l.b16 %v1372
        %v1632 = vunpack.c.h.b16 %v1372
        %v1633 = vunpack.c.l.b16 %v1373
        %v1634 = vunpack.c.h.b16 %v1373
        %v1635 = vunpack.c.l.b16 %v1374
        %v1636 = vunpack.c.h.b16 %v1374
        %v1637 = vunpack.c.l.b16 %v1375
        %v1638 = vunpack.c.h.b16 %v1375
        %v1639 = vunpack.c.l.b16 %v1376
        %v1640 = vunpack.c.h.b16 %v1376
        %v1641 = vunpack.c.l.b16 %v1377
        %v1642 = vunpack.c.h.b16 %v1377
        %v1643 = vunpack.c.l.b16 %v1378
        %v1644 = vunpack.c.h.b16 %v1378
        %v1645 = vunpack.c.l.b16 %v1379
        %v1646 = vunpack.c.h.b16 %v1379
        %v1647 = vunpack.c.l.b16 %v1380
        %v1648 = vunpack.c.h.b16 %v1380
        %v1649 = vunpack.c.l.b16 %v1381
        %v1650 = vunpack.c.h.b16 %v1381
        %v1651 = vunpack.c.l.b16 %v1382
        %v1652 = vunpack.c.h.b16 %v1382
        %v1653 = vunpack.c.l.b16 %v1383
        %v1654 = vunpack.c.h.b16 %v1383
        %v1655 = vunpack.c.l.b16 %v1384
        %v1656 = vunpack.c.h.b16 %v1384
        %v1657 = vunpack.c.l.b16 %v1385
        %v1658 = vunpack.c.h.b16 %v1385
        %v1659 = vunpack.c.l.b16 %v1386
        %v1660 = vunpack.c.h.b16 %v1386
        %v1661 = vpack.c.b16 %v1631, %v1629
        %v1662 = vpack.c.b16 %v1632, %v1630
        %v1663 = vpack.c.b16 %v1635, %v1633
        %v1664 = vpack.c.b16 %v1636, %v1634
        %v1665 = vpack.c.b16 %v1639, %v1637
        %v1666 = vpack.c.b16 %v1640, %v1638
        %v1667 = vpack.c.b16 %v1643, %v1641
        %v1668 = vpack.c.b16 %v1644, %v1642
        %v1669 = vpack.c.b16 %v1647, %v1645
        %v1670 = vpack.c.b16 %v1648, %v1646
        %v1671 = vpack.c.b16 %v1651, %v1649
        %v1672 = vpack.c.b16 %v1652, %v1650
        %v1673 = vpack.c.b16 %v1655, %v1653
        %v1674 = vpack.c.b16 %v1656, %v1654
        %v1675 = vpack.c.b16 %v1659, %v1657
        %v1676 = vpack.c.b16 %v1660, %v1658
        %1693 = vmatprep.subr.bf16.mxu0 %v1662
        %1694 = vmatpush1.bf16.msra.mxu0 %v1661
        %1695 = vmatprep.subr.bf16.mxu0 %v1664
        %1696 = vmatpush1.bf16.msra.mxu0 %v1663
        %1697 = vmatprep.subr.bf16.mxu0 %v1666
        %1698 = vmatpush1.bf16.msra.mxu0 %v1665
        %1699 = vmatprep.subr.bf16.mxu0 %v1668
        %1700 = vmatpush1.bf16.msra.mxu0 %v1667
        %1701 = vmatprep.subr.bf16.mxu0 %v1670
        %1702 = vmatpush1.bf16.msra.mxu0 %v1669
        %1703 = vmatprep.subr.bf16.mxu0 %v1672
        %1704 = vmatpush1.bf16.msra.mxu0 %v1671
        %1705 = vmatprep.subr.bf16.mxu0 %v1674
        %1706 = vmatpush1.bf16.msra.mxu0 %v1673
        %1707 = vmatprep.subr.bf16.mxu0 %v1676
        %1708 = vmatpush1.bf16.msra.mxu0 %v1675
        %1709 = vmatprep.subr.bf16.mxu0 0
        %1710 = vmatpush1.bf16.msra.mxu0 0
        %1711 = vmatprep.subr.bf16.mxu0 0
        %1712 = vmatpush1.bf16.msra.mxu0 0
        %1713 = vmatprep.subr.bf16.mxu0 0
        %1714 = vmatpush1.bf16.msra.mxu0 0
        %1715 = vmatprep.subr.bf16.mxu0 0
        %1716 = vmatpush1.bf16.msra.mxu0 0
        %1717 = vmatprep.subr.bf16.mxu0 0
        %1718 = vmatpush1.bf16.msra.mxu0 0
        %1719 = vmatprep.subr.bf16.mxu0 0
        %1720 = vmatpush1.bf16.msra.mxu0 0
        %1721 = vmatprep.subr.bf16.mxu0 0
        %1722 = vmatpush1.bf16.msra.mxu0 0
        %1723 = vmatprep.subr.bf16.mxu0 0
        %1724 = vmatpush1.bf16.msra.mxu0 0
        %1725 = vmatprep.mubr.bf16.mxu0 0
        %1726 = vmatmul.mubr.bf16.gmra.mrb[0].mxu0 %v1605
        %v1727 = vpop.f32.mrb[0].mxu0
        %v1728 = vadd.f32 %v1551, %v1727
        %v1729 = vpop.f32.mrb[0].mxu0
        %v1730 = vadd.f32 %v1553, %v1729
        %v1731 = vpop.f32.mrb[0].mxu0
        %v1732 = vadd.f32 %v1555, %v1731
        %v1733 = vpop.f32.mrb[0].mxu0
        %v1734 = vadd.f32 %v1557, %v1733
        %1735 = vmatprep.mubr.bf16.mxu0 0
        %1736 = vmatmul.mubr.bf16.gmra.mrb[0].mxu0 %v1606
        %v1737 = vpop.f32.mrb[0].mxu0
        %v1738 = vadd.f32 %v1561, %v1737
        %v1739 = vpop.f32.mrb[0].mxu0
        %v1740 = vadd.f32 %v1563, %v1739
        %v1741 = vpop.f32.mrb[0].mxu0
        %v1742 = vadd.f32 %v1565, %v1741
        %v1743 = vpop.f32.mrb[0].mxu0
        %v1744 = vadd.f32 %v1567, %v1743
        %1745 = vmatprep.mubr.bf16.mxu0 0
        %1746 = vmatmul.mubr.bf16.gmra.mrb[0].mxu0 %v1607
        %v1747 = vpop.f32.mrb[0].mxu0
        %v1748 = vadd.f32 %v1571, %v1747
        %v1749 = vpop.f32.mrb[0].mxu0
        %v1750 = vadd.f32 %v1573, %v1749
        %v1751 = vpop.f32.mrb[0].mxu0
        %v1752 = vadd.f32 %v1575, %v1751
        %v1753 = vpop.f32.mrb[0].mxu0
        %v1754 = vadd.f32 %v1577, %v1753
        %1755 = vmatprep.mubr.bf16.mxu0 0
        %1756 = vmatmul.mubr.bf16.gmra.mrb[0].mxu0 %v1608
        %v1757 = vpop.f32.mrb[0].mxu0
        %v1758 = vadd.f32 %v1581, %v1757
        %v1759 = vpop.f32.mrb[0].mxu0
        %v1760 = vadd.f32 %v1583, %v1759
        %v1761 = vpop.f32.mrb[0].mxu0
        %v1762 = vadd.f32 %v1585, %v1761
        %v1763 = vpop.f32.mrb[0].mxu0
        %v1764 = vadd.f32 %v1587, %v1763
        %1765 = vdwg.mxu0
        %s1766 = scalar_lea.vmem [#allocation3], 8
        %v1767 = vld [vmem:[%s1766] sm:$0xf]
        %v1768 = vld [vmem:[%s1766 + $0x4] sm:$0xf]
        %v1769 = vld [vmem:[%s1766 + $0x8] sm:$0xf]
        %v1770 = vld [vmem:[%s1766 + $0xc] sm:$0xf]
        %v1771 = vld [vmem:[%s1766 + $0x10] sm:$0xf]
        %v1772 = vld [vmem:[%s1766 + $0x14] sm:$0xf]
        %v1773 = vld [vmem:[%s1766 + $0x18] sm:$0xf]
        %v1774 = vld [vmem:[%s1766 + $0x1c] sm:$0xf]
        %s1775 = scalar_lea.vmem [#allocation9], 256
        %v1776 = vld [vmem:[%s1775] sm:$0xff]
        %v1777 = vld [vmem:[%s1775 + $0x8] sm:$0xff]
        %v1778 = vld [vmem:[%s1775 + $0x10] sm:$0xff]
        %v1779 = vld [vmem:[%s1775 + $0x18] sm:$0xff]
        %v1780 = vld [vmem:[%s1775 + $0x20] sm:$0xff]
        %v1781 = vld [vmem:[%s1775 + $0x28] sm:$0xff]
        %v1782 = vld [vmem:[%s1775 + $0x30] sm:$0xff]
        %v1783 = vld [vmem:[%s1775 + $0x38] sm:$0xff]
        %v1784 = vld [vmem:[%s1775 + $0x40] sm:$0xff]
        %v1785 = vld [vmem:[%s1775 + $0x48] sm:$0xff]
        %v1786 = vld [vmem:[%s1775 + $0x50] sm:$0xff]
        %v1787 = vld [vmem:[%s1775 + $0x58] sm:$0xff]
        %v1788 = vld [vmem:[%s1775 + $0x60] sm:$0xff]
        %v1789 = vld [vmem:[%s1775 + $0x68] sm:$0xff]
        %v1790 = vld [vmem:[%s1775 + $0x70] sm:$0xff]
        %v1791 = vld [vmem:[%s1775 + $0x78] sm:$0xff]
        %v1800 = vunpack.c.l.b16 %v1767
        %v1801 = vunpack.c.l.b16 %v1768
        %v1802 = vunpack.c.l.b16 %v1769
        %v1803 = vunpack.c.l.b16 %v1770
        %v1804 = vunpack.c.l.b16 %v1771
        %v1805 = vunpack.c.l.b16 %v1772
        %v1806 = vunpack.c.l.b16 %v1773
        %v1807 = vunpack.c.l.b16 %v1774
        %v1808 = vpack.c.b16 %v1801, %v1800
        %v1809 = vpack.c.b16 %v1803, %v1802
        %v1810 = vpack.c.b16 %v1805, %v1804
        %v1811 = vpack.c.b16 %v1807, %v1806
        %v1832 = vunpack.c.l.b16 %v1776
        %v1833 = vunpack.c.h.b16 %v1776
        %v1834 = vunpack.c.l.b16 %v1777
        %v1835 = vunpack.c.h.b16 %v1777
        %v1836 = vunpack.c.l.b16 %v1778
        %v1837 = vunpack.c.h.b16 %v1778
        %v1838 = vunpack.c.l.b16 %v1779
        %v1839 = vunpack.c.h.b16 %v1779
        %v1840 = vunpack.c.l.b16 %v1780
        %v1841 = vunpack.c.h.b16 %v1780
        %v1842 = vunpack.c.l.b16 %v1781
        %v1843 = vunpack.c.h.b16 %v1781
        %v1844 = vunpack.c.l.b16 %v1782
        %v1845 = vunpack.c.h.b16 %v1782
        %v1846 = vunpack.c.l.b16 %v1783
        %v1847 = vunpack.c.h.b16 %v1783
        %v1848 = vunpack.c.l.b16 %v1784
        %v1849 = vunpack.c.h.b16 %v1784
        %v1850 = vunpack.c.l.b16 %v1785
        %v1851 = vunpack.c.h.b16 %v1785
        %v1852 = vunpack.c.l.b16 %v1786
        %v1853 = vunpack.c.h.b16 %v1786
        %v1854 = vunpack.c.l.b16 %v1787
        %v1855 = vunpack.c.h.b16 %v1787
        %v1856 = vunpack.c.l.b16 %v1788
        %v1857 = vunpack.c.h.b16 %v1788
        %v1858 = vunpack.c.l.b16 %v1789
        %v1859 = vunpack.c.h.b16 %v1789
        %v1860 = vunpack.c.l.b16 %v1790
        %v1861 = vunpack.c.h.b16 %v1790
        %v1862 = vunpack.c.l.b16 %v1791
        %v1863 = vunpack.c.h.b16 %v1791
        %v1864 = vpack.c.b16 %v1834, %v1832
        %v1865 = vpack.c.b16 %v1835, %v1833
        %v1866 = vpack.c.b16 %v1838, %v1836
        %v1867 = vpack.c.b16 %v1839, %v1837
        %v1868 = vpack.c.b16 %v1842, %v1840
        %v1869 = vpack.c.b16 %v1843, %v1841
        %v1870 = vpack.c.b16 %v1846, %v1844
        %v1871 = vpack.c.b16 %v1847, %v1845
        %v1872 = vpack.c.b16 %v1850, %v1848
        %v1873 = vpack.c.b16 %v1851, %v1849
        %v1874 = vpack.c.b16 %v1854, %v1852
        %v1875 = vpack.c.b16 %v1855, %v1853
        %v1876 = vpack.c.b16 %v1858, %v1856
        %v1877 = vpack.c.b16 %v1859, %v1857
        %v1878 = vpack.c.b16 %v1862, %v1860
        %v1879 = vpack.c.b16 %v1863, %v1861
        %1896 = vmatprep.subr.bf16.mxu0 %v1865
        %1897 = vmatpush1.bf16.msra.mxu0 %v1864
        %1898 = vmatprep.subr.bf16.mxu0 %v1867
        %1899 = vmatpush1.bf16.msra.mxu0 %v1866
        %1900 = vmatprep.subr.bf16.mxu0 %v1869
        %1901 = vmatpush1.bf16.msra.mxu0 %v1868
        %1902 = vmatprep.subr.bf16.mxu0 %v1871
        %1903 = vmatpush1.bf16.msra.mxu0 %v1870
        %1904 = vmatprep.subr.bf16.mxu0 %v1873
        %1905 = vmatpush1.bf16.msra.mxu0 %v1872
        %1906 = vmatprep.subr.bf16.mxu0 %v1875
        %1907 = vmatpush1.bf16.msra.mxu0 %v1874
        %1908 = vmatprep.subr.bf16.mxu0 %v1877
        %1909 = vmatpush1.bf16.msra.mxu0 %v1876
        %1910 = vmatprep.subr.bf16.mxu0 %v1879
        %1911 = vmatpush1.bf16.msra.mxu0 %v1878
        %1912 = vmatprep.subr.bf16.mxu0 0
        %1913 = vmatpush1.bf16.msra.mxu0 0
        %1914 = vmatprep.subr.bf16.mxu0 0
        %1915 = vmatpush1.bf16.msra.mxu0 0
        %1916 = vmatprep.subr.bf16.mxu0 0
        %1917 = vmatpush1.bf16.msra.mxu0 0
        %1918 = vmatprep.subr.bf16.mxu0 0
        %1919 = vmatpush1.bf16.msra.mxu0 0
        %1920 = vmatprep.subr.bf16.mxu0 0
        %1921 = vmatpush1.bf16.msra.mxu0 0
        %1922 = vmatprep.subr.bf16.mxu0 0
        %1923 = vmatpush1.bf16.msra.mxu0 0
        %1924 = vmatprep.subr.bf16.mxu0 0
        %1925 = vmatpush1.bf16.msra.mxu0 0
        %1926 = vmatprep.subr.bf16.mxu0 0
        %1927 = vmatpush1.bf16.msra.mxu0 0
        %1928 = vmatprep.mubr.bf16.mxu0 0
        %1929 = vmatmul.mubr.bf16.gmra.mrb[0].mxu0 %v1808
        %v1930 = vpop.f32.mrb[0].mxu0
        %v1931 = vadd.f32 0.0, %v1930
        %v1932 = vpop.f32.mrb[0].mxu0
        %v1933 = vadd.f32 0.0, %v1932
        %v1934 = vpop.f32.mrb[0].mxu0
        %v1935 = vadd.f32 0.0, %v1934
        %v1936 = vpop.f32.mrb[0].mxu0
        %v1937 = vadd.f32 0.0, %v1936
        %1938 = vmatprep.mubr.bf16.mxu0 0
        %1939 = vmatmul.mubr.bf16.gmra.mrb[0].mxu0 %v1809
        %v1940 = vpop.f32.mrb[0].mxu0
        %v1941 = vadd.f32 0.0, %v1940
        %v1942 = vpop.f32.mrb[0].mxu0
        %v1943 = vadd.f32 0.0, %v1942
        %v1944 = vpop.f32.mrb[0].mxu0
        %v1945 = vadd.f32 0.0, %v1944
        %v1946 = vpop.f32.mrb[0].mxu0
        %v1947 = vadd.f32 0.0, %v1946
        %1948 = vmatprep.mubr.bf16.mxu0 0
        %1949 = vmatmul.mubr.bf16.gmra.mrb[0].mxu0 %v1810
        %v1950 = vpop.f32.mrb[0].mxu0
        %v1951 = vadd.f32 0.0, %v1950
        %v1952 = vpop.f32.mrb[0].mxu0
        %v1953 = vadd.f32 0.0, %v1952
        %v1954 = vpop.f32.mrb[0].mxu0
        %v1955 = vadd.f32 0.0, %v1954
        %v1956 = vpop.f32.mrb[0].mxu0
        %v1957 = vadd.f32 0.0, %v1956
        %1958 = vmatprep.mubr.bf16.mxu0 0
        %1959 = vmatmul.mubr.bf16.gmra.mrb[0].mxu0 %v1811
        %v1960 = vpop.f32.mrb[0].mxu0
        %v1961 = vadd.f32 0.0, %v1960
        %v1962 = vpop.f32.mrb[0].mxu0
        %v1963 = vadd.f32 0.0, %v1962
        %v1964 = vpop.f32.mrb[0].mxu0
        %v1965 = vadd.f32 0.0, %v1964
        %v1966 = vpop.f32.mrb[0].mxu0
        %v1967 = vadd.f32 0.0, %v1966
        %1968 = vdwg.mxu0
        %v1969 = vadd.f32 %v1728, %v1931
        %v1970 = vadd.f32 %v1730, %v1933
        %v1971 = vadd.f32 %v1732, %v1935
        %v1972 = vadd.f32 %v1734, %v1937
        %v1973 = vadd.f32 %v1738, %v1941
        %v1974 = vadd.f32 %v1740, %v1943
        %v1975 = vadd.f32 %v1742, %v1945
        %v1976 = vadd.f32 %v1744, %v1947
        %v1977 = vadd.f32 %v1748, %v1951
        %v1978 = vadd.f32 %v1750, %v1953
        %v1979 = vadd.f32 %v1752, %v1955
        %v1980 = vadd.f32 %v1754, %v1957
        %v1981 = vadd.f32 %v1758, %v1961
        %v1982 = vadd.f32 %v1760, %v1963
        %v1983 = vadd.f32 %v1762, %v1965
        %v1984 = vadd.f32 %v1764, %v1967
        %v1985 = vld [vmem:[%s4] sm:$0x3]
        %v1987 = vlaneseq
        %v1988 = vshrl.u32 %v1987, 7
        %v1989 = vsub.s32 0, %v1988
        %v1990 = vrot.slane %v1985, %v1989
        %v1991 = vlaneseq
        %v1992 = vshrl.u32 %v1991, 7
        %v1993 = vsub.s32 1, %v1992
        %v1994 = vrot.slane %v1985, %v1993
        %v1997 = vadd.f32 %v1969, %v1990
        %v1998 = vadd.f32 %v1970, %v1994
        %v1999 = vadd.f32 %v1971, %v1990
        %v2000 = vadd.f32 %v1972, %v1994
        %v2001 = vadd.f32 %v1973, %v1990
        %v2002 = vadd.f32 %v1974, %v1994
        %v2003 = vadd.f32 %v1975, %v1990
        %v2004 = vadd.f32 %v1976, %v1994
        %v2005 = vadd.f32 %v1977, %v1990
        %v2006 = vadd.f32 %v1978, %v1994
        %v2007 = vadd.f32 %v1979, %v1990
        %v2008 = vadd.f32 %v1980, %v1994
        %v2009 = vadd.f32 %v1981, %v1990
        %v2010 = vadd.f32 %v1982, %v1994
        %v2011 = vadd.f32 %v1983, %v1990
        %v2012 = vadd.f32 %v1984, %v1994
        %v2013 = vmax.f32 %v1997, 0.0
        %v2014 = vmax.f32 %v1998, 0.0
        %v2015 = vmax.f32 %v1999, 0.0
        %v2016 = vmax.f32 %v2000, 0.0
        %v2017 = vmax.f32 %v2001, 0.0
        %v2018 = vmax.f32 %v2002, 0.0
        %v2019 = vmax.f32 %v2003, 0.0
        %v2020 = vmax.f32 %v2004, 0.0
        %v2021 = vmax.f32 %v2005, 0.0
        %v2022 = vmax.f32 %v2006, 0.0
        %v2023 = vmax.f32 %v2007, 0.0
        %v2024 = vmax.f32 %v2008, 0.0
        %v2025 = vmax.f32 %v2009, 0.0
        %v2026 = vmax.f32 %v2010, 0.0
        %v2027 = vmax.f32 %v2011, 0.0
        %v2028 = vmax.f32 %v2012, 0.0
        %v2029 = vmax.f32 %v2013, %v2015
        %v2030 = vmax.f32 %v2014, %v2016
        %v2031 = vmax.f32 %v2017, %v2019
        %v2032 = vmax.f32 %v2018, %v2020
        %v2033 = vmax.f32 %v2021, %v2023
        %v2034 = vmax.f32 %v2022, %v2024
        %v2035 = vmax.f32 %v2025, %v2027
        %v2036 = vmax.f32 %v2026, %v2028
        %v2037 = vmax.f32 %v2029, %v2030
        %v2038 = vmax.f32 %v2031, %v2032
        %v2039 = vmax.f32 %v2033, %v2034
        %v2040 = vmax.f32 %v2035, %v2036
        %v2041 = vpack.c.bf16 %v2037, %v2037
        %2042 = vst [vmem:[#allocation4] sm:$0xf] %v2041
        %v2043 = vpack.c.bf16 %v2038, %v2038
        %2044 = vst [vmem:[#allocation4 + $0x4] sm:$0xf] %v2043
        %v2045 = vpack.c.bf16 %v2039, %v2039
        %2046 = vst [vmem:[#allocation4 + $0x8] sm:$0xf] %v2045
        %v2047 = vpack.c.bf16 %v2040, %v2040
        %2048 = vst [vmem:[#allocation4 + $0xc] sm:$0xf] %v2047
        %v2049 = vld [vmem:[#allocation4] sm:$0xff]
        %v2050 = vld [vmem:[#allocation4 + $0x8] sm:$0xff]
        %v2051 = vld [vmem:[#allocation11] sm:$0xff]
        %v2052 = vld [vmem:[#allocation11 + $0x8] sm:$0xff]
        %v2053 = vld [vmem:[#allocation11 + $0x10] sm:$0xff]
        %v2054 = vld [vmem:[#allocation11 + $0x18] sm:$0xff]
        %v2055 = vld [vmem:[#allocation11 + $0x20] sm:$0xff]
        %v2056 = vld [vmem:[#allocation11 + $0x28] sm:$0xff]
        %v2057 = vld [vmem:[#allocation11 + $0x30] sm:$0xff]
        %v2058 = vld [vmem:[#allocation11 + $0x38] sm:$0xff]
        %v2059 = vld [vmem:[#allocation11 + $0x40] sm:$0xff]
        %v2060 = vld [vmem:[#allocation11 + $0x48] sm:$0xff]
        %v2061 = vld [vmem:[#allocation11 + $0x50] sm:$0xff]
        %v2062 = vld [vmem:[#allocation11 + $0x58] sm:$0xff]
        %v2063 = vld [vmem:[#allocation11 + $0x60] sm:$0xff]
        %v2064 = vld [vmem:[#allocation11 + $0x68] sm:$0xff]
        %v2065 = vld [vmem:[#allocation11 + $0x70] sm:$0xff]
        %v2066 = vld [vmem:[#allocation11 + $0x78] sm:$0xff]
        %v2067 = vld [vmem:[#allocation11 + $0x80] sm:$0xff]
        %v2068 = vld [vmem:[#allocation11 + $0x88] sm:$0xff]
        %v2069 = vld [vmem:[#allocation11 + $0x90] sm:$0xff]
        %v2070 = vld [vmem:[#allocation11 + $0x98] sm:$0xff]
        %v2071 = vld [vmem:[#allocation11 + $0xa0] sm:$0xff]
        %v2072 = vld [vmem:[#allocation11 + $0xa8] sm:$0xff]
        %v2073 = vld [vmem:[#allocation11 + $0xb0] sm:$0xff]
        %v2074 = vld [vmem:[#allocation11 + $0xb8] sm:$0xff]
        %v2075 = vld [vmem:[#allocation11 + $0xc0] sm:$0xff]
        %v2076 = vld [vmem:[#allocation11 + $0xc8] sm:$0xff]
        %v2077 = vld [vmem:[#allocation11 + $0xd0] sm:$0xff]
        %v2078 = vld [vmem:[#allocation11 + $0xd8] sm:$0xff]
        %v2079 = vld [vmem:[#allocation11 + $0xe0] sm:$0xff]
        %v2080 = vld [vmem:[#allocation11 + $0xe8] sm:$0xff]
        %v2081 = vld [vmem:[#allocation11 + $0xf0] sm:$0xff]
        %v2082 = vld [vmem:[#allocation11 + $0xf8] sm:$0xff]
        %v2083 = vld [vmem:[#allocation11 + $0x100] sm:$0xff]
        %v2084 = vld [vmem:[#allocation11 + $0x108] sm:$0xff]
        %v2085 = vld [vmem:[#allocation11 + $0x110] sm:$0xff]
        %v2086 = vld [vmem:[#allocation11 + $0x118] sm:$0xff]
        %v2087 = vld [vmem:[#allocation11 + $0x120] sm:$0xff]
        %v2088 = vld [vmem:[#allocation11 + $0x128] sm:$0xff]
        %v2089 = vld [vmem:[#allocation11 + $0x130] sm:$0xff]
        %v2090 = vld [vmem:[#allocation11 + $0x138] sm:$0xff]
        %v2091 = vld [vmem:[#allocation11 + $0x140] sm:$0xff]
        %v2092 = vld [vmem:[#allocation11 + $0x148] sm:$0xff]
        %v2093 = vld [vmem:[#allocation11 + $0x150] sm:$0xff]
        %v2094 = vld [vmem:[#allocation11 + $0x158] sm:$0xff]
        %v2095 = vld [vmem:[#allocation11 + $0x160] sm:$0xff]
        %v2096 = vld [vmem:[#allocation11 + $0x168] sm:$0xff]
        %v2097 = vld [vmem:[#allocation11 + $0x170] sm:$0xff]
        %v2098 = vld [vmem:[#allocation11 + $0x178] sm:$0xff]
        %v2099 = vld [vmem:[#allocation11 + $0x180] sm:$0xff]
        %v2100 = vld [vmem:[#allocation11 + $0x188] sm:$0xff]
        %v2101 = vld [vmem:[#allocation11 + $0x190] sm:$0xff]
        %v2102 = vld [vmem:[#allocation11 + $0x198] sm:$0xff]
        %v2103 = vld [vmem:[#allocation11 + $0x1a0] sm:$0xff]
        %v2104 = vld [vmem:[#allocation11 + $0x1a8] sm:$0xff]
        %v2105 = vld [vmem:[#allocation11 + $0x1b0] sm:$0xff]
        %v2106 = vld [vmem:[#allocation11 + $0x1b8] sm:$0xff]
        %v2107 = vld [vmem:[#allocation11 + $0x1c0] sm:$0xff]
        %v2108 = vld [vmem:[#allocation11 + $0x1c8] sm:$0xff]
        %v2109 = vld [vmem:[#allocation11 + $0x1d0] sm:$0xff]
        %v2110 = vld [vmem:[#allocation11 + $0x1d8] sm:$0xff]
        %v2111 = vld [vmem:[#allocation11 + $0x1e0] sm:$0xff]
        %v2112 = vld [vmem:[#allocation11 + $0x1e8] sm:$0xff]
        %v2113 = vld [vmem:[#allocation11 + $0x1f0] sm:$0xff]
        %v2114 = vld [vmem:[#allocation11 + $0x1f8] sm:$0xff]
        %v2115 = vld [vmem:[#allocation11 + $0x200] sm:$0xff]
        %v2116 = vld [vmem:[#allocation11 + $0x208] sm:$0xff]
        %v2117 = vld [vmem:[#allocation11 + $0x210] sm:$0xff]
        %v2118 = vld [vmem:[#allocation11 + $0x218] sm:$0xff]
        %v2119 = vld [vmem:[#allocation11 + $0x220] sm:$0xff]
        %v2120 = vld [vmem:[#allocation11 + $0x228] sm:$0xff]
        %v2121 = vld [vmem:[#allocation11 + $0x230] sm:$0xff]
        %v2122 = vld [vmem:[#allocation11 + $0x238] sm:$0xff]
        %v2123 = vld [vmem:[#allocation11 + $0x240] sm:$0xff]
        %v2124 = vld [vmem:[#allocation11 + $0x248] sm:$0xff]
        %v2125 = vld [vmem:[#allocation11 + $0x250] sm:$0xff]
        %v2126 = vld [vmem:[#allocation11 + $0x258] sm:$0xff]
        %v2127 = vld [vmem:[#allocation11 + $0x260] sm:$0xff]
        %v2128 = vld [vmem:[#allocation11 + $0x268] sm:$0xff]
        %v2129 = vld [vmem:[#allocation11 + $0x270] sm:$0xff]
        %v2130 = vld [vmem:[#allocation11 + $0x278] sm:$0xff]
        %v2131 = vld [vmem:[#allocation11 + $0x280] sm:$0xff]
        %v2132 = vld [vmem:[#allocation11 + $0x288] sm:$0xff]
        %v2133 = vld [vmem:[#allocation11 + $0x290] sm:$0xff]
        %v2134 = vld [vmem:[#allocation11 + $0x298] sm:$0xff]
        %v2135 = vld [vmem:[#allocation11 + $0x2a0] sm:$0xff]
        %v2136 = vld [vmem:[#allocation11 + $0x2a8] sm:$0xff]
        %v2137 = vld [vmem:[#allocation11 + $0x2b0] sm:$0xff]
        %v2138 = vld [vmem:[#allocation11 + $0x2b8] sm:$0xff]
        %v2139 = vld [vmem:[#allocation11 + $0x2c0] sm:$0xff]
        %v2140 = vld [vmem:[#allocation11 + $0x2c8] sm:$0xff]
        %v2141 = vld [vmem:[#allocation11 + $0x2d0] sm:$0xff]
        %v2142 = vld [vmem:[#allocation11 + $0x2d8] sm:$0xff]
        %v2143 = vld [vmem:[#allocation11 + $0x2e0] sm:$0xff]
        %v2144 = vld [vmem:[#allocation11 + $0x2e8] sm:$0xff]
        %v2145 = vld [vmem:[#allocation11 + $0x2f0] sm:$0xff]
        %v2146 = vld [vmem:[#allocation11 + $0x2f8] sm:$0xff]
        %v2147 = vld [vmem:[#allocation11 + $0x300] sm:$0xff]
        %v2148 = vld [vmem:[#allocation11 + $0x308] sm:$0xff]
        %v2149 = vld [vmem:[#allocation11 + $0x310] sm:$0xff]
        %v2150 = vld [vmem:[#allocation11 + $0x318] sm:$0xff]
        %v2151 = vld [vmem:[#allocation11 + $0x320] sm:$0xff]
        %v2152 = vld [vmem:[#allocation11 + $0x328] sm:$0xff]
        %v2153 = vld [vmem:[#allocation11 + $0x330] sm:$0xff]
        %v2154 = vld [vmem:[#allocation11 + $0x338] sm:$0xff]
        %v2155 = vld [vmem:[#allocation11 + $0x340] sm:$0xff]
        %v2156 = vld [vmem:[#allocation11 + $0x348] sm:$0xff]
        %v2157 = vld [vmem:[#allocation11 + $0x350] sm:$0xff]
        %v2158 = vld [vmem:[#allocation11 + $0x358] sm:$0xff]
        %v2159 = vld [vmem:[#allocation11 + $0x360] sm:$0xff]
        %v2160 = vld [vmem:[#allocation11 + $0x368] sm:$0xff]
        %v2161 = vld [vmem:[#allocation11 + $0x370] sm:$0xff]
        %v2162 = vld [vmem:[#allocation11 + $0x378] sm:$0xff]
        %v2163 = vld [vmem:[#allocation11 + $0x380] sm:$0xff]
        %v2164 = vld [vmem:[#allocation11 + $0x388] sm:$0xff]
        %v2165 = vld [vmem:[#allocation11 + $0x390] sm:$0xff]
        %v2166 = vld [vmem:[#allocation11 + $0x398] sm:$0xff]
        %v2167 = vld [vmem:[#allocation11 + $0x3a0] sm:$0xff]
        %v2168 = vld [vmem:[#allocation11 + $0x3a8] sm:$0xff]
        %v2169 = vld [vmem:[#allocation11 + $0x3b0] sm:$0xff]
        %v2170 = vld [vmem:[#allocation11 + $0x3b8] sm:$0xff]
        %v2171 = vld [vmem:[#allocation11 + $0x3c0] sm:$0xff]
        %v2172 = vld [vmem:[#allocation11 + $0x3c8] sm:$0xff]
        %v2173 = vld [vmem:[#allocation11 + $0x3d0] sm:$0xff]
        %v2174 = vld [vmem:[#allocation11 + $0x3d8] sm:$0xff]
        %v2175 = vld [vmem:[#allocation11 + $0x3e0] sm:$0xff]
        %v2176 = vld [vmem:[#allocation11 + $0x3e8] sm:$0xff]
        %v2177 = vld [vmem:[#allocation11 + $0x3f0] sm:$0xff]
        %v2178 = vld [vmem:[#allocation11 + $0x3f8] sm:$0xff]
        %v2179 = vld [vmem:[%s6] sm:$0xf]
        %v2181 = vlaneseq
        %v2182 = vshrl.u32 %v2181, 7
        %v2183 = vsub.s32 0, %v2182
        %v2184 = vrot.slane %v2179, %v2183
        %v2185 = vlaneseq
        %v2186 = vshrl.u32 %v2185, 7
        %v2187 = vsub.s32 1, %v2186
        %v2188 = vrot.slane %v2179, %v2187
        %v2189 = vlaneseq
        %v2190 = vshrl.u32 %v2189, 7
        %v2191 = vsub.s32 2, %v2190
        %v2192 = vrot.slane %v2179, %v2191
        %v2193 = vlaneseq
        %v2194 = vshrl.u32 %v2193, 7
        %v2195 = vsub.s32 3, %v2194
        %v2196 = vrot.slane %v2179, %v2195
        %v2203 = vunpack.c.l.b16 %v2049
        %v2204 = vunpack.c.h.b16 %v2049
        %v2205 = vunpack.c.l.b16 %v2050
        %v2206 = vunpack.c.h.b16 %v2050
        %v2207 = vpack.c.b16 %v2203, %v2203
        %v2208 = vpack.c.b16 %v2204, %v2204
        %v2209 = vpack.c.b16 %v2205, %v2205
        %v2210 = vpack.c.b16 %v2206, %v2206
        %v2343 = vunpack.c.l.b16 %v2051
        %v2344 = vunpack.c.h.b16 %v2051
        %v2345 = vunpack.c.l.b16 %v2052
        %v2346 = vunpack.c.h.b16 %v2052
        %v2347 = vunpack.c.l.b16 %v2053
        %v2348 = vunpack.c.h.b16 %v2053
        %v2349 = vunpack.c.l.b16 %v2054
        %v2350 = vunpack.c.h.b16 %v2054
        %v2351 = vunpack.c.l.b16 %v2055
        %v2352 = vunpack.c.h.b16 %v2055
        %v2353 = vunpack.c.l.b16 %v2056
        %v2354 = vunpack.c.h.b16 %v2056
        %v2355 = vunpack.c.l.b16 %v2057
        %v2356 = vunpack.c.h.b16 %v2057
        %v2357 = vunpack.c.l.b16 %v2058
        %v2358 = vunpack.c.h.b16 %v2058
        %v2359 = vunpack.c.l.b16 %v2059
        %v2360 = vunpack.c.h.b16 %v2059
        %v2361 = vunpack.c.l.b16 %v2060
        %v2362 = vunpack.c.h.b16 %v2060
        %v2363 = vunpack.c.l.b16 %v2061
        %v2364 = vunpack.c.h.b16 %v2061
        %v2365 = vunpack.c.l.b16 %v2062
        %v2366 = vunpack.c.h.b16 %v2062
        %v2367 = vunpack.c.l.b16 %v2063
        %v2368 = vunpack.c.h.b16 %v2063
        %v2369 = vunpack.c.l.b16 %v2064
        %v2370 = vunpack.c.h.b16 %v2064
        %v2371 = vunpack.c.l.b16 %v2065
        %v2372 = vunpack.c.h.b16 %v2065
        %v2373 = vunpack.c.l.b16 %v2066
        %v2374 = vunpack.c.h.b16 %v2066
        %v2375 = vunpack.c.l.b16 %v2067
        %v2376 = vunpack.c.h.b16 %v2067
        %v2377 = vunpack.c.l.b16 %v2068
        %v2378 = vunpack.c.h.b16 %v2068
        %v2379 = vunpack.c.l.b16 %v2069
        %v2380 = vunpack.c.h.b16 %v2069
        %v2381 = vunpack.c.l.b16 %v2070
        %v2382 = vunpack.c.h.b16 %v2070
        %v2383 = vunpack.c.l.b16 %v2071
        %v2384 = vunpack.c.h.b16 %v2071
        %v2385 = vunpack.c.l.b16 %v2072
        %v2386 = vunpack.c.h.b16 %v2072
        %v2387 = vunpack.c.l.b16 %v2073
        %v2388 = vunpack.c.h.b16 %v2073
        %v2389 = vunpack.c.l.b16 %v2074
        %v2390 = vunpack.c.h.b16 %v2074
        %v2391 = vunpack.c.l.b16 %v2075
        %v2392 = vunpack.c.h.b16 %v2075
        %v2393 = vunpack.c.l.b16 %v2076
        %v2394 = vunpack.c.h.b16 %v2076
        %v2395 = vunpack.c.l.b16 %v2077
        %v2396 = vunpack.c.h.b16 %v2077
        %v2397 = vunpack.c.l.b16 %v2078
        %v2398 = vunpack.c.h.b16 %v2078
        %v2399 = vunpack.c.l.b16 %v2079
        %v2400 = vunpack.c.h.b16 %v2079
        %v2401 = vunpack.c.l.b16 %v2080
        %v2402 = vunpack.c.h.b16 %v2080
        %v2403 = vunpack.c.l.b16 %v2081
        %v2404 = vunpack.c.h.b16 %v2081
        %v2405 = vunpack.c.l.b16 %v2082
        %v2406 = vunpack.c.h.b16 %v2082
        %v2407 = vunpack.c.l.b16 %v2083
        %v2408 = vunpack.c.h.b16 %v2083
        %v2409 = vunpack.c.l.b16 %v2084
        %v2410 = vunpack.c.h.b16 %v2084
        %v2411 = vunpack.c.l.b16 %v2085
        %v2412 = vunpack.c.h.b16 %v2085
        %v2413 = vunpack.c.l.b16 %v2086
        %v2414 = vunpack.c.h.b16 %v2086
        %v2415 = vunpack.c.l.b16 %v2087
        %v2416 = vunpack.c.h.b16 %v2087
        %v2417 = vunpack.c.l.b16 %v2088
        %v2418 = vunpack.c.h.b16 %v2088
        %v2419 = vunpack.c.l.b16 %v2089
        %v2420 = vunpack.c.h.b16 %v2089
        %v2421 = vunpack.c.l.b16 %v2090
        %v2422 = vunpack.c.h.b16 %v2090
        %v2423 = vunpack.c.l.b16 %v2091
        %v2424 = vunpack.c.h.b16 %v2091
        %v2425 = vunpack.c.l.b16 %v2092
        %v2426 = vunpack.c.h.b16 %v2092
        %v2427 = vunpack.c.l.b16 %v2093
        %v2428 = vunpack.c.h.b16 %v2093
        %v2429 = vunpack.c.l.b16 %v2094
        %v2430 = vunpack.c.h.b16 %v2094
        %v2431 = vunpack.c.l.b16 %v2095
        %v2432 = vunpack.c.h.b16 %v2095
        %v2433 = vunpack.c.l.b16 %v2096
        %v2434 = vunpack.c.h.b16 %v2096
        %v2435 = vunpack.c.l.b16 %v2097
        %v2436 = vunpack.c.h.b16 %v2097
        %v2437 = vunpack.c.l.b16 %v2098
        %v2438 = vunpack.c.h.b16 %v2098
        %v2439 = vunpack.c.l.b16 %v2099
        %v2440 = vunpack.c.h.b16 %v2099
        %v2441 = vunpack.c.l.b16 %v2100
        %v2442 = vunpack.c.h.b16 %v2100
        %v2443 = vunpack.c.l.b16 %v2101
        %v2444 = vunpack.c.h.b16 %v2101
        %v2445 = vunpack.c.l.b16 %v2102
        %v2446 = vunpack.c.h.b16 %v2102
        %v2447 = vunpack.c.l.b16 %v2103
        %v2448 = vunpack.c.h.b16 %v2103
        %v2449 = vunpack.c.l.b16 %v2104
        %v2450 = vunpack.c.h.b16 %v2104
        %v2451 = vunpack.c.l.b16 %v2105
        %v2452 = vunpack.c.h.b16 %v2105
        %v2453 = vunpack.c.l.b16 %v2106
        %v2454 = vunpack.c.h.b16 %v2106
        %v2455 = vunpack.c.l.b16 %v2107
        %v2456 = vunpack.c.h.b16 %v2107
        %v2457 = vunpack.c.l.b16 %v2108
        %v2458 = vunpack.c.h.b16 %v2108
        %v2459 = vunpack.c.l.b16 %v2109
        %v2460 = vunpack.c.h.b16 %v2109
        %v2461 = vunpack.c.l.b16 %v2110
        %v2462 = vunpack.c.h.b16 %v2110
        %v2463 = vunpack.c.l.b16 %v2111
        %v2464 = vunpack.c.h.b16 %v2111
        %v2465 = vunpack.c.l.b16 %v2112
        %v2466 = vunpack.c.h.b16 %v2112
        %v2467 = vunpack.c.l.b16 %v2113
        %v2468 = vunpack.c.h.b16 %v2113
        %v2469 = vunpack.c.l.b16 %v2114
        %v2470 = vunpack.c.h.b16 %v2114
        %v2471 = vunpack.c.l.b16 %v2115
        %v2472 = vunpack.c.h.b16 %v2115
        %v2473 = vunpack.c.l.b16 %v2116
        %v2474 = vunpack.c.h.b16 %v2116
        %v2475 = vunpack.c.l.b16 %v2117
        %v2476 = vunpack.c.h.b16 %v2117
        %v2477 = vunpack.c.l.b16 %v2118
        %v2478 = vunpack.c.h.b16 %v2118
        %v2479 = vunpack.c.l.b16 %v2119
        %v2480 = vunpack.c.h.b16 %v2119
        %v2481 = vunpack.c.l.b16 %v2120
        %v2482 = vunpack.c.h.b16 %v2120
        %v2483 = vunpack.c.l.b16 %v2121
        %v2484 = vunpack.c.h.b16 %v2121
        %v2485 = vunpack.c.l.b16 %v2122
        %v2486 = vunpack.c.h.b16 %v2122
        %v2487 = vunpack.c.l.b16 %v2123
        %v2488 = vunpack.c.h.b16 %v2123
        %v2489 = vunpack.c.l.b16 %v2124
        %v2490 = vunpack.c.h.b16 %v2124
        %v2491 = vunpack.c.l.b16 %v2125
        %v2492 = vunpack.c.h.b16 %v2125
        %v2493 = vunpack.c.l.b16 %v2126
        %v2494 = vunpack.c.h.b16 %v2126
        %v2495 = vunpack.c.l.b16 %v2127
        %v2496 = vunpack.c.h.b16 %v2127
        %v2497 = vunpack.c.l.b16 %v2128
        %v2498 = vunpack.c.h.b16 %v2128
        %v2499 = vunpack.c.l.b16 %v2129
        %v2500 = vunpack.c.h.b16 %v2129
        %v2501 = vunpack.c.l.b16 %v2130
        %v2502 = vunpack.c.h.b16 %v2130
        %v2503 = vunpack.c.l.b16 %v2131
        %v2504 = vunpack.c.h.b16 %v2131
        %v2505 = vunpack.c.l.b16 %v2132
        %v2506 = vunpack.c.h.b16 %v2132
        %v2507 = vunpack.c.l.b16 %v2133
        %v2508 = vunpack.c.h.b16 %v2133
        %v2509 = vunpack.c.l.b16 %v2134
        %v2510 = vunpack.c.h.b16 %v2134
        %v2511 = vunpack.c.l.b16 %v2135
        %v2512 = vunpack.c.h.b16 %v2135
        %v2513 = vunpack.c.l.b16 %v2136
        %v2514 = vunpack.c.h.b16 %v2136
        %v2515 = vunpack.c.l.b16 %v2137
        %v2516 = vunpack.c.h.b16 %v2137
        %v2517 = vunpack.c.l.b16 %v2138
        %v2518 = vunpack.c.h.b16 %v2138
        %v2519 = vunpack.c.l.b16 %v2139
        %v2520 = vunpack.c.h.b16 %v2139
        %v2521 = vunpack.c.l.b16 %v2140
        %v2522 = vunpack.c.h.b16 %v2140
        %v2523 = vunpack.c.l.b16 %v2141
        %v2524 = vunpack.c.h.b16 %v2141
        %v2525 = vunpack.c.l.b16 %v2142
        %v2526 = vunpack.c.h.b16 %v2142
        %v2527 = vunpack.c.l.b16 %v2143
        %v2528 = vunpack.c.h.b16 %v2143
        %v2529 = vunpack.c.l.b16 %v2144
        %v2530 = vunpack.c.h.b16 %v2144
        %v2531 = vunpack.c.l.b16 %v2145
        %v2532 = vunpack.c.h.b16 %v2145
        %v2533 = vunpack.c.l.b16 %v2146
        %v2534 = vunpack.c.h.b16 %v2146
        %v2535 = vunpack.c.l.b16 %v2147
        %v2536 = vunpack.c.h.b16 %v2147
        %v2537 = vunpack.c.l.b16 %v2148
        %v2538 = vunpack.c.h.b16 %v2148
        %v2539 = vunpack.c.l.b16 %v2149
        %v2540 = vunpack.c.h.b16 %v2149
        %v2541 = vunpack.c.l.b16 %v2150
        %v2542 = vunpack.c.h.b16 %v2150
        %v2543 = vunpack.c.l.b16 %v2151
        %v2544 = vunpack.c.h.b16 %v2151
        %v2545 = vunpack.c.l.b16 %v2152
        %v2546 = vunpack.c.h.b16 %v2152
        %v2547 = vunpack.c.l.b16 %v2153
        %v2548 = vunpack.c.h.b16 %v2153
        %v2549 = vunpack.c.l.b16 %v2154
        %v2550 = vunpack.c.h.b16 %v2154
        %v2551 = vunpack.c.l.b16 %v2155
        %v2552 = vunpack.c.h.b16 %v2155
        %v2553 = vunpack.c.l.b16 %v2156
        %v2554 = vunpack.c.h.b16 %v2156
        %v2555 = vunpack.c.l.b16 %v2157
        %v2556 = vunpack.c.h.b16 %v2157
        %v2557 = vunpack.c.l.b16 %v2158
        %v2558 = vunpack.c.h.b16 %v2158
        %v2559 = vunpack.c.l.b16 %v2159
        %v2560 = vunpack.c.h.b16 %v2159
        %v2561 = vunpack.c.l.b16 %v2160
        %v2562 = vunpack.c.h.b16 %v2160
        %v2563 = vunpack.c.l.b16 %v2161
        %v2564 = vunpack.c.h.b16 %v2161
        %v2565 = vunpack.c.l.b16 %v2162
        %v2566 = vunpack.c.h.b16 %v2162
        %v2567 = vunpack.c.l.b16 %v2163
        %v2568 = vunpack.c.h.b16 %v2163
        %v2569 = vunpack.c.l.b16 %v2164
        %v2570 = vunpack.c.h.b16 %v2164
        %v2571 = vunpack.c.l.b16 %v2165
        %v2572 = vunpack.c.h.b16 %v2165
        %v2573 = vunpack.c.l.b16 %v2166
        %v2574 = vunpack.c.h.b16 %v2166
        %v2575 = vunpack.c.l.b16 %v2167
        %v2576 = vunpack.c.h.b16 %v2167
        %v2577 = vunpack.c.l.b16 %v2168
        %v2578 = vunpack.c.h.b16 %v2168
        %v2579 = vunpack.c.l.b16 %v2169
        %v2580 = vunpack.c.h.b16 %v2169
        %v2581 = vunpack.c.l.b16 %v2170
        %v2582 = vunpack.c.h.b16 %v2170
        %v2583 = vunpack.c.l.b16 %v2171
        %v2584 = vunpack.c.h.b16 %v2171
        %v2585 = vunpack.c.l.b16 %v2172
        %v2586 = vunpack.c.h.b16 %v2172
        %v2587 = vunpack.c.l.b16 %v2173
        %v2588 = vunpack.c.h.b16 %v2173
        %v2589 = vunpack.c.l.b16 %v2174
        %v2590 = vunpack.c.h.b16 %v2174
        %v2591 = vunpack.c.l.b16 %v2175
        %v2592 = vunpack.c.h.b16 %v2175
        %v2593 = vunpack.c.l.b16 %v2176
        %v2594 = vunpack.c.h.b16 %v2176
        %v2595 = vunpack.c.l.b16 %v2177
        %v2596 = vunpack.c.h.b16 %v2177
        %v2597 = vunpack.c.l.b16 %v2178
        %v2598 = vunpack.c.h.b16 %v2178
        %v2599 = vpack.c.b16 %v2347, %v2343
        %v2600 = vpack.c.b16 %v2348, %v2344
        %v2601 = vpack.c.b16 %v2349, %v2345
        %v2602 = vpack.c.b16 %v2350, %v2346
        %v2603 = vpack.c.b16 %v2355, %v2351
        %v2604 = vpack.c.b16 %v2356, %v2352
        %v2605 = vpack.c.b16 %v2357, %v2353
        %v2606 = vpack.c.b16 %v2358, %v2354
        %v2607 = vpack.c.b16 %v2363, %v2359
        %v2608 = vpack.c.b16 %v2364, %v2360
        %v2609 = vpack.c.b16 %v2365, %v2361
        %v2610 = vpack.c.b16 %v2366, %v2362
        %v2611 = vpack.c.b16 %v2371, %v2367
        %v2612 = vpack.c.b16 %v2372, %v2368
        %v2613 = vpack.c.b16 %v2373, %v2369
        %v2614 = vpack.c.b16 %v2374, %v2370
        %v2615 = vpack.c.b16 %v2379, %v2375
        %v2616 = vpack.c.b16 %v2380, %v2376
        %v2617 = vpack.c.b16 %v2381, %v2377
        %v2618 = vpack.c.b16 %v2382, %v2378
        %v2619 = vpack.c.b16 %v2387, %v2383
        %v2620 = vpack.c.b16 %v2388, %v2384
        %v2621 = vpack.c.b16 %v2389, %v2385
        %v2622 = vpack.c.b16 %v2390, %v2386
        %v2623 = vpack.c.b16 %v2395, %v2391
        %v2624 = vpack.c.b16 %v2396, %v2392
        %v2625 = vpack.c.b16 %v2397, %v2393
        %v2626 = vpack.c.b16 %v2398, %v2394
        %v2627 = vpack.c.b16 %v2403, %v2399
        %v2628 = vpack.c.b16 %v2404, %v2400
        %v2629 = vpack.c.b16 %v2405, %v2401
        %v2630 = vpack.c.b16 %v2406, %v2402
        %v2631 = vpack.c.b16 %v2411, %v2407
        %v2632 = vpack.c.b16 %v2412, %v2408
        %v2633 = vpack.c.b16 %v2413, %v2409
        %v2634 = vpack.c.b16 %v2414, %v2410
        %v2635 = vpack.c.b16 %v2419, %v2415
        %v2636 = vpack.c.b16 %v2420, %v2416
        %v2637 = vpack.c.b16 %v2421, %v2417
        %v2638 = vpack.c.b16 %v2422, %v2418
        %v2639 = vpack.c.b16 %v2427, %v2423
        %v2640 = vpack.c.b16 %v2428, %v2424
        %v2641 = vpack.c.b16 %v2429, %v2425
        %v2642 = vpack.c.b16 %v2430, %v2426
        %v2643 = vpack.c.b16 %v2435, %v2431
        %v2644 = vpack.c.b16 %v2436, %v2432
        %v2645 = vpack.c.b16 %v2437, %v2433
        %v2646 = vpack.c.b16 %v2438, %v2434
        %v2647 = vpack.c.b16 %v2443, %v2439
        %v2648 = vpack.c.b16 %v2444, %v2440
        %v2649 = vpack.c.b16 %v2445, %v2441
        %v2650 = vpack.c.b16 %v2446, %v2442
        %v2651 = vpack.c.b16 %v2451, %v2447
        %v2652 = vpack.c.b16 %v2452, %v2448
        %v2653 = vpack.c.b16 %v2453, %v2449
        %v2654 = vpack.c.b16 %v2454, %v2450
        %v2655 = vpack.c.b16 %v2459, %v2455
        %v2656 = vpack.c.b16 %v2460, %v2456
        %v2657 = vpack.c.b16 %v2461, %v2457
        %v2658 = vpack.c.b16 %v2462, %v2458
        %v2659 = vpack.c.b16 %v2467, %v2463
        %v2660 = vpack.c.b16 %v2468, %v2464
        %v2661 = vpack.c.b16 %v2469, %v2465
        %v2662 = vpack.c.b16 %v2470, %v2466
        %v2663 = vpack.c.b16 %v2475, %v2471
        %v2664 = vpack.c.b16 %v2476, %v2472
        %v2665 = vpack.c.b16 %v2477, %v2473
        %v2666 = vpack.c.b16 %v2478, %v2474
        %v2667 = vpack.c.b16 %v2483, %v2479
        %v2668 = vpack.c.b16 %v2484, %v2480
        %v2669 = vpack.c.b16 %v2485, %v2481
        %v2670 = vpack.c.b16 %v2486, %v2482
        %v2671 = vpack.c.b16 %v2491, %v2487
        %v2672 = vpack.c.b16 %v2492, %v2488
        %v2673 = vpack.c.b16 %v2493, %v2489
        %v2674 = vpack.c.b16 %v2494, %v2490
        %v2675 = vpack.c.b16 %v2499, %v2495
        %v2676 = vpack.c.b16 %v2500, %v2496
        %v2677 = vpack.c.b16 %v2501, %v2497
        %v2678 = vpack.c.b16 %v2502, %v2498
        %v2679 = vpack.c.b16 %v2507, %v2503
        %v2680 = vpack.c.b16 %v2508, %v2504
        %v2681 = vpack.c.b16 %v2509, %v2505
        %v2682 = vpack.c.b16 %v2510, %v2506
        %v2683 = vpack.c.b16 %v2515, %v2511
        %v2684 = vpack.c.b16 %v2516, %v2512
        %v2685 = vpack.c.b16 %v2517, %v2513
        %v2686 = vpack.c.b16 %v2518, %v2514
        %v2687 = vpack.c.b16 %v2523, %v2519
        %v2688 = vpack.c.b16 %v2524, %v2520
        %v2689 = vpack.c.b16 %v2525, %v2521
        %v2690 = vpack.c.b16 %v2526, %v2522
        %v2691 = vpack.c.b16 %v2531, %v2527
        %v2692 = vpack.c.b16 %v2532, %v2528
        %v2693 = vpack.c.b16 %v2533, %v2529
        %v2694 = vpack.c.b16 %v2534, %v2530
        %v2695 = vpack.c.b16 %v2539, %v2535
        %v2696 = vpack.c.b16 %v2540, %v2536
        %v2697 = vpack.c.b16 %v2541, %v2537
        %v2698 = vpack.c.b16 %v2542, %v2538
        %v2699 = vpack.c.b16 %v2547, %v2543
        %v2700 = vpack.c.b16 %v2548, %v2544
        %v2701 = vpack.c.b16 %v2549, %v2545
        %v2702 = vpack.c.b16 %v2550, %v2546
        %v2703 = vpack.c.b16 %v2555, %v2551
        %v2704 = vpack.c.b16 %v2556, %v2552
        %v2705 = vpack.c.b16 %v2557, %v2553
        %v2706 = vpack.c.b16 %v2558, %v2554
        %v2707 = vpack.c.b16 %v2563, %v2559
        %v2708 = vpack.c.b16 %v2564, %v2560
        %v2709 = vpack.c.b16 %v2565, %v2561
        %v2710 = vpack.c.b16 %v2566, %v2562
        %v2711 = vpack.c.b16 %v2571, %v2567
        %v2712 = vpack.c.b16 %v2572, %v2568
        %v2713 = vpack.c.b16 %v2573, %v2569
        %v2714 = vpack.c.b16 %v2574, %v2570
        %v2715 = vpack.c.b16 %v2579, %v2575
        %v2716 = vpack.c.b16 %v2580, %v2576
        %v2717 = vpack.c.b16 %v2581, %v2577
        %v2718 = vpack.c.b16 %v2582, %v2578
        %v2719 = vpack.c.b16 %v2587, %v2583
        %v2720 = vpack.c.b16 %v2588, %v2584
        %v2721 = vpack.c.b16 %v2589, %v2585
        %v2722 = vpack.c.b16 %v2590, %v2586
        %v2723 = vpack.c.b16 %v2595, %v2591
        %v2724 = vpack.c.b16 %v2596, %v2592
        %v2725 = vpack.c.b16 %v2597, %v2593
        %v2726 = vpack.c.b16 %v2598, %v2594
        %2855 = vmatprep.subr.bf16.mxu0 %v2600
        %2856 = vmatpush1.bf16.msra.mxu0 %v2599
        %2857 = vmatprep.subr.bf16.mxu0 %v2604
        %2858 = vmatpush1.bf16.msra.mxu0 %v2603
        %2859 = vmatprep.subr.bf16.mxu0 %v2608
        %2860 = vmatpush1.bf16.msra.mxu0 %v2607
        %2861 = vmatprep.subr.bf16.mxu0 %v2612
        %2862 = vmatpush1.bf16.msra.mxu0 %v2611
        %2863 = vmatprep.subr.bf16.mxu0 %v2616
        %2864 = vmatpush1.bf16.msra.mxu0 %v2615
        %2865 = vmatprep.subr.bf16.mxu0 %v2620
        %2866 = vmatpush1.bf16.msra.mxu0 %v2619
        %2867 = vmatprep.subr.bf16.mxu0 %v2624
        %2868 = vmatpush1.bf16.msra.mxu0 %v2623
        %2869 = vmatprep.subr.bf16.mxu0 %v2628
        %2870 = vmatpush1.bf16.msra.mxu0 %v2627
        %2871 = vmatprep.subr.bf16.mxu0 %v2632
        %2872 = vmatpush1.bf16.msra.mxu0 %v2631
        %2873 = vmatprep.subr.bf16.mxu0 %v2636
        %2874 = vmatpush1.bf16.msra.mxu0 %v2635
        %2875 = vmatprep.subr.bf16.mxu0 %v2640
        %2876 = vmatpush1.bf16.msra.mxu0 %v2639
        %2877 = vmatprep.subr.bf16.mxu0 %v2644
        %2878 = vmatpush1.bf16.msra.mxu0 %v2643
        %2879 = vmatprep.subr.bf16.mxu0 %v2648
        %2880 = vmatpush1.bf16.msra.mxu0 %v2647
        %2881 = vmatprep.subr.bf16.mxu0 %v2652
        %2882 = vmatpush1.bf16.msra.mxu0 %v2651
        %2883 = vmatprep.subr.bf16.mxu0 %v2656
        %2884 = vmatpush1.bf16.msra.mxu0 %v2655
        %2885 = vmatprep.subr.bf16.mxu0 %v2660
        %2886 = vmatpush1.bf16.msra.mxu0 %v2659
        %2887 = vmatprep.mubr.bf16.mxu0 %v2208
        %2888 = vmatmul.mubr.bf16.gmra.mrb[0].mxu0 %v2207
        %v2889 = vpop.f32.mrb[0].mxu0
        %v2890 = vadd.f32 %v2184, %v2889
        %v2891 = vpop.f32.mrb[0].mxu0
        %v2892 = vadd.f32 %v2188, %v2891
        %v2893 = vpop.f32.mrb[0].mxu0
        %v2894 = vpop.f32.mrb[0].mxu0
        %2895 = vdwg.mxu0
        %2896 = vmatprep.subr.bf16.mxu0 %v2664
        %2897 = vmatpush1.bf16.msra.mxu0 %v2663
        %2898 = vmatprep.subr.bf16.mxu0 %v2668
        %2899 = vmatpush1.bf16.msra.mxu0 %v2667
        %2900 = vmatprep.subr.bf16.mxu0 %v2672
        %2901 = vmatpush1.bf16.msra.mxu0 %v2671
        %2902 = vmatprep.subr.bf16.mxu0 %v2676
        %2903 = vmatpush1.bf16.msra.mxu0 %v2675
        %2904 = vmatprep.subr.bf16.mxu0 %v2680
        %2905 = vmatpush1.bf16.msra.mxu0 %v2679
        %2906 = vmatprep.subr.bf16.mxu0 %v2684
        %2907 = vmatpush1.bf16.msra.mxu0 %v2683
        %2908 = vmatprep.subr.bf16.mxu0 %v2688
        %2909 = vmatpush1.bf16.msra.mxu0 %v2687
        %2910 = vmatprep.subr.bf16.mxu0 %v2692
        %2911 = vmatpush1.bf16.msra.mxu0 %v2691
        %2912 = vmatprep.subr.bf16.mxu0 %v2696
        %2913 = vmatpush1.bf16.msra.mxu0 %v2695
        %2914 = vmatprep.subr.bf16.mxu0 %v2700
        %2915 = vmatpush1.bf16.msra.mxu0 %v2699
        %2916 = vmatprep.subr.bf16.mxu0 %v2704
        %2917 = vmatpush1.bf16.msra.mxu0 %v2703
        %2918 = vmatprep.subr.bf16.mxu0 %v2708
        %2919 = vmatpush1.bf16.msra.mxu0 %v2707
        %2920 = vmatprep.subr.bf16.mxu0 %v2712
        %2921 = vmatpush1.bf16.msra.mxu0 %v2711
        %2922 = vmatprep.subr.bf16.mxu0 %v2716
        %2923 = vmatpush1.bf16.msra.mxu0 %v2715
        %2924 = vmatprep.subr.bf16.mxu0 %v2720
        %2925 = vmatpush1.bf16.msra.mxu0 %v2719
        %2926 = vmatprep.subr.bf16.mxu0 %v2724
        %2927 = vmatpush1.bf16.msra.mxu0 %v2723
        %2928 = vmatprep.mubr.bf16.mxu0 %v2210
        %2929 = vmatmul.mubr.bf16.gmra.mrb[0].mxu0 %v2209
        %v2930 = vpop.f32.mrb[0].mxu0
        %v2931 = vadd.f32 %v2890, %v2930
        %v2932 = vpop.f32.mrb[0].mxu0
        %v2933 = vadd.f32 %v2892, %v2932
        %v2934 = vpop.f32.mrb[0].mxu0
        %v2935 = vpop.f32.mrb[0].mxu0
        %2936 = vdwg.mxu0
        %2937 = vmatprep.subr.bf16.mxu0 %v2602
        %2938 = vmatpush1.bf16.msra.mxu0 %v2601
        %2939 = vmatprep.subr.bf16.mxu0 %v2606
        %2940 = vmatpush1.bf16.msra.mxu0 %v2605
        %2941 = vmatprep.subr.bf16.mxu0 %v2610
        %2942 = vmatpush1.bf16.msra.mxu0 %v2609
        %2943 = vmatprep.subr.bf16.mxu0 %v2614
        %2944 = vmatpush1.bf16.msra.mxu0 %v2613
        %2945 = vmatprep.subr.bf16.mxu0 %v2618
        %2946 = vmatpush1.bf16.msra.mxu0 %v2617
        %2947 = vmatprep.subr.bf16.mxu0 %v2622
        %2948 = vmatpush1.bf16.msra.mxu0 %v2621
        %2949 = vmatprep.subr.bf16.mxu0 %v2626
        %2950 = vmatpush1.bf16.msra.mxu0 %v2625
        %2951 = vmatprep.subr.bf16.mxu0 %v2630
        %2952 = vmatpush1.bf16.msra.mxu0 %v2629
        %2953 = vmatprep.subr.bf16.mxu0 %v2634
        %2954 = vmatpush1.bf16.msra.mxu0 %v2633
        %2955 = vmatprep.subr.bf16.mxu0 %v2638
        %2956 = vmatpush1.bf16.msra.mxu0 %v2637
        %2957 = vmatprep.subr.bf16.mxu0 %v2642
        %2958 = vmatpush1.bf16.msra.mxu0 %v2641
        %2959 = vmatprep.subr.bf16.mxu0 %v2646
        %2960 = vmatpush1.bf16.msra.mxu0 %v2645
        %2961 = vmatprep.subr.bf16.mxu0 %v2650
        %2962 = vmatpush1.bf16.msra.mxu0 %v2649
        %2963 = vmatprep.subr.bf16.mxu0 %v2654
        %2964 = vmatpush1.bf16.msra.mxu0 %v2653
        %2965 = vmatprep.subr.bf16.mxu0 %v2658
        %2966 = vmatpush1.bf16.msra.mxu0 %v2657
        %2967 = vmatprep.subr.bf16.mxu0 %v2662
        %2968 = vmatpush1.bf16.msra.mxu0 %v2661
        %2969 = vmatprep.mubr.bf16.mxu0 %v2208
        %2970 = vmatmul.mubr.bf16.gmra.mrb[0].mxu0 %v2207
        %v2971 = vpop.f32.mrb[0].mxu0
        %v2972 = vadd.f32 %v2192, %v2971
        %v2973 = vpop.f32.mrb[0].mxu0
        %v2974 = vadd.f32 %v2196, %v2973
        %v2975 = vpop.f32.mrb[0].mxu0
        %v2976 = vpop.f32.mrb[0].mxu0
        %2977 = vdwg.mxu0
        %2978 = vmatprep.subr.bf16.mxu0 %v2666
        %2979 = vmatpush1.bf16.msra.mxu0 %v2665
        %2980 = vmatprep.subr.bf16.mxu0 %v2670
        %2981 = vmatpush1.bf16.msra.mxu0 %v2669
        %2982 = vmatprep.subr.bf16.mxu0 %v2674
        %2983 = vmatpush1.bf16.msra.mxu0 %v2673
        %2984 = vmatprep.subr.bf16.mxu0 %v2678
        %2985 = vmatpush1.bf16.msra.mxu0 %v2677
        %2986 = vmatprep.subr.bf16.mxu0 %v2682
        %2987 = vmatpush1.bf16.msra.mxu0 %v2681
        %2988 = vmatprep.subr.bf16.mxu0 %v2686
        %2989 = vmatpush1.bf16.msra.mxu0 %v2685
        %2990 = vmatprep.subr.bf16.mxu0 %v2690
        %2991 = vmatpush1.bf16.msra.mxu0 %v2689
        %2992 = vmatprep.subr.bf16.mxu0 %v2694
        %2993 = vmatpush1.bf16.msra.mxu0 %v2693
        %2994 = vmatprep.subr.bf16.mxu0 %v2698
        %2995 = vmatpush1.bf16.msra.mxu0 %v2697
        %2996 = vmatprep.subr.bf16.mxu0 %v2702
        %2997 = vmatpush1.bf16.msra.mxu0 %v2701
        %2998 = vmatprep.subr.bf16.mxu0 %v2706
        %2999 = vmatpush1.bf16.msra.mxu0 %v2705
        %3000 = vmatprep.subr.bf16.mxu0 %v2710
        %3001 = vmatpush1.bf16.msra.mxu0 %v2709
        %3002 = vmatprep.subr.bf16.mxu0 %v2714
        %3003 = vmatpush1.bf16.msra.mxu0 %v2713
        %3004 = vmatprep.subr.bf16.mxu0 %v2718
        %3005 = vmatpush1.bf16.msra.mxu0 %v2717
        %3006 = vmatprep.subr.bf16.mxu0 %v2722
        %3007 = vmatpush1.bf16.msra.mxu0 %v2721
        %3008 = vmatprep.subr.bf16.mxu0 %v2726
        %3009 = vmatpush1.bf16.msra.mxu0 %v2725
        %3010 = vmatprep.mubr.bf16.mxu0 %v2210
        %3011 = vmatmul.mubr.bf16.gmra.mrb[0].mxu0 %v2209
        %v3012 = vpop.f32.mrb[0].mxu0
        %v3013 = vadd.f32 %v2972, %v3012
        %v3014 = vpop.f32.mrb[0].mxu0
        %v3015 = vadd.f32 %v2974, %v3014
        %v3016 = vpop.f32.mrb[0].mxu0
        %v3017 = vpop.f32.mrb[0].mxu0
        %3018 = vdwg.mxu0
        %v3019 = vmax.f32 %v2931, 0.0
        %v3020 = vmax.f32 %v2933, 0.0
        %v3021 = vmax.f32 %v3013, 0.0
        %v3022 = vmax.f32 %v3015, 0.0
        %v3023 = vpack.c.bf16 %v3019, %v3019
        %v3024 = vpack.c.bf16 %v3020, %v3020
        %v3025 = vpack.c.bf16 %v3021, %v3021
        %v3026 = vpack.c.bf16 %v3022, %v3022
        %v3027 = vld [vmem:[%s7] sm:$0xff]
        %v3028 = vld [vmem:[%s7 + $0x8] sm:$0xff]
        %v3029 = vld [vmem:[%s7 + $0x10] sm:$0xff]
        %v3030 = vld [vmem:[%s7 + $0x18] sm:$0xff]
        %v3031 = vld [vmem:[%s7 + $0x20] sm:$0xff]
        %v3032 = vld [vmem:[%s7 + $0x28] sm:$0xff]
        %v3033 = vld [vmem:[%s7 + $0x30] sm:$0xff]
        %v3034 = vld [vmem:[%s7 + $0x38] sm:$0xff]
        %v3035 = vld [vmem:[%s7 + $0x40] sm:$0xff]
        %v3036 = vld [vmem:[%s7 + $0x48] sm:$0xff]
        %v3037 = vld [vmem:[%s7 + $0x50] sm:$0xff]
        %v3038 = vld [vmem:[%s7 + $0x58] sm:$0xff]
        %v3039 = vld [vmem:[%s7 + $0x60] sm:$0xff]
        %v3040 = vld [vmem:[%s7 + $0x68] sm:$0xff]
        %v3041 = vld [vmem:[%s7 + $0x70] sm:$0xff]
        %v3042 = vld [vmem:[%s7 + $0x78] sm:$0xff]
        %v3043 = vld [vmem:[%s7 + $0x80] sm:$0xff]
        %v3044 = vld [vmem:[%s7 + $0x88] sm:$0xff]
        %v3045 = vld [vmem:[%s7 + $0x90] sm:$0xff]
        %v3046 = vld [vmem:[%s7 + $0x98] sm:$0xff]
        %v3047 = vld [vmem:[%s7 + $0xa0] sm:$0xff]
        %v3048 = vld [vmem:[%s7 + $0xa8] sm:$0xff]
        %v3049 = vld [vmem:[%s7 + $0xb0] sm:$0xff]
        %v3050 = vld [vmem:[%s7 + $0xb8] sm:$0xff]
        %v3051 = vld [vmem:[%s7 + $0xc0] sm:$0xff]
        %v3052 = vld [vmem:[%s7 + $0xc8] sm:$0xff]
        %v3053 = vld [vmem:[%s7 + $0xd0] sm:$0xff]
        %v3054 = vld [vmem:[%s7 + $0xd8] sm:$0xff]
        %v3055 = vld [vmem:[%s7 + $0xe0] sm:$0xff]
        %v3056 = vld [vmem:[%s7 + $0xe8] sm:$0xff]
        %v3057 = vld [vmem:[%s7 + $0xf0] sm:$0xff]
        %v3058 = vld [vmem:[%s7 + $0xf8] sm:$0xff]
        %v3059 = vld [vmem:[%s7 + $0x100] sm:$0xff]
        %v3060 = vld [vmem:[%s7 + $0x108] sm:$0xff]
        %v3061 = vld [vmem:[%s7 + $0x110] sm:$0xff]
        %v3062 = vld [vmem:[%s7 + $0x118] sm:$0xff]
        %v3063 = vld [vmem:[%s7 + $0x120] sm:$0xff]
        %v3064 = vld [vmem:[%s7 + $0x128] sm:$0xff]
        %v3065 = vld [vmem:[%s7 + $0x130] sm:$0xff]
        %v3066 = vld [vmem:[%s7 + $0x138] sm:$0xff]
        %v3067 = vld [vmem:[%s7 + $0x140] sm:$0xff]
        %v3068 = vld [vmem:[%s7 + $0x148] sm:$0xff]
        %v3069 = vld [vmem:[%s7 + $0x150] sm:$0xff]
        %v3070 = vld [vmem:[%s7 + $0x158] sm:$0xff]
        %v3071 = vld [vmem:[%s7 + $0x160] sm:$0xff]
        %v3072 = vld [vmem:[%s7 + $0x168] sm:$0xff]
        %v3073 = vld [vmem:[%s7 + $0x170] sm:$0xff]
        %v3074 = vld [vmem:[%s7 + $0x178] sm:$0xff]
        %v3075 = vld [vmem:[%s7 + $0x180] sm:$0xff]
        %v3076 = vld [vmem:[%s7 + $0x188] sm:$0xff]
        %v3077 = vld [vmem:[%s7 + $0x190] sm:$0xff]
        %v3078 = vld [vmem:[%s7 + $0x198] sm:$0xff]
        %v3079 = vld [vmem:[%s7 + $0x1a0] sm:$0xff]
        %v3080 = vld [vmem:[%s7 + $0x1a8] sm:$0xff]
        %v3081 = vld [vmem:[%s7 + $0x1b0] sm:$0xff]
        %v3082 = vld [vmem:[%s7 + $0x1b8] sm:$0xff]
        %v3083 = vld [vmem:[%s7 + $0x1c0] sm:$0xff]
        %v3084 = vld [vmem:[%s7 + $0x1c8] sm:$0xff]
        %v3085 = vld [vmem:[%s7 + $0x1d0] sm:$0xff]
        %v3086 = vld [vmem:[%s7 + $0x1d8] sm:$0xff]
        %v3087 = vld [vmem:[%s7 + $0x1e0] sm:$0xff]
        %v3088 = vld [vmem:[%s7 + $0x1e8] sm:$0xff]
        %v3089 = vld [vmem:[%s7 + $0x1f0] sm:$0xff]
        %v3090 = vld [vmem:[%s7 + $0x1f8] sm:$0xff]
        %v3091 = vld [vmem:[%s8] sm:$0x3]
        %v3093 = vlaneseq
        %v3094 = vshrl.u32 %v3093, 7
        %v3095 = vsub.s32 0, %v3094
        %v3096 = vrot.slane %v3091, %v3095
        %v3097 = vlaneseq
        %v3098 = vshrl.u32 %v3097, 7
        %v3099 = vsub.s32 1, %v3098
        %v3100 = vrot.slane %v3091, %v3099
        %v3167 = vunpack.c.l.b16 %v3027
        %v3168 = vunpack.c.h.b16 %v3027
        %v3169 = vunpack.c.l.b16 %v3028
        %v3170 = vunpack.c.h.b16 %v3028
        %v3171 = vunpack.c.l.b16 %v3029
        %v3172 = vunpack.c.h.b16 %v3029
        %v3173 = vunpack.c.l.b16 %v3030
        %v3174 = vunpack.c.h.b16 %v3030
        %v3175 = vunpack.c.l.b16 %v3031
        %v3176 = vunpack.c.h.b16 %v3031
        %v3177 = vunpack.c.l.b16 %v3032
        %v3178 = vunpack.c.h.b16 %v3032
        %v3179 = vunpack.c.l.b16 %v3033
        %v3180 = vunpack.c.h.b16 %v3033
        %v3181 = vunpack.c.l.b16 %v3034
        %v3182 = vunpack.c.h.b16 %v3034
        %v3183 = vunpack.c.l.b16 %v3035
        %v3184 = vunpack.c.h.b16 %v3035
        %v3185 = vunpack.c.l.b16 %v3036
        %v3186 = vunpack.c.h.b16 %v3036
        %v3187 = vunpack.c.l.b16 %v3037
        %v3188 = vunpack.c.h.b16 %v3037
        %v3189 = vunpack.c.l.b16 %v3038
        %v3190 = vunpack.c.h.b16 %v3038
        %v3191 = vunpack.c.l.b16 %v3039
        %v3192 = vunpack.c.h.b16 %v3039
        %v3193 = vunpack.c.l.b16 %v3040
        %v3194 = vunpack.c.h.b16 %v3040
        %v3195 = vunpack.c.l.b16 %v3041
        %v3196 = vunpack.c.h.b16 %v3041
        %v3197 = vunpack.c.l.b16 %v3042
        %v3198 = vunpack.c.h.b16 %v3042
        %v3199 = vunpack.c.l.b16 %v3043
        %v3200 = vunpack.c.h.b16 %v3043
        %v3201 = vunpack.c.l.b16 %v3044
        %v3202 = vunpack.c.h.b16 %v3044
        %v3203 = vunpack.c.l.b16 %v3045
        %v3204 = vunpack.c.h.b16 %v3045
        %v3205 = vunpack.c.l.b16 %v3046
        %v3206 = vunpack.c.h.b16 %v3046
        %v3207 = vunpack.c.l.b16 %v3047
        %v3208 = vunpack.c.h.b16 %v3047
        %v3209 = vunpack.c.l.b16 %v3048
        %v3210 = vunpack.c.h.b16 %v3048
        %v3211 = vunpack.c.l.b16 %v3049
        %v3212 = vunpack.c.h.b16 %v3049
        %v3213 = vunpack.c.l.b16 %v3050
        %v3214 = vunpack.c.h.b16 %v3050
        %v3215 = vunpack.c.l.b16 %v3051
        %v3216 = vunpack.c.h.b16 %v3051
        %v3217 = vunpack.c.l.b16 %v3052
        %v3218 = vunpack.c.h.b16 %v3052
        %v3219 = vunpack.c.l.b16 %v3053
        %v3220 = vunpack.c.h.b16 %v3053
        %v3221 = vunpack.c.l.b16 %v3054
        %v3222 = vunpack.c.h.b16 %v3054
        %v3223 = vunpack.c.l.b16 %v3055
        %v3224 = vunpack.c.h.b16 %v3055
        %v3225 = vunpack.c.l.b16 %v3056
        %v3226 = vunpack.c.h.b16 %v3056
        %v3227 = vunpack.c.l.b16 %v3057
        %v3228 = vunpack.c.h.b16 %v3057
        %v3229 = vunpack.c.l.b16 %v3058
        %v3230 = vunpack.c.h.b16 %v3058
        %v3231 = vunpack.c.l.b16 %v3059
        %v3232 = vunpack.c.h.b16 %v3059
        %v3233 = vunpack.c.l.b16 %v3060
        %v3234 = vunpack.c.h.b16 %v3060
        %v3235 = vunpack.c.l.b16 %v3061
        %v3236 = vunpack.c.h.b16 %v3061
        %v3237 = vunpack.c.l.b16 %v3062
        %v3238 = vunpack.c.h.b16 %v3062
        %v3239 = vunpack.c.l.b16 %v3063
        %v3240 = vunpack.c.h.b16 %v3063
        %v3241 = vunpack.c.l.b16 %v3064
        %v3242 = vunpack.c.h.b16 %v3064
        %v3243 = vunpack.c.l.b16 %v3065
        %v3244 = vunpack.c.h.b16 %v3065
        %v3245 = vunpack.c.l.b16 %v3066
        %v3246 = vunpack.c.h.b16 %v3066
        %v3247 = vunpack.c.l.b16 %v3067
        %v3248 = vunpack.c.h.b16 %v3067
        %v3249 = vunpack.c.l.b16 %v3068
        %v3250 = vunpack.c.h.b16 %v3068
        %v3251 = vunpack.c.l.b16 %v3069
        %v3252 = vunpack.c.h.b16 %v3069
        %v3253 = vunpack.c.l.b16 %v3070
        %v3254 = vunpack.c.h.b16 %v3070
        %v3255 = vunpack.c.l.b16 %v3071
        %v3256 = vunpack.c.h.b16 %v3071
        %v3257 = vunpack.c.l.b16 %v3072
        %v3258 = vunpack.c.h.b16 %v3072
        %v3259 = vunpack.c.l.b16 %v3073
        %v3260 = vunpack.c.h.b16 %v3073
        %v3261 = vunpack.c.l.b16 %v3074
        %v3262 = vunpack.c.h.b16 %v3074
        %v3263 = vunpack.c.l.b16 %v3075
        %v3264 = vunpack.c.h.b16 %v3075
        %v3265 = vunpack.c.l.b16 %v3076
        %v3266 = vunpack.c.h.b16 %v3076
        %v3267 = vunpack.c.l.b16 %v3077
        %v3268 = vunpack.c.h.b16 %v3077
        %v3269 = vunpack.c.l.b16 %v3078
        %v3270 = vunpack.c.h.b16 %v3078
        %v3271 = vunpack.c.l.b16 %v3079
        %v3272 = vunpack.c.h.b16 %v3079
        %v3273 = vunpack.c.l.b16 %v3080
        %v3274 = vunpack.c.h.b16 %v3080
        %v3275 = vunpack.c.l.b16 %v3081
        %v3276 = vunpack.c.h.b16 %v3081
        %v3277 = vunpack.c.l.b16 %v3082
        %v3278 = vunpack.c.h.b16 %v3082
        %v3279 = vunpack.c.l.b16 %v3083
        %v3280 = vunpack.c.h.b16 %v3083
        %v3281 = vunpack.c.l.b16 %v3084
        %v3282 = vunpack.c.h.b16 %v3084
        %v3283 = vunpack.c.l.b16 %v3085
        %v3284 = vunpack.c.h.b16 %v3085
        %v3285 = vunpack.c.l.b16 %v3086
        %v3286 = vunpack.c.h.b16 %v3086
        %v3287 = vunpack.c.l.b16 %v3087
        %v3288 = vunpack.c.h.b16 %v3087
        %v3289 = vunpack.c.l.b16 %v3088
        %v3290 = vunpack.c.h.b16 %v3088
        %v3291 = vunpack.c.l.b16 %v3089
        %v3292 = vunpack.c.h.b16 %v3089
        %v3293 = vunpack.c.l.b16 %v3090
        %v3294 = vunpack.c.h.b16 %v3090
        %v3295 = vpack.c.b16 %v3169, %v3167
        %v3296 = vpack.c.b16 %v3170, %v3168
        %v3297 = vpack.c.b16 %v3173, %v3171
        %v3298 = vpack.c.b16 %v3174, %v3172
        %v3299 = vpack.c.b16 %v3177, %v3175
        %v3300 = vpack.c.b16 %v3178, %v3176
        %v3301 = vpack.c.b16 %v3181, %v3179
        %v3302 = vpack.c.b16 %v3182, %v3180
        %v3303 = vpack.c.b16 %v3185, %v3183
        %v3304 = vpack.c.b16 %v3186, %v3184
        %v3305 = vpack.c.b16 %v3189, %v3187
        %v3306 = vpack.c.b16 %v3190, %v3188
        %v3307 = vpack.c.b16 %v3193, %v3191
        %v3308 = vpack.c.b16 %v3194, %v3192
        %v3309 = vpack.c.b16 %v3197, %v3195
        %v3310 = vpack.c.b16 %v3198, %v3196
        %v3311 = vpack.c.b16 %v3201, %v3199
        %v3312 = vpack.c.b16 %v3202, %v3200
        %v3313 = vpack.c.b16 %v3205, %v3203
        %v3314 = vpack.c.b16 %v3206, %v3204
        %v3315 = vpack.c.b16 %v3209, %v3207
        %v3316 = vpack.c.b16 %v3210, %v3208
        %v3317 = vpack.c.b16 %v3213, %v3211
        %v3318 = vpack.c.b16 %v3214, %v3212
        %v3319 = vpack.c.b16 %v3217, %v3215
        %v3320 = vpack.c.b16 %v3218, %v3216
        %v3321 = vpack.c.b16 %v3221, %v3219
        %v3322 = vpack.c.b16 %v3222, %v3220
        %v3323 = vpack.c.b16 %v3225, %v3223
        %v3324 = vpack.c.b16 %v3226, %v3224
        %v3325 = vpack.c.b16 %v3229, %v3227
        %v3326 = vpack.c.b16 %v3230, %v3228
        %v3327 = vpack.c.b16 %v3233, %v3231
        %v3328 = vpack.c.b16 %v3234, %v3232
        %v3329 = vpack.c.b16 %v3237, %v3235
        %v3330 = vpack.c.b16 %v3238, %v3236
        %v3331 = vpack.c.b16 %v3241, %v3239
        %v3332 = vpack.c.b16 %v3242, %v3240
        %v3333 = vpack.c.b16 %v3245, %v3243
        %v3334 = vpack.c.b16 %v3246, %v3244
        %v3335 = vpack.c.b16 %v3249, %v3247
        %v3336 = vpack.c.b16 %v3250, %v3248
        %v3337 = vpack.c.b16 %v3253, %v3251
        %v3338 = vpack.c.b16 %v3254, %v3252
        %v3339 = vpack.c.b16 %v3257, %v3255
        %v3340 = vpack.c.b16 %v3258, %v3256
        %v3341 = vpack.c.b16 %v3261, %v3259
        %v3342 = vpack.c.b16 %v3262, %v3260
        %v3343 = vpack.c.b16 %v3265, %v3263
        %v3344 = vpack.c.b16 %v3266, %v3264
        %v3345 = vpack.c.b16 %v3269, %v3267
        %v3346 = vpack.c.b16 %v3270, %v3268
        %v3347 = vpack.c.b16 %v3273, %v3271
        %v3348 = vpack.c.b16 %v3274, %v3272
        %v3349 = vpack.c.b16 %v3277, %v3275
        %v3350 = vpack.c.b16 %v3278, %v3276
        %v3351 = vpack.c.b16 %v3281, %v3279
        %v3352 = vpack.c.b16 %v3282, %v3280
        %v3353 = vpack.c.b16 %v3285, %v3283
        %v3354 = vpack.c.b16 %v3286, %v3284
        %v3355 = vpack.c.b16 %v3289, %v3287
        %v3356 = vpack.c.b16 %v3290, %v3288
        %v3357 = vpack.c.b16 %v3293, %v3291
        %v3358 = vpack.c.b16 %v3294, %v3292
        %3423 = vmatprep.subr.bf16.mxu0 %v3296
        %3424 = vmatpush1.bf16.msra.mxu0 %v3295
        %3425 = vmatprep.subr.bf16.mxu0 %v3298
        %3426 = vmatpush1.bf16.msra.mxu0 %v3297
        %3427 = vmatprep.subr.bf16.mxu0 %v3300
        %3428 = vmatpush1.bf16.msra.mxu0 %v3299
        %3429 = vmatprep.subr.bf16.mxu0 %v3302
        %3430 = vmatpush1.bf16.msra.mxu0 %v3301
        %3431 = vmatprep.subr.bf16.mxu0 %v3304
        %3432 = vmatpush1.bf16.msra.mxu0 %v3303
        %3433 = vmatprep.subr.bf16.mxu0 %v3306
        %3434 = vmatpush1.bf16.msra.mxu0 %v3305
        %3435 = vmatprep.subr.bf16.mxu0 %v3308
        %3436 = vmatpush1.bf16.msra.mxu0 %v3307
        %3437 = vmatprep.subr.bf16.mxu0 %v3310
        %3438 = vmatpush1.bf16.msra.mxu0 %v3309
        %3439 = vmatprep.subr.bf16.mxu0 %v3312
        %3440 = vmatpush1.bf16.msra.mxu0 %v3311
        %3441 = vmatprep.subr.bf16.mxu0 %v3314
        %3442 = vmatpush1.bf16.msra.mxu0 %v3313
        %3443 = vmatprep.subr.bf16.mxu0 %v3316
        %3444 = vmatpush1.bf16.msra.mxu0 %v3315
        %3445 = vmatprep.subr.bf16.mxu0 %v3318
        %3446 = vmatpush1.bf16.msra.mxu0 %v3317
        %3447 = vmatprep.subr.bf16.mxu0 %v3320
        %3448 = vmatpush1.bf16.msra.mxu0 %v3319
        %3449 = vmatprep.subr.bf16.mxu0 %v3322
        %3450 = vmatpush1.bf16.msra.mxu0 %v3321
        %3451 = vmatprep.subr.bf16.mxu0 %v3324
        %3452 = vmatpush1.bf16.msra.mxu0 %v3323
        %3453 = vmatprep.subr.bf16.mxu0 %v3326
        %3454 = vmatpush1.bf16.msra.mxu0 %v3325
        %3455 = vmatprep.mubr.bf16.mxu0 %v3024
        %3456 = vmatmul.mubr.bf16.gmra.mrb[0].mxu0 %v3023
        %v3457 = vpop.f32.mrb[0].mxu0
        %v3458 = vadd.f32 %v3096, %v3457
        %v3459 = vpop.f32.mrb[0].mxu0
        %v3460 = vadd.f32 %v3100, %v3459
        %v3461 = vpop.f32.mrb[0].mxu0
        %v3462 = vpop.f32.mrb[0].mxu0
        %3463 = vdwg.mxu0
        %3464 = vmatprep.subr.bf16.mxu0 %v3328
        %3465 = vmatpush1.bf16.msra.mxu0 %v3327
        %3466 = vmatprep.subr.bf16.mxu0 %v3330
        %3467 = vmatpush1.bf16.msra.mxu0 %v3329
        %3468 = vmatprep.subr.bf16.mxu0 %v3332
        %3469 = vmatpush1.bf16.msra.mxu0 %v3331
        %3470 = vmatprep.subr.bf16.mxu0 %v3334
        %3471 = vmatpush1.bf16.msra.mxu0 %v3333
        %3472 = vmatprep.subr.bf16.mxu0 %v3336
        %3473 = vmatpush1.bf16.msra.mxu0 %v3335
        %3474 = vmatprep.subr.bf16.mxu0 %v3338
        %3475 = vmatpush1.bf16.msra.mxu0 %v3337
        %3476 = vmatprep.subr.bf16.mxu0 %v3340
        %3477 = vmatpush1.bf16.msra.mxu0 %v3339
        %3478 = vmatprep.subr.bf16.mxu0 %v3342
        %3479 = vmatpush1.bf16.msra.mxu0 %v3341
        %3480 = vmatprep.subr.bf16.mxu0 %v3344
        %3481 = vmatpush1.bf16.msra.mxu0 %v3343
        %3482 = vmatprep.subr.bf16.mxu0 %v3346
        %3483 = vmatpush1.bf16.msra.mxu0 %v3345
        %3484 = vmatprep.subr.bf16.mxu0 %v3348
        %3485 = vmatpush1.bf16.msra.mxu0 %v3347
        %3486 = vmatprep.subr.bf16.mxu0 %v3350
        %3487 = vmatpush1.bf16.msra.mxu0 %v3349
        %3488 = vmatprep.subr.bf16.mxu0 %v3352
        %3489 = vmatpush1.bf16.msra.mxu0 %v3351
        %3490 = vmatprep.subr.bf16.mxu0 %v3354
        %3491 = vmatpush1.bf16.msra.mxu0 %v3353
        %3492 = vmatprep.subr.bf16.mxu0 %v3356
        %3493 = vmatpush1.bf16.msra.mxu0 %v3355
        %3494 = vmatprep.subr.bf16.mxu0 %v3358
        %3495 = vmatpush1.bf16.msra.mxu0 %v3357
        %3496 = vmatprep.mubr.bf16.mxu0 %v3026
        %3497 = vmatmul.mubr.bf16.gmra.mrb[0].mxu0 %v3025
        %v3498 = vpop.f32.mrb[0].mxu0
        %v3499 = vadd.f32 %v3458, %v3498
        %v3500 = vpop.f32.mrb[0].mxu0
        %v3501 = vadd.f32 %v3460, %v3500
        %v3502 = vpop.f32.mrb[0].mxu0
        %v3503 = vpop.f32.mrb[0].mxu0
        %3504 = vdwg.mxu0
        %v3505 = vmax.f32 %v3499, 0.0
        %v3506 = vmax.f32 %v3501, 0.0
        %v3507 = vpack.c.bf16 %v3505, %v3505
        %v3508 = vpack.c.bf16 %v3506, %v3506
        %v3509 = vld [vmem:[#allocation12] sm:$0xf]
        %v3510 = vld [vmem:[#allocation12 + $0x4] sm:$0xf]
        %v3511 = vld [vmem:[#allocation12 + $0x8] sm:$0xf]
        %v3512 = vld [vmem:[#allocation12 + $0xc] sm:$0xf]
        %v3513 = vld [vmem:[#allocation12 + $0x10] sm:$0xf]
        %v3514 = vld [vmem:[#allocation12 + $0x14] sm:$0xf]
        %v3515 = vld [vmem:[#allocation12 + $0x18] sm:$0xf]
        %v3516 = vld [vmem:[#allocation12 + $0x1c] sm:$0xf]
        %v3517 = vld [vmem:[#allocation12 + $0x20] sm:$0xf]
        %v3518 = vld [vmem:[#allocation12 + $0x24] sm:$0xf]
        %v3519 = vld [vmem:[#allocation12 + $0x28] sm:$0xf]
        %v3520 = vld [vmem:[#allocation12 + $0x2c] sm:$0xf]
        %v3521 = vld [vmem:[#allocation12 + $0x30] sm:$0xf]
        %v3522 = vld [vmem:[#allocation12 + $0x34] sm:$0xf]
        %v3523 = vld [vmem:[#allocation12 + $0x38] sm:$0xf]
        %v3524 = vld [vmem:[#allocation12 + $0x3c] sm:$0xf]
        %v3525 = vld [vmem:[#allocation12 + $0x40] sm:$0xf]
        %v3526 = vld [vmem:[#allocation12 + $0x44] sm:$0xf]
        %v3527 = vld [vmem:[#allocation12 + $0x48] sm:$0xf]
        %v3528 = vld [vmem:[#allocation12 + $0x4c] sm:$0xf]
        %v3529 = vld [vmem:[#allocation12 + $0x50] sm:$0xf]
        %v3530 = vld [vmem:[#allocation12 + $0x54] sm:$0xf]
        %v3531 = vld [vmem:[#allocation12 + $0x58] sm:$0xf]
        %v3532 = vld [vmem:[#allocation12 + $0x5c] sm:$0xf]
        %v3533 = vld [vmem:[#allocation12 + $0x60] sm:$0xf]
        %v3534 = vld [vmem:[#allocation12 + $0x64] sm:$0xf]
        %v3535 = vld [vmem:[#allocation12 + $0x68] sm:$0xf]
        %v3536 = vld [vmem:[#allocation12 + $0x6c] sm:$0xf]
        %v3537 = vld [vmem:[#allocation12 + $0x70] sm:$0xf]
        %v3538 = vld [vmem:[#allocation12 + $0x74] sm:$0xf]
        %v3539 = vld [vmem:[#allocation12 + $0x78] sm:$0xf]
        %v3540 = vld [vmem:[#allocation12 + $0x7c] sm:$0xf]
        %v3541 = vld [vmem:[%s10] sm:$0x1]
        %v3543 = vlaneseq
        %v3544 = vshrl.u32 %v3543, 7
        %v3545 = vsub.s32 0, %v3544
        %v3546 = vrot.slane %v3541, %v3545
        %v3580 = vunpack.c.l.b16 %v3509
        %v3581 = vunpack.c.l.b16 %v3510
        %v3582 = vunpack.c.l.b16 %v3511
        %v3583 = vunpack.c.l.b16 %v3512
        %v3584 = vunpack.c.l.b16 %v3513
        %v3585 = vunpack.c.l.b16 %v3514
        %v3586 = vunpack.c.l.b16 %v3515
        %v3587 = vunpack.c.l.b16 %v3516
        %v3588 = vunpack.c.l.b16 %v3517
        %v3589 = vunpack.c.l.b16 %v3518
        %v3590 = vunpack.c.l.b16 %v3519
        %v3591 = vunpack.c.l.b16 %v3520
        %v3592 = vunpack.c.l.b16 %v3521
        %v3593 = vunpack.c.l.b16 %v3522
        %v3594 = vunpack.c.l.b16 %v3523
        %v3595 = vunpack.c.l.b16 %v3524
        %v3596 = vunpack.c.l.b16 %v3525
        %v3597 = vunpack.c.l.b16 %v3526
        %v3598 = vunpack.c.l.b16 %v3527
        %v3599 = vunpack.c.l.b16 %v3528
        %v3600 = vunpack.c.l.b16 %v3529
        %v3601 = vunpack.c.l.b16 %v3530
        %v3602 = vunpack.c.l.b16 %v3531
        %v3603 = vunpack.c.l.b16 %v3532
        %v3604 = vunpack.c.l.b16 %v3533
        %v3605 = vunpack.c.l.b16 %v3534
        %v3606 = vunpack.c.l.b16 %v3535
        %v3607 = vunpack.c.l.b16 %v3536
        %v3608 = vunpack.c.l.b16 %v3537
        %v3609 = vunpack.c.l.b16 %v3538
        %v3610 = vunpack.c.l.b16 %v3539
        %v3611 = vunpack.c.l.b16 %v3540
        %v3612 = vpack.c.b16 %v3581, %v3580
        %v3613 = vpack.c.b16 %v3583, %v3582
        %v3614 = vpack.c.b16 %v3585, %v3584
        %v3615 = vpack.c.b16 %v3587, %v3586
        %v3616 = vpack.c.b16 %v3589, %v3588
        %v3617 = vpack.c.b16 %v3591, %v3590
        %v3618 = vpack.c.b16 %v3593, %v3592
        %v3619 = vpack.c.b16 %v3595, %v3594
        %v3620 = vpack.c.b16 %v3597, %v3596
        %v3621 = vpack.c.b16 %v3599, %v3598
        %v3622 = vpack.c.b16 %v3601, %v3600
        %v3623 = vpack.c.b16 %v3603, %v3602
        %v3624 = vpack.c.b16 %v3605, %v3604
        %v3625 = vpack.c.b16 %v3607, %v3606
        %v3626 = vpack.c.b16 %v3609, %v3608
        %v3627 = vpack.c.b16 %v3611, %v3610
        %3644 = vmatprep.subr.bf16.mxu0 0
        %3645 = vmatpush1.bf16.msra.mxu0 %v3612
        %3646 = vmatprep.subr.bf16.mxu0 0
        %3647 = vmatpush1.bf16.msra.mxu0 %v3613
        %3648 = vmatprep.subr.bf16.mxu0 0
        %3649 = vmatpush1.bf16.msra.mxu0 %v3614
        %3650 = vmatprep.subr.bf16.mxu0 0
        %3651 = vmatpush1.bf16.msra.mxu0 %v3615
        %3652 = vmatprep.subr.bf16.mxu0 0
        %3653 = vmatpush1.bf16.msra.mxu0 %v3616
        %3654 = vmatprep.subr.bf16.mxu0 0
        %3655 = vmatpush1.bf16.msra.mxu0 %v3617
        %3656 = vmatprep.subr.bf16.mxu0 0
        %3657 = vmatpush1.bf16.msra.mxu0 %v3618
        %3658 = vmatprep.subr.bf16.mxu0 0
        %3659 = vmatpush1.bf16.msra.mxu0 %v3619
        %3660 = vmatprep.subr.bf16.mxu0 0
        %3661 = vmatpush1.bf16.msra.mxu0 %v3620
        %3662 = vmatprep.subr.bf16.mxu0 0
        %3663 = vmatpush1.bf16.msra.mxu0 %v3621
        %3664 = vmatprep.subr.bf16.mxu0 0
        %3665 = vmatpush1.bf16.msra.mxu0 %v3622
        %3666 = vmatprep.subr.bf16.mxu0 0
        %3667 = vmatpush1.bf16.msra.mxu0 %v3623
        %3668 = vmatprep.subr.bf16.mxu0 0
        %3669 = vmatpush1.bf16.msra.mxu0 %v3624
        %3670 = vmatprep.subr.bf16.mxu0 0
        %3671 = vmatpush1.bf16.msra.mxu0 %v3625
        %3672 = vmatprep.subr.bf16.mxu0 0
        %3673 = vmatpush1.bf16.msra.mxu0 %v3626
        %3674 = vmatprep.subr.bf16.mxu0 0
        %3675 = vmatpush1.bf16.msra.mxu0 %v3627
        %3676 = vmatprep.mubr.bf16.mxu0 %v3508
        %3677 = vmatmul.mubr.bf16.gmra.mrb[0].mxu0 %v3507
        %v3678 = vpop.f32.mrb[0].mxu0
        %v3679 = vadd.f32 %v3546, %v3678
        %v3680 = vpop.f32.mrb[0].mxu0
        %v3681 = vpop.f32.mrb[0].mxu0
        %v3682 = vpop.f32.mrb[0].mxu0
        %3683 = vdwg.mxu0
        %3684 = vst [vmem:[%s537] sm:$0xff] %v3679
        %s3685 = sand.u32 %s272, 1
        %s3686 = scalar_lea.sflag [#allocation8], %s3685
        %s3687 = sand.u32 %s272, 1
        %s3688 = smul.addr %s3687, 8
        %s3689 = scalar_lea.vmem [#allocation14], %s3688
        // Predicated region
        $region119: #{net_forward.1} parent=97 // pred_check
          %p3690 = pneg %p282
        $region120: #{net_forward.1} parent=97 // pred_check_branch
          %3692 = sbr.rel (%p3690) target = $region122
        $region121: #{net_forward.1} parent=97 // pred_region
          %s3694 = ssub.s32 128, 128
          %3695 = vsyncadd %s3686, %s3694
          %s3696 = smul.addr %s28, 128
          %s3697 = scalar_lea.hbm %s11, %s3696
          %s3699 = sshll.u32 %s3689, 4
          %s3700 = int_to_ptr.vmem [resolvable:$true] %s3699
          %3702 = dma.vmem_to_hbm [thread:$0]  %s3700, 128, %s3697, %s3686
        $region122: #{net_forward.1} parent=97 // pred_fallthru
          _
      $region98: #{net_forward.1} parent=5 // pred_fallthru
        _
      %p3703 = scmp.le.s32.totalorder 2, %s23
      // Predicated region
      $region123: #{net_forward.1} parent=5 // pred_check
        %p3704 = pneg %p3703
      $region124: #{net_forward.1} parent=5 // pred_check_branch
        %3706 = sbr.rel (%p3704) target = $region126
      $region125: #{net_forward.1} parent=5 // pred_region
        %s3707 = ssub.s32 %s23, 2
        // Predicated region
        $region127: #{net_forward.1} parent=125 // pred_check
          %p3708 = pneg %p288
        $region128: #{net_forward.1} parent=125 // pred_check_branch
          %3710 = sbr.rel (%p3708) target = $region130
        $region129: #{net_forward.1} parent=125 // pred_region
          %s3711 = sand.u32 %s273, 1
          %s3712 = scalar_lea.sflag [#allocation8], %s3711
          %s3713 = sand.u32 %s273, 1
          %s3714 = smul.addr %s3713, 8
          %s3715 = scalar_lea.vmem [#allocation14], %s3714
          %3716 = dma.done %s3712, 128
        $region130: #{net_forward.1} parent=125 // pred_fallthru
          _
      $region126: #{net_forward.1} parent=5 // pred_fallthru
        _
    $region6: #{net_forward.1} parent=1 // loop_footer
      %s27 = sadd.s32 1, %s23
    $region7: #{net_forward.1} parent=1 // loop_footer_branch
      %22 = sbr.rel target = $region3
    $region8: #{net_forward.1} parent=1 // loop_exit
      _
    %3717 = vsyncpa [#allocation7], 1
    %s3718 = scalar_lea.sflag [#allocation7], 1
    %3719 = vsyncpa %s3718, 1
    %3720 = vsyncpa [#allocation10], 1
    %3721 = vsyncpa [#allocation13], 1
    %3722 = vsyncpa [#allocation8], 1
    %s3723 = scalar_lea.sflag [#allocation8], 1
    %3724 = vsyncpa %s3723, 1

</llo_original>
